<compile_context>
chip_gen: v7x
topology: tpu7x:2x2x1
jax: 0.10.0
libtpu: 0.0.40
codegen_flags: <defaults>
</compile_context>

<pallas_src>
from typing import Dict, List

import jax
import jax.numpy as jnp
from jax.experimental import pallas as pl
from jax.experimental.pallas import tpu as pltpu


_LANES = 128          # every feature's embedding dim is padded to this lane width
_ROWS_PER_STEP = 32   # output rows produced per grid step (sublane-aligned tile)


def _build_fused_gather(n_pad, num_cols, feature_layout, d_pad, v_pad, rows_per_step):
    """Builds the fused embedding-gather pallas_call for a fixed feature config.

    feature_layout: tuple of (first_column_index, bag_size) per feature, in order.
    Returned callable signature: (idx_flat_int32, packed_table_f32) -> (n_pad, F*d_pad)
    """
    R = rows_per_step
    C = num_cols
    F = len(feature_layout)

    def kernel(idx_ref, table_ref, out_ref):
        # idx_ref:   (n_pad*C,) int32 in SMEM (scalar prefetch)
        # table_ref: (v_pad, d_pad) f32, fully resident in VMEM
        # out_ref:   (R, F*d_pad) f32 output tile
        base = pl.program_id(0) * (R * C)
        for r in range(R):                                   # static unroll
            row_base = base + r * C
            for f, (c0, g) in enumerate(feature_layout):     # static; bag sizes tiny
                acc = table_ref[pl.ds(idx_ref[row_base + c0], 1), :]
                for gi in range(1, g):                       # EmbeddingBag(mode="sum")
                    acc = acc + table_ref[pl.ds(idx_ref[row_base + c0 + gi], 1), :]
                out_ref[r:r + 1, f * d_pad:(f + 1) * d_pad] = acc

    grid_spec = pltpu.PrefetchScalarGridSpec(
        num_scalar_prefetch=1,
        grid=(n_pad // R,),
        # whole packed table lives in VMEM for the entire grid (single bulk DMA)
        in_specs=[pl.BlockSpec(memory_space=pltpu.MemorySpace.VMEM)],
        out_specs=pl.BlockSpec((R, F * d_pad), lambda n, idx_ref: (n, 0)),
    )

    bytes_accessed = 4 * (n_pad * C               # SMEM indices
                          + v_pad * d_pad         # packed table, loaded once
                          + n_pad * F * d_pad)    # lane-dense output slab
    return pl.pallas_call(
        kernel,
        grid_spec=grid_spec,
        out_shape=jax.ShapeDtypeStruct((n_pad, F * d_pad), jnp.float32),
        compiler_params=pltpu.CompilerParams(
            dimension_semantics=("parallel",),
            vmem_limit_bytes=32 * 1024 * 1024,    # table + one output tile; fits v5e/v6e/v7x
        ),
        cost_estimate=pl.CostEstimate(
            flops=n_pad * C * d_pad, transcendentals=0, bytes_accessed=bytes_accessed),
    )


class MultiEmbedding:
    """JAX/Pallas port of the PyTorch `multiEmbedding` forward semantics."""

    def __init__(self, embeddingSizes, allCategoricalsNonGrouped=None,
                 categoricalGroupVariables=None, maxEmbeddingSize=None, key=None):
        assert allCategoricalsNonGrouped is not None, "allCategoricalsNonGrouped must be provided."
        categoricalGroupVariables = categoricalGroupVariables or {}
        self.embeddingSizes = {k: list(v) for k, v in embeddingSizes.items()}
        self.categoricalGroupVariables = categoricalGroupVariables
        self.allCategoricalsNonGrouped = allCategoricalsNonGrouped
        self.maxEmbeddingSize = maxEmbeddingSize

        # mirrors initEmbeddings(): cap embedding sizes at maxEmbeddingSize
        for name in self.embeddingSizes:
            size = self.embeddingSizes[name][1]
            if maxEmbeddingSize is not None:
                size = min(size, maxEmbeddingSize)
            self.embeddingSizes[name][1] = size
            assert self.embeddingSizes[name][1] <= _LANES, \
                "embedding dims > 128 not supported by this kernel"

        # deterministic N(0,1) init (matches nn.Embedding / nn.EmbeddingBag defaults)
        key = key if key is not None else jax.random.PRNGKey(0)
        self.featureOrder = list(self.embeddingSizes.keys())
        self.tables = {}
        for i, name in enumerate(self.featureOrder):
            v, d = self.embeddingSizes[name]
            self.tables[name] = jax.random.normal(
                jax.random.fold_in(key, i), (v, d), jnp.float32)

        # ---- static packed layout, built once (hoisted out of __call__) ----
        self.dPad = _LANES
        # column layout: one column per plain feature, G columns per grouped feature
        self.columnSources = []      # per column: (source variable name, owning feature)
        self.featureLayout = []      # per feature: (first column index, bag size)
        for name in self.featureOrder:
            members = self.categoricalGroupVariables.get(name, [name])
            self.featureLayout.append((len(self.columnSources), len(members)))
            for m in members:
                self.columnSources.append((m, name))
        self.numCols = len(self.columnSources)

        # vocab-concatenated, lane-padded (V_pad, 128) f32 table + per-feature offsets
        offsets, off, packed = {}, 0, []
        for name in self.featureOrder:
            v, d = self.embeddingSizes[name]
            offsets[name] = off
            off += v
            packed.append(
                jnp.zeros((v, self.dPad), jnp.float32).at[:, :d].set(self.tables[name]))
        self.offsets = offsets
        packed = jnp.concatenate(packed, axis=0)
        v_total = packed.shape[0]
        self.vPad = ((v_total + 7) // 8) * 8
        if self.vPad != v_total:
            packed = jnp.pad(packed, ((0, self.vPad - v_total), (0, 0)))
        self.packedTable = packed
        # TODO(synk): if the packed table exceeds VMEM (very large vocabs), fall back
        # to an HBM DMA row-gather path instead of the resident-table kernel.
        assert self.vPad * self.dPad * 4 <= 24 * 1024 * 1024, \
            "packed embedding table too large for the resident-VMEM kernel"

        self._call_cache = {}        # pallas_call per padded row count

    @property
    def outputSize(self):
        return {name: s[1] for name, s in self.embeddingSizes.items()}

    def __call__(self, x) -> Dict[str, jnp.ndarray]:
        anyName = self.columnSources[0][0]
        b, t = x[anyName].shape
        n = b * t
        r = _ROWS_PER_STEP
        n_pad = ((n + r - 1) // r) * r

        # Build (N, C) int32 indices into the packed table. PyTorch would raise on
        # out-of-range ids; we clamp instead so the in-kernel gather can never go OOB.
        cols = []
        for src, feat in self.columnSources:
            v = self.embeddingSizes[feat][0]
            idx = jnp.clip(x[src].reshape(-1).astype(jnp.int32), 0, v - 1)
            cols.append(idx + self.offsets[feat])
        idx = jnp.stack(cols, axis=1)                      # (N, C)
        idx = jnp.pad(idx, ((0, n_pad - n), (0, 0)))       # pad rows gather row 0 (harmless)
        idx_flat = idx.reshape(-1)                         # 1-D => minimal SMEM padding
        # TODO(synk): for extremely long sequences (N*C indices beyond the ~1 MB SMEM
        # budget), block the index array per grid step instead of scalar-prefetching it.

        call = self._call_cache.get(n_pad)
        if call is None:
            call = _build_fused_gather(
                n_pad, self.numCols, tuple(self.featureLayout), self.dPad, self.vPad, r)
            self._call_cache[n_pad] = call
        y = call(idx_flat, self.packedTable)               # (N_pad, F*128)

        out = {}
        for f, name in enumerate(self.featureOrder):
            d = self.embeddingSizes[name][1]
            out[name] = y[:n, f * self.dPad: f * self.dPad + d].reshape(b, t, d)
        return out


if __name__ == "__main__":
    key = jax.random.PRNGKey(0)
    B, T = 2, 8

    embeddingSizes = {"cat_a": [7, 5], "cat_b": [11, 12], "grp": [13, 4]}
    categoricalGroupVariables = {"grp": ["g1", "g2", "g3"]}
    allCategoricalsNonGrouped = ["cat_a", "cat_b", "g1", "g2", "g3"]

    module = MultiEmbedding(
        embeddingSizes,
        allCategoricalsNonGrouped=allCategoricalsNonGrouped,
        categoricalGroupVariables=categoricalGroupVariables,
        maxEmbeddingSize=8,   # caps cat_b's 12 -> 8, like the torch module
        key=key,
    )

    ks = jax.random.split(key, 5)
    x = {
        "cat_a": jax.random.randint(ks[0], (B, T), 0, 7),
        "cat_b": jax.random.randint(ks[1], (B, T), 0, 11),
        "g1": jax.random.randint(ks[2], (B, T), 0, 13),
        "g2": jax.random.randint(ks[3], (B, T), 0, 13),
        "g3": jax.random.randint(ks[4], (B, T), 0, 13),
    }

    out = module(x)
    out = jax.tree_util.tree_map(jax.block_until_ready, out)

    # cross-check against a plain-JAX gather reference (exact: everything stays f32)
    ok = True
    for name, table in module.tables.items():
        if name in categoricalGroupVariables:
            grp = jnp.transpose(
                jnp.stack([x[c] for c in categoricalGroupVariables[name]]), (1, 2, 0))
            ref = jnp.take(table, grp, axis=0).sum(axis=2)
        else:
            ref = jnp.take(table, x[name], axis=0)
        ok = ok and bool(jnp.allclose(out[name], ref, atol=1e-5))
        ok = ok and (out[name].shape == (B, T, module.outputSize[name]))
    assert ok, "Pallas output mismatch vs reference gather"

    print("KERNEL_OK")
</pallas_src>

<mosaic_0001>
module attributes {stable_mosaic.version = 11 : i64} {
  func.func @kernel(%arg0: i32, %arg1: memref<160xi32, #tpu.memory_space<smem>>, %arg2: memref<32x128xf32, #tpu.memory_space<vmem>>, %arg3: memref<32x384xf32, #tpu.memory_space<vmem>>) attributes {dimension_semantics = [#tpu.dimension_semantics<parallel>], iteration_bounds = array<i64: 1>, scalar_prefetch = 1 : i64, scratch_operands = 0 : i64, tpu.core_type = #tpu.core_type<tc>, window_params = [{pipeline_mode = #tpu.pipeline_mode<synchronous>, transform_indices = @transform_0, window_bounds = array<i64: 32, 128>}, {transform_indices = @transform_1, window_bounds = array<i64: 32, 384>}]} {
    %c160_i32 = arith.constant 160 : i32
    %0 = arith.muli %arg0, %c160_i32 : i32
    %c0_i32 = arith.constant 0 : i32
    %1 = arith.addi %0, %c0_i32 : i32
    %c0_i32_0 = arith.constant 0 : i32
    %2 = arith.addi %1, %c0_i32_0 : i32
    %3 = arith.index_cast %2 : i32 to index
    %4 = memref.load %arg1[%3] : memref<160xi32, #tpu.memory_space<smem>>
    %5 = arith.index_cast %4 : i32 to index
    %c0 = arith.constant 0 : index
    %6 = vector.load %arg2[%5, %c0] : memref<32x128xf32, #tpu.memory_space<vmem>>, vector<1x128xf32>
    %c0_1 = arith.constant 0 : index
    %c0_2 = arith.constant 0 : index
    %7 = vector.load %arg3[%c0_1, %c0_2] : memref<32x384xf32, #tpu.memory_space<vmem>>, vector<1x128xf32>
    tpu.vector_store %arg3[%c0_1, %c0_2], %6 {strides = array<i32>} : memref<32x384xf32, #tpu.memory_space<vmem>>, vector<1x128xf32>,
    %c1_i32 = arith.constant 1 : i32
    %8 = arith.addi %1, %c1_i32 : i32
    %9 = arith.index_cast %8 : i32 to index
    %10 = memref.load %arg1[%9] : memref<160xi32, #tpu.memory_space<smem>>
    %11 = arith.index_cast %10 : i32 to index
    %c0_3 = arith.constant 0 : index
    %12 = vector.load %arg2[%11, %c0_3] : memref<32x128xf32, #tpu.memory_space<vmem>>, vector<1x128xf32>
    %c0_4 = arith.constant 0 : index
    %c128 = arith.constant 128 : index
    %13 = vector.load %arg3[%c0_4, %c128] : memref<32x384xf32, #tpu.memory_space<vmem>>, vector<1x128xf32>
    tpu.vector_store %arg3[%c0_4, %c128], %12 {strides = array<i32>} : memref<32x384xf32, #tpu.memory_space<vmem>>, vector<1x128xf32>,
    %c2_i32 = arith.constant 2 : i32
    %14 = arith.addi %1, %c2_i32 : i32
    %15 = arith.index_cast %14 : i32 to index
    %16 = memref.load %arg1[%15] : memref<160xi32, #tpu.memory_space<smem>>
    %17 = arith.index_cast %16 : i32 to index
    %c0_5 = arith.constant 0 : index
    %18 = vector.load %arg2[%17, %c0_5] : memref<32x128xf32, #tpu.memory_space<vmem>>, vector<1x128xf32>
    %c2_i32_6 = arith.constant 2 : i32
    %19 = arith.addi %1, %c2_i32_6 : i32
    %c1_i32_7 = arith.constant 1 : i32
    %20 = arith.addi %19, %c1_i32_7 : i32
    %21 = arith.index_cast %20 : i32 to index
    %22 = memref.load %arg1[%21] : memref<160xi32, #tpu.memory_space<smem>>
    %23 = arith.index_cast %22 : i32 to index
    %c0_8 = arith.constant 0 : index
    %24 = vector.load %arg2[%23, %c0_8] : memref<32x128xf32, #tpu.memory_space<vmem>>, vector<1x128xf32>
    %25 = arith.addf %18, %24 : vector<1x128xf32>
    %c2_i32_9 = arith.constant 2 : i32
    %26 = arith.addi %1, %c2_i32_9 : i32
    %c2_i32_10 = arith.constant 2 : i32
    %27 = arith.addi %26, %c2_i32_10 : i32
    %28 = arith.index_cast %27 : i32 to index
    %29 = memref.load %arg1[%28] : memref<160xi32, #tpu.memory_space<smem>>
    %30 = arith.index_cast %29 : i32 to index
    %c0_11 = arith.constant 0 : index
    %31 = vector.load %arg2[%30, %c0_11] : memref<32x128xf32, #tpu.memory_space<vmem>>, vector<1x128xf32>
    %32 = arith.addf %25, %31 : vector<1x128xf32>
    %c0_12 = arith.constant 0 : index
    %c256 = arith.constant 256 : index
    %33 = vector.load %arg3[%c0_12, %c256] : memref<32x384xf32, #tpu.memory_space<vmem>>, vector<1x128xf32>
    tpu.vector_store %arg3[%c0_12, %c256], %32 {strides = array<i32>} : memref<32x384xf32, #tpu.memory_space<vmem>>, vector<1x128xf32>,
    %c5_i32 = arith.constant 5 : i32
    %34 = arith.addi %0, %c5_i32 : i32
    %c0_i32_13 = arith.constant 0 : i32
    %35 = arith.addi %34, %c0_i32_13 : i32
    %36 = arith.index_cast %35 : i32 to index
    %37 = memref.load %arg1[%36] : memref<160xi32, #tpu.memory_space<smem>>
    %38 = arith.index_cast %37 : i32 to index
    %c0_14 = arith.constant 0 : index
    %39 = vector.load %arg2[%38, %c0_14] : memref<32x128xf32, #tpu.memory_space<vmem>>, vector<1x128xf32>
    %c1 = arith.constant 1 : index
    %c0_15 = arith.constant 0 : index
    %40 = vector.load %arg3[%c1, %c0_15] : memref<32x384xf32, #tpu.memory_space<vmem>>, vector<1x128xf32>
    tpu.vector_store %arg3[%c1, %c0_15], %39 {strides = array<i32>} : memref<32x384xf32, #tpu.memory_space<vmem>>, vector<1x128xf32>,
    %c1_i32_16 = arith.constant 1 : i32
    %41 = arith.addi %34, %c1_i32_16 : i32
    %42 = arith.index_cast %41 : i32 to index
    %43 = memref.load %arg1[%42] : memref<160xi32, #tpu.memory_space<smem>>
    %44 = arith.index_cast %43 : i32 to index
    %c0_17 = arith.constant 0 : index
    %45 = vector.load %arg2[%44, %c0_17] : memref<32x128xf32, #tpu.memory_space<vmem>>, vector<1x128xf32>
    %c1_18 = arith.constant 1 : index
    %c128_19 = arith.constant 128 : index
    %46 = vector.load %arg3[%c1_18, %c128_19] : memref<32x384xf32, #tpu.memory_space<vmem>>, vector<1x128xf32>
    tpu.vector_store %arg3[%c1_18, %c128_19], %45 {strides = array<i32>} : memref<32x384xf32, #tpu.memory_space<vmem>>, vector<1x128xf32>,
    %c2_i32_20 = arith.constant 2 : i32
    %47 = arith.addi %34, %c2_i32_20 : i32
    %48 = arith.index_cast %47 : i32 to index
    %49 = memref.load %arg1[%48] : memref<160xi32, #tpu.memory_space<smem>>
    %50 = arith.index_cast %49 : i32 to index
    %c0_21 = arith.constant 0 : index
    %51 = vector.load %arg2[%50, %c0_21] : memref<32x128xf32, #tpu.memory_space<vmem>>, vector<1x128xf32>
    %c2_i32_22 = arith.constant 2 : i32
    %52 = arith.addi %34, %c2_i32_22 : i32
    %c1_i32_23 = arith.constant 1 : i32
    %53 = arith.addi %52, %c1_i32_23 : i32
    %54 = arith.index_cast %53 : i32 to index
    %55 = memref.load %arg1[%54] : memref<160xi32, #tpu.memory_space<smem>>
    %56 = arith.index_cast %55 : i32 to index
    %c0_24 = arith.constant 0 : index
    %57 = vector.load %arg2[%56, %c0_24] : memref<32x128xf32, #tpu.memory_space<vmem>>, vector<1x128xf32>
    %58 = arith.addf %51, %57 : vector<1x128xf32>
    %c2_i32_25 = arith.constant 2 : i32
    %59 = arith.addi %34, %c2_i32_25 : i32
    %c2_i32_26 = arith.constant 2 : i32
    %60 = arith.addi %59, %c2_i32_26 : i32
    %61 = arith.index_cast %60 : i32 to index
    %62 = memref.load %arg1[%61] : memref<160xi32, #tpu.memory_space<smem>>
    %63 = arith.index_cast %62 : i32 to index
    %c0_27 = arith.constant 0 : index
    %64 = vector.load %arg2[%63, %c0_27] : memref<32x128xf32, #tpu.memory_space<vmem>>, vector<1x128xf32>
    %65 = arith.addf %58, %64 : vector<1x128xf32>
    %c1_28 = arith.constant 1 : index
    %c256_29 = arith.constant 256 : index
    %66 = vector.load %arg3[%c1_28, %c256_29] : memref<32x384xf32, #tpu.memory_space<vmem>>, vector<1x128xf32>
    tpu.vector_store %arg3[%c1_28, %c256_29], %65 {strides = array<i32>} : memref<32x384xf32, #tpu.memory_space<vmem>>, vector<1x128xf32>,
    %c10_i32 = arith.constant 10 : i32
    %67 = arith.addi %0, %c10_i32 : i32
    %c0_i32_30 = arith.constant 0 : i32
    %68 = arith.addi %67, %c0_i32_30 : i32
    %69 = arith.index_cast %68 : i32 to index
    %70 = memref.load %arg1[%69] : memref<160xi32, #tpu.memory_space<smem>>
    %71 = arith.index_cast %70 : i32 to index
    %c0_31 = arith.constant 0 : index
    %72 = vector.load %arg2[%71, %c0_31] : memref<32x128xf32, #tpu.memory_space<vmem>>, vector<1x128xf32>
    %c2 = arith.constant 2 : index
    %c0_32 = arith.constant 0 : index
    %73 = vector.load %arg3[%c2, %c0_32] : memref<32x384xf32, #tpu.memory_space<vmem>>, vector<1x128xf32>
    tpu.vector_store %arg3[%c2, %c0_32], %72 {strides = array<i32>} : memref<32x384xf32, #tpu.memory_space<vmem>>, vector<1x128xf32>,
    %c1_i32_33 = arith.constant 1 : i32
    %74 = arith.addi %67, %c1_i32_33 : i32
    %75 = arith.index_cast %74 : i32 to index
    %76 = memref.load %arg1[%75] : memref<160xi32, #tpu.memory_space<smem>>
    %77 = arith.index_cast %76 : i32 to index
    %c0_34 = arith.constant 0 : index
    %78 = vector.load %arg2[%77, %c0_34] : memref<32x128xf32, #tpu.memory_space<vmem>>, vector<1x128xf32>
    %c2_35 = arith.constant 2 : index
    %c128_36 = arith.constant 128 : index
    %79 = vector.load %arg3[%c2_35, %c128_36] : memref<32x384xf32, #tpu.memory_space<vmem>>, vector<1x128xf32>
    tpu.vector_store %arg3[%c2_35, %c128_36], %78 {strides = array<i32>} : memref<32x384xf32, #tpu.memory_space<vmem>>, vector<1x128xf32>,
    %c2_i32_37 = arith.constant 2 : i32
    %80 = arith.addi %67, %c2_i32_37 : i32
    %81 = arith.index_cast %80 : i32 to index
    %82 = memref.load %arg1[%81] : memref<160xi32, #tpu.memory_space<smem>>
    %83 = arith.index_cast %82 : i32 to index
    %c0_38 = arith.constant 0 : index
    %84 = vector.load %arg2[%83, %c0_38] : memref<32x128xf32, #tpu.memory_space<vmem>>, vector<1x128xf32>
    %c2_i32_39 = arith.constant 2 : i32
    %85 = arith.addi %67, %c2_i32_39 : i32
    %c1_i32_40 = arith.constant 1 : i32
    %86 = arith.addi %85, %c1_i32_40 : i32
    %87 = arith.index_cast %86 : i32 to index
    %88 = memref.load %arg1[%87] : memref<160xi32, #tpu.memory_space<smem>>
    %89 = arith.index_cast %88 : i32 to index
    %c0_41 = arith.constant 0 : index
    %90 = vector.load %arg2[%89, %c0_41] : memref<32x128xf32, #tpu.memory_space<vmem>>, vector<1x128xf32>
    %91 = arith.addf %84, %90 : vector<1x128xf32>
    %c2_i32_42 = arith.constant 2 : i32
    %92 = arith.addi %67, %c2_i32_42 : i32
    %c2_i32_43 = arith.constant 2 : i32
    %93 = arith.addi %92, %c2_i32_43 : i32
    %94 = arith.index_cast %93 : i32 to index
    %95 = memref.load %arg1[%94] : memref<160xi32, #tpu.memory_space<smem>>
    %96 = arith.index_cast %95 : i32 to index
    %c0_44 = arith.constant 0 : index
    %97 = vector.load %arg2[%96, %c0_44] : memref<32x128xf32, #tpu.memory_space<vmem>>, vector<1x128xf32>
    %98 = arith.addf %91, %97 : vector<1x128xf32>
    %c2_45 = arith.constant 2 : index
    %c256_46 = arith.constant 256 : index
    %99 = vector.load %arg3[%c2_45, %c256_46] : memref<32x384xf32, #tpu.memory_space<vmem>>, vector<1x128xf32>
    tpu.vector_store %arg3[%c2_45, %c256_46], %98 {strides = array<i32>} : memref<32x384xf32, #tpu.memory_space<vmem>>, vector<1x128xf32>,
    %c15_i32 = arith.constant 15 : i32
    %100 = arith.addi %0, %c15_i32 : i32
    %c0_i32_47 = arith.constant 0 : i32
    %101 = arith.addi %100, %c0_i32_47 : i32
    %102 = arith.index_cast %101 : i32 to index
    %103 = memref.load %arg1[%102] : memref<160xi32, #tpu.memory_space<smem>>
    %104 = arith.index_cast %103 : i32 to index
    %c0_48 = arith.constant 0 : index
    %105 = vector.load %arg2[%104, %c0_48] : memref<32x128xf32, #tpu.memory_space<vmem>>, vector<1x128xf32>
    %c3 = arith.constant 3 : index
    %c0_49 = arith.constant 0 : index
    %106 = vector.load %arg3[%c3, %c0_49] : memref<32x384xf32, #tpu.memory_space<vmem>>, vector<1x128xf32>
    tpu.vector_store %arg3[%c3, %c0_49], %105 {strides = array<i32>} : memref<32x384xf32, #tpu.memory_space<vmem>>, vector<1x128xf32>,
    %c1_i32_50 = arith.constant 1 : i32
    %107 = arith.addi %100, %c1_i32_50 : i32
    %108 = arith.index_cast %107 : i32 to index
    %109 = memref.load %arg1[%108] : memref<160xi32, #tpu.memory_space<smem>>
    %110 = arith.index_cast %109 : i32 to index
    %c0_51 = arith.constant 0 : index
    %111 = vector.load %arg2[%110, %c0_51] : memref<32x128xf32, #tpu.memory_space<vmem>>, vector<1x128xf32>
    %c3_52 = arith.constant 3 : index
    %c128_53 = arith.constant 128 : index
    %112 = vector.load %arg3[%c3_52, %c128_53] : memref<32x384xf32, #tpu.memory_space<vmem>>, vector<1x128xf32>
    tpu.vector_store %arg3[%c3_52, %c128_53], %111 {strides = array<i32>} : memref<32x384xf32, #tpu.memory_space<vmem>>, vector<1x128xf32>,
    %c2_i32_54 = arith.constant 2 : i32
    %113 = arith.addi %100, %c2_i32_54 : i32
    %114 = arith.index_cast %113 : i32 to index
    %115 = memref.load %arg1[%114] : memref<160xi32, #tpu.memory_space<smem>>
    %116 = arith.index_cast %115 : i32 to index
    %c0_55 = arith.constant 0 : index
    %117 = vector.load %arg2[%116, %c0_55] : memref<32x128xf32, #tpu.memory_space<vmem>>, vector<1x128xf32>
    %c2_i32_56 = arith.constant 2 : i32
    %118 = arith.addi %100, %c2_i32_56 : i32
    %c1_i32_57 = arith.constant 1 : i32
    %119 = arith.addi %118, %c1_i32_57 : i32
    %120 = arith.index_cast %119 : i32 to index
    %121 = memref.load %arg1[%120] : memref<160xi32, #tpu.memory_space<smem>>
    %122 = arith.index_cast %121 : i32 to index
    %c0_58 = arith.constant 0 : index
    %123 = vector.load %arg2[%122, %c0_58] : memref<32x128xf32, #tpu.memory_space<vmem>>, vector<1x128xf32>
    %124 = arith.addf %117, %123 : vector<1x128xf32>
    %c2_i32_59 = arith.constant 2 : i32
    %125 = arith.addi %100, %c2_i32_59 : i32
    %c2_i32_60 = arith.constant 2 : i32
    %126 = arith.addi %125, %c2_i32_60 : i32
    %127 = arith.index_cast %126 : i32 to index
    %128 = memref.load %arg1[%127] : memref<160xi32, #tpu.memory_space<smem>>
    %129 = arith.index_cast %128 : i32 to index
    %c0_61 = arith.constant 0 : index
    %130 = vector.load %arg2[%129, %c0_61] : memref<32x128xf32, #tpu.memory_space<vmem>>, vector<1x128xf32>
    %131 = arith.addf %124, %130 : vector<1x128xf32>
    %c3_62 = arith.constant 3 : index
    %c256_63 = arith.constant 256 : index
    %132 = vector.load %arg3[%c3_62, %c256_63] : memref<32x384xf32, #tpu.memory_space<vmem>>, vector<1x128xf32>
    tpu.vector_store %arg3[%c3_62, %c256_63], %131 {strides = array<i32>} : memref<32x384xf32, #tpu.memory_space<vmem>>, vector<1x128xf32>,
    %c20_i32 = arith.constant 20 : i32
    %133 = arith.addi %0, %c20_i32 : i32
    %c0_i32_64 = arith.constant 0 : i32
    %134 = arith.addi %133, %c0_i32_64 : i32
    %135 = arith.index_cast %134 : i32 to index
    %136 = memref.load %arg1[%135] : memref<160xi32, #tpu.memory_space<smem>>
    %137 = arith.index_cast %136 : i32 to index
    %c0_65 = arith.constant 0 : index
    %138 = vector.load %arg2[%137, %c0_65] : memref<32x128xf32, #tpu.memory_space<vmem>>, vector<1x128xf32>
    %c4 = arith.constant 4 : index
    %c0_66 = arith.constant 0 : index
    %139 = vector.load %arg3[%c4, %c0_66] : memref<32x384xf32, #tpu.memory_space<vmem>>, vector<1x128xf32>
    tpu.vector_store %arg3[%c4, %c0_66], %138 {strides = array<i32>} : memref<32x384xf32, #tpu.memory_space<vmem>>, vector<1x128xf32>,
    %c1_i32_67 = arith.constant 1 : i32
    %140 = arith.addi %133, %c1_i32_67 : i32
    %141 = arith.index_cast %140 : i32 to index
    %142 = memref.load %arg1[%141] : memref<160xi32, #tpu.memory_space<smem>>
    %143 = arith.index_cast %142 : i32 to index
    %c0_68 = arith.constant 0 : index
    %144 = vector.load %arg2[%143, %c0_68] : memref<32x128xf32, #tpu.memory_space<vmem>>, vector<1x128xf32>
    %c4_69 = arith.constant 4 : index
    %c128_70 = arith.constant 128 : index
    %145 = vector.load %arg3[%c4_69, %c128_70] : memref<32x384xf32, #tpu.memory_space<vmem>>, vector<1x128xf32>
    tpu.vector_store %arg3[%c4_69, %c128_70], %144 {strides = array<i32>} : memref<32x384xf32, #tpu.memory_space<vmem>>, vector<1x128xf32>,
    %c2_i32_71 = arith.constant 2 : i32
    %146 = arith.addi %133, %c2_i32_71 : i32
    %147 = arith.index_cast %146 : i32 to index
    %148 = memref.load %arg1[%147] : memref<160xi32, #tpu.memory_space<smem>>
    %149 = arith.index_cast %148 : i32 to index
    %c0_72 = arith.constant 0 : index
    %150 = vector.load %arg2[%149, %c0_72] : memref<32x128xf32, #tpu.memory_space<vmem>>, vector<1x128xf32>
    %c2_i32_73 = arith.constant 2 : i32
    %151 = arith.addi %133, %c2_i32_73 : i32
    %c1_i32_74 = arith.constant 1 : i32
    %152 = arith.addi %151, %c1_i32_74 : i32
    %153 = arith.index_cast %152 : i32 to index
    %154 = memref.load %arg1[%153] : memref<160xi32, #tpu.memory_space<smem>>
    %155 = arith.index_cast %154 : i32 to index
    %c0_75 = arith.constant 0 : index
    %156 = vector.load %arg2[%155, %c0_75] : memref<32x128xf32, #tpu.memory_space<vmem>>, vector<1x128xf32>
    %157 = arith.addf %150, %156 : vector<1x128xf32>
    %c2_i32_76 = arith.constant 2 : i32
    %158 = arith.addi %133, %c2_i32_76 : i32
    %c2_i32_77 = arith.constant 2 : i32
    %159 = arith.addi %158, %c2_i32_77 : i32
    %160 = arith.index_cast %159 : i32 to index
    %161 = memref.load %arg1[%160] : memref<160xi32, #tpu.memory_space<smem>>
    %162 = arith.index_cast %161 : i32 to index
    %c0_78 = arith.constant 0 : index
    %163 = vector.load %arg2[%162, %c0_78] : memref<32x128xf32, #tpu.memory_space<vmem>>, vector<1x128xf32>
    %164 = arith.addf %157, %163 : vector<1x128xf32>
    %c4_79 = arith.constant 4 : index
    %c256_80 = arith.constant 256 : index
    %165 = vector.load %arg3[%c4_79, %c256_80] : memref<32x384xf32, #tpu.memory_space<vmem>>, vector<1x128xf32>
    tpu.vector_store %arg3[%c4_79, %c256_80], %164 {strides = array<i32>} : memref<32x384xf32, #tpu.memory_space<vmem>>, vector<1x128xf32>,
    %c25_i32 = arith.constant 25 : i32
    %166 = arith.addi %0, %c25_i32 : i32
    %c0_i32_81 = arith.constant 0 : i32
    %167 = arith.addi %166, %c0_i32_81 : i32
    %168 = arith.index_cast %167 : i32 to index
    %169 = memref.load %arg1[%168] : memref<160xi32, #tpu.memory_space<smem>>
    %170 = arith.index_cast %169 : i32 to index
    %c0_82 = arith.constant 0 : index
    %171 = vector.load %arg2[%170, %c0_82] : memref<32x128xf32, #tpu.memory_space<vmem>>, vector<1x128xf32>
    %c5 = arith.constant 5 : index
    %c0_83 = arith.constant 0 : index
    %172 = vector.load %arg3[%c5, %c0_83] : memref<32x384xf32, #tpu.memory_space<vmem>>, vector<1x128xf32>
    tpu.vector_store %arg3[%c5, %c0_83], %171 {strides = array<i32>} : memref<32x384xf32, #tpu.memory_space<vmem>>, vector<1x128xf32>,
    %c1_i32_84 = arith.constant 1 : i32
    %173 = arith.addi %166, %c1_i32_84 : i32
    %174 = arith.index_cast %173 : i32 to index
    %175 = memref.load %arg1[%174] : memref<160xi32, #tpu.memory_space<smem>>
    %176 = arith.index_cast %175 : i32 to index
    %c0_85 = arith.constant 0 : index
    %177 = vector.load %arg2[%176, %c0_85] : memref<32x128xf32, #tpu.memory_space<vmem>>, vector<1x128xf32>
    %c5_86 = arith.constant 5 : index
    %c128_87 = arith.constant 128 : index
    %178 = vector.load %arg3[%c5_86, %c128_87] : memref<32x384xf32, #tpu.memory_space<vmem>>, vector<1x128xf32>
    tpu.vector_store %arg3[%c5_86, %c128_87], %177 {strides = array<i32>} : memref<32x384xf32, #tpu.memory_space<vmem>>, vector<1x128xf32>,
    %c2_i32_88 = arith.constant 2 : i32
    %179 = arith.addi %166, %c2_i32_88 : i32
    %180 = arith.index_cast %179 : i32 to index
    %181 = memref.load %arg1[%180] : memref<160xi32, #tpu.memory_space<smem>>
    %182 = arith.index_cast %181 : i32 to index
    %c0_89 = arith.constant 0 : index
    %183 = vector.load %arg2[%182, %c0_89] : memref<32x128xf32, #tpu.memory_space<vmem>>, vector<1x128xf32>
    %c2_i32_90 = arith.constant 2 : i32
    %184 = arith.addi %166, %c2_i32_90 : i32
    %c1_i32_91 = arith.constant 1 : i32
    %185 = arith.addi %184, %c1_i32_91 : i32
    %186 = arith.index_cast %185 : i32 to index
    %187 = memref.load %arg1[%186] : memref<160xi32, #tpu.memory_space<smem>>
    %188 = arith.index_cast %187 : i32 to index
    %c0_92 = arith.constant 0 : index
    %189 = vector.load %arg2[%188, %c0_92] : memref<32x128xf32, #tpu.memory_space<vmem>>, vector<1x128xf32>
    %190 = arith.addf %183, %189 : vector<1x128xf32>
    %c2_i32_93 = arith.constant 2 : i32
    %191 = arith.addi %166, %c2_i32_93 : i32
    %c2_i32_94 = arith.constant 2 : i32
    %192 = arith.addi %191, %c2_i32_94 : i32
    %193 = arith.index_cast %192 : i32 to index
    %194 = memref.load %arg1[%193] : memref<160xi32, #tpu.memory_space<smem>>
    %195 = arith.index_cast %194 : i32 to index
    %c0_95 = arith.constant 0 : index
    %196 = vector.load %arg2[%195, %c0_95] : memref<32x128xf32, #tpu.memory_space<vmem>>, vector<1x128xf32>
    %197 = arith.addf %190, %196 : vector<1x128xf32>
    %c5_96 = arith.constant 5 : index
    %c256_97 = arith.constant 256 : index
    %198 = vector.load %arg3[%c5_96, %c256_97] : memref<32x384xf32, #tpu.memory_space<vmem>>, vector<1x128xf32>
    tpu.vector_store %arg3[%c5_96, %c256_97], %197 {strides = array<i32>} : memref<32x384xf32, #tpu.memory_space<vmem>>, vector<1x128xf32>,
    %c30_i32 = arith.constant 30 : i32
    %199 = arith.addi %0, %c30_i32 : i32
    %c0_i32_98 = arith.constant 0 : i32
    %200 = arith.addi %199, %c0_i32_98 : i32
    %201 = arith.index_cast %200 : i32 to index
    %202 = memref.load %arg1[%201] : memref<160xi32, #tpu.memory_space<smem>>
    %203 = arith.index_cast %202 : i32 to index
    %c0_99 = arith.constant 0 : index
    %204 = vector.load %arg2[%203, %c0_99] : memref<32x128xf32, #tpu.memory_space<vmem>>, vector<1x128xf32>
    %c6 = arith.constant 6 : index
    %c0_100 = arith.constant 0 : index
    %205 = vector.load %arg3[%c6, %c0_100] : memref<32x384xf32, #tpu.memory_space<vmem>>, vector<1x128xf32>
    tpu.vector_store %arg3[%c6, %c0_100], %204 {strides = array<i32>} : memref<32x384xf32, #tpu.memory_space<vmem>>, vector<1x128xf32>,
    %c1_i32_101 = arith.constant 1 : i32
    %206 = arith.addi %199, %c1_i32_101 : i32
    %207 = arith.index_cast %206 : i32 to index
    %208 = memref.load %arg1[%207] : memref<160xi32, #tpu.memory_space<smem>>
    %209 = arith.index_cast %208 : i32 to index
    %c0_102 = arith.constant 0 : index
    %210 = vector.load %arg2[%209, %c0_102] : memref<32x128xf32, #tpu.memory_space<vmem>>, vector<1x128xf32>
    %c6_103 = arith.constant 6 : index
    %c128_104 = arith.constant 128 : index
    %211 = vector.load %arg3[%c6_103, %c128_104] : memref<32x384xf32, #tpu.memory_space<vmem>>, vector<1x128xf32>
    tpu.vector_store %arg3[%c6_103, %c128_104], %210 {strides = array<i32>} : memref<32x384xf32, #tpu.memory_space<vmem>>, vector<1x128xf32>,
    %c2_i32_105 = arith.constant 2 : i32
    %212 = arith.addi %199, %c2_i32_105 : i32
    %213 = arith.index_cast %212 : i32 to index
    %214 = memref.load %arg1[%213] : memref<160xi32, #tpu.memory_space<smem>>
    %215 = arith.index_cast %214 : i32 to index
    %c0_106 = arith.constant 0 : index
    %216 = vector.load %arg2[%215, %c0_106] : memref<32x128xf32, #tpu.memory_space<vmem>>, vector<1x128xf32>
    %c2_i32_107 = arith.constant 2 : i32
    %217 = arith.addi %199, %c2_i32_107 : i32
    %c1_i32_108 = arith.constant 1 : i32
    %218 = arith.addi %217, %c1_i32_108 : i32
    %219 = arith.index_cast %218 : i32 to index
    %220 = memref.load %arg1[%219] : memref<160xi32, #tpu.memory_space<smem>>
    %221 = arith.index_cast %220 : i32 to index
    %c0_109 = arith.constant 0 : index
    %222 = vector.load %arg2[%221, %c0_109] : memref<32x128xf32, #tpu.memory_space<vmem>>, vector<1x128xf32>
    %223 = arith.addf %216, %222 : vector<1x128xf32>
    %c2_i32_110 = arith.constant 2 : i32
    %224 = arith.addi %199, %c2_i32_110 : i32
    %c2_i32_111 = arith.constant 2 : i32
    %225 = arith.addi %224, %c2_i32_111 : i32
    %226 = arith.index_cast %225 : i32 to index
    %227 = memref.load %arg1[%226] : memref<160xi32, #tpu.memory_space<smem>>
    %228 = arith.index_cast %227 : i32 to index
    %c0_112 = arith.constant 0 : index
    %229 = vector.load %arg2[%228, %c0_112] : memref<32x128xf32, #tpu.memory_space<vmem>>, vector<1x128xf32>
    %230 = arith.addf %223, %229 : vector<1x128xf32>
    %c6_113 = arith.constant 6 : index
    %c256_114 = arith.constant 256 : index
    %231 = vector.load %arg3[%c6_113, %c256_114] : memref<32x384xf32, #tpu.memory_space<vmem>>, vector<1x128xf32>
    tpu.vector_store %arg3[%c6_113, %c256_114], %230 {strides = array<i32>} : memref<32x384xf32, #tpu.memory_space<vmem>>, vector<1x128xf32>,
    %c35_i32 = arith.constant 35 : i32
    %232 = arith.addi %0, %c35_i32 : i32
    %c0_i32_115 = arith.constant 0 : i32
    %233 = arith.addi %232, %c0_i32_115 : i32
    %234 = arith.index_cast %233 : i32 to index
    %235 = memref.load %arg1[%234] : memref<160xi32, #tpu.memory_space<smem>>
    %236 = arith.index_cast %235 : i32 to index
    %c0_116 = arith.constant 0 : index
    %237 = vector.load %arg2[%236, %c0_116] : memref<32x128xf32, #tpu.memory_space<vmem>>, vector<1x128xf32>
    %c7 = arith.constant 7 : index
    %c0_117 = arith.constant 0 : index
    %238 = vector.load %arg3[%c7, %c0_117] : memref<32x384xf32, #tpu.memory_space<vmem>>, vector<1x128xf32>
    tpu.vector_store %arg3[%c7, %c0_117], %237 {strides = array<i32>} : memref<32x384xf32, #tpu.memory_space<vmem>>, vector<1x128xf32>,
    %c1_i32_118 = arith.constant 1 : i32
    %239 = arith.addi %232, %c1_i32_118 : i32
    %240 = arith.index_cast %239 : i32 to index
    %241 = memref.load %arg1[%240] : memref<160xi32, #tpu.memory_space<smem>>
    %242 = arith.index_cast %241 : i32 to index
    %c0_119 = arith.constant 0 : index
    %243 = vector.load %arg2[%242, %c0_119] : memref<32x128xf32, #tpu.memory_space<vmem>>, vector<1x128xf32>
    %c7_120 = arith.constant 7 : index
    %c128_121 = arith.constant 128 : index
    %244 = vector.load %arg3[%c7_120, %c128_121] : memref<32x384xf32, #tpu.memory_space<vmem>>, vector<1x128xf32>
    tpu.vector_store %arg3[%c7_120, %c128_121], %243 {strides = array<i32>} : memref<32x384xf32, #tpu.memory_space<vmem>>, vector<1x128xf32>,
    %c2_i32_122 = arith.constant 2 : i32
    %245 = arith.addi %232, %c2_i32_122 : i32
    %246 = arith.index_cast %245 : i32 to index
    %247 = memref.load %arg1[%246] : memref<160xi32, #tpu.memory_space<smem>>
    %248 = arith.index_cast %247 : i32 to index
    %c0_123 = arith.constant 0 : index
    %249 = vector.load %arg2[%248, %c0_123] : memref<32x128xf32, #tpu.memory_space<vmem>>, vector<1x128xf32>
    %c2_i32_124 = arith.constant 2 : i32
    %250 = arith.addi %232, %c2_i32_124 : i32
    %c1_i32_125 = arith.constant 1 : i32
    %251 = arith.addi %250, %c1_i32_125 : i32
    %252 = arith.index_cast %251 : i32 to index
    %253 = memref.load %arg1[%252] : memref<160xi32, #tpu.memory_space<smem>>
    %254 = arith.index_cast %253 : i32 to index
    %c0_126 = arith.constant 0 : index
    %255 = vector.load %arg2[%254, %c0_126] : memref<32x128xf32, #tpu.memory_space<vmem>>, vector<1x128xf32>
    %256 = arith.addf %249, %255 : vector<1x128xf32>
    %c2_i32_127 = arith.constant 2 : i32
    %257 = arith.addi %232, %c2_i32_127 : i32
    %c2_i32_128 = arith.constant 2 : i32
    %258 = arith.addi %257, %c2_i32_128 : i32
    %259 = arith.index_cast %258 : i32 to index
    %260 = memref.load %arg1[%259] : memref<160xi32, #tpu.memory_space<smem>>
    %261 = arith.index_cast %260 : i32 to index
    %c0_129 = arith.constant 0 : index
    %262 = vector.load %arg2[%261, %c0_129] : memref<32x128xf32, #tpu.memory_space<vmem>>, vector<1x128xf32>
    %263 = arith.addf %256, %262 : vector<1x128xf32>
    %c7_130 = arith.constant 7 : index
    %c256_131 = arith.constant 256 : index
    %264 = vector.load %arg3[%c7_130, %c256_131] : memref<32x384xf32, #tpu.memory_space<vmem>>, vector<1x128xf32>
    tpu.vector_store %arg3[%c7_130, %c256_131], %263 {strides = array<i32>} : memref<32x384xf32, #tpu.memory_space<vmem>>, vector<1x128xf32>,
    %c40_i32 = arith.constant 40 : i32
    %265 = arith.addi %0, %c40_i32 : i32
    %c0_i32_132 = arith.constant 0 : i32
    %266 = arith.addi %265, %c0_i32_132 : i32
    %267 = arith.index_cast %266 : i32 to index
    %268 = memref.load %arg1[%267] : memref<160xi32, #tpu.memory_space<smem>>
    %269 = arith.index_cast %268 : i32 to index
    %c0_133 = arith.constant 0 : index
    %270 = vector.load %arg2[%269, %c0_133] : memref<32x128xf32, #tpu.memory_space<vmem>>, vector<1x128xf32>
    %c8 = arith.constant 8 : index
    %c0_134 = arith.constant 0 : index
    %271 = vector.load %arg3[%c8, %c0_134] : memref<32x384xf32, #tpu.memory_space<vmem>>, vector<1x128xf32>
    tpu.vector_store %arg3[%c8, %c0_134], %270 {strides = array<i32>} : memref<32x384xf32, #tpu.memory_space<vmem>>, vector<1x128xf32>,
    %c1_i32_135 = arith.constant 1 : i32
    %272 = arith.addi %265, %c1_i32_135 : i32
    %273 = arith.index_cast %272 : i32 to index
    %274 = memref.load %arg1[%273] : memref<160xi32, #tpu.memory_space<smem>>
    %275 = arith.index_cast %274 : i32 to index
    %c0_136 = arith.constant 0 : index
    %276 = vector.load %arg2[%275, %c0_136] : memref<32x128xf32, #tpu.memory_space<vmem>>, vector<1x128xf32>
    %c8_137 = arith.constant 8 : index
    %c128_138 = arith.constant 128 : index
    %277 = vector.load %arg3[%c8_137, %c128_138] : memref<32x384xf32, #tpu.memory_space<vmem>>, vector<1x128xf32>
    tpu.vector_store %arg3[%c8_137, %c128_138], %276 {strides = array<i32>} : memref<32x384xf32, #tpu.memory_space<vmem>>, vector<1x128xf32>,
    %c2_i32_139 = arith.constant 2 : i32
    %278 = arith.addi %265, %c2_i32_139 : i32
    %279 = arith.index_cast %278 : i32 to index
    %280 = memref.load %arg1[%279] : memref<160xi32, #tpu.memory_space<smem>>
    %281 = arith.index_cast %280 : i32 to index
    %c0_140 = arith.constant 0 : index
    %282 = vector.load %arg2[%281, %c0_140] : memref<32x128xf32, #tpu.memory_space<vmem>>, vector<1x128xf32>
    %c2_i32_141 = arith.constant 2 : i32
    %283 = arith.addi %265, %c2_i32_141 : i32
    %c1_i32_142 = arith.constant 1 : i32
    %284 = arith.addi %283, %c1_i32_142 : i32
    %285 = arith.index_cast %284 : i32 to index
    %286 = memref.load %arg1[%285] : memref<160xi32, #tpu.memory_space<smem>>
    %287 = arith.index_cast %286 : i32 to index
    %c0_143 = arith.constant 0 : index
    %288 = vector.load %arg2[%287, %c0_143] : memref<32x128xf32, #tpu.memory_space<vmem>>, vector<1x128xf32>
    %289 = arith.addf %282, %288 : vector<1x128xf32>
    %c2_i32_144 = arith.constant 2 : i32
    %290 = arith.addi %265, %c2_i32_144 : i32
    %c2_i32_145 = arith.constant 2 : i32
    %291 = arith.addi %290, %c2_i32_145 : i32
    %292 = arith.index_cast %291 : i32 to index
    %293 = memref.load %arg1[%292] : memref<160xi32, #tpu.memory_space<smem>>
    %294 = arith.index_cast %293 : i32 to index
    %c0_146 = arith.constant 0 : index
    %295 = vector.load %arg2[%294, %c0_146] : memref<32x128xf32, #tpu.memory_space<vmem>>, vector<1x128xf32>
    %296 = arith.addf %289, %295 : vector<1x128xf32>
    %c8_147 = arith.constant 8 : index
    %c256_148 = arith.constant 256 : index
    %297 = vector.load %arg3[%c8_147, %c256_148] : memref<32x384xf32, #tpu.memory_space<vmem>>, vector<1x128xf32>
    tpu.vector_store %arg3[%c8_147, %c256_148], %296 {strides = array<i32>} : memref<32x384xf32, #tpu.memory_space<vmem>>, vector<1x128xf32>,
    %c45_i32 = arith.constant 45 : i32
    %298 = arith.addi %0, %c45_i32 : i32
    %c0_i32_149 = arith.constant 0 : i32
    %299 = arith.addi %298, %c0_i32_149 : i32
    %300 = arith.index_cast %299 : i32 to index
    %301 = memref.load %arg1[%300] : memref<160xi32, #tpu.memory_space<smem>>
    %302 = arith.index_cast %301 : i32 to index
    %c0_150 = arith.constant 0 : index
    %303 = vector.load %arg2[%302, %c0_150] : memref<32x128xf32, #tpu.memory_space<vmem>>, vector<1x128xf32>
    %c9 = arith.constant 9 : index
    %c0_151 = arith.constant 0 : index
    %304 = vector.load %arg3[%c9, %c0_151] : memref<32x384xf32, #tpu.memory_space<vmem>>, vector<1x128xf32>
    tpu.vector_store %arg3[%c9, %c0_151], %303 {strides = array<i32>} : memref<32x384xf32, #tpu.memory_space<vmem>>, vector<1x128xf32>,
    %c1_i32_152 = arith.constant 1 : i32
    %305 = arith.addi %298, %c1_i32_152 : i32
    %306 = arith.index_cast %305 : i32 to index
    %307 = memref.load %arg1[%306] : memref<160xi32, #tpu.memory_space<smem>>
    %308 = arith.index_cast %307 : i32 to index
    %c0_153 = arith.constant 0 : index
    %309 = vector.load %arg2[%308, %c0_153] : memref<32x128xf32, #tpu.memory_space<vmem>>, vector<1x128xf32>
    %c9_154 = arith.constant 9 : index
    %c128_155 = arith.constant 128 : index
    %310 = vector.load %arg3[%c9_154, %c128_155] : memref<32x384xf32, #tpu.memory_space<vmem>>, vector<1x128xf32>
    tpu.vector_store %arg3[%c9_154, %c128_155], %309 {strides = array<i32>} : memref<32x384xf32, #tpu.memory_space<vmem>>, vector<1x128xf32>,
    %c2_i32_156 = arith.constant 2 : i32
    %311 = arith.addi %298, %c2_i32_156 : i32
    %312 = arith.index_cast %311 : i32 to index
    %313 = memref.load %arg1[%312] : memref<160xi32, #tpu.memory_space<smem>>
    %314 = arith.index_cast %313 : i32 to index
    %c0_157 = arith.constant 0 : index
    %315 = vector.load %arg2[%314, %c0_157] : memref<32x128xf32, #tpu.memory_space<vmem>>, vector<1x128xf32>
    %c2_i32_158 = arith.constant 2 : i32
    %316 = arith.addi %298, %c2_i32_158 : i32
    %c1_i32_159 = arith.constant 1 : i32
    %317 = arith.addi %316, %c1_i32_159 : i32
    %318 = arith.index_cast %317 : i32 to index
    %319 = memref.load %arg1[%318] : memref<160xi32, #tpu.memory_space<smem>>
    %320 = arith.index_cast %319 : i32 to index
    %c0_160 = arith.constant 0 : index
    %321 = vector.load %arg2[%320, %c0_160] : memref<32x128xf32, #tpu.memory_space<vmem>>, vector<1x128xf32>
    %322 = arith.addf %315, %321 : vector<1x128xf32>
    %c2_i32_161 = arith.constant 2 : i32
    %323 = arith.addi %298, %c2_i32_161 : i32
    %c2_i32_162 = arith.constant 2 : i32
    %324 = arith.addi %323, %c2_i32_162 : i32
    %325 = arith.index_cast %324 : i32 to index
    %326 = memref.load %arg1[%325] : memref<160xi32, #tpu.memory_space<smem>>
    %327 = arith.index_cast %326 : i32 to index
    %c0_163 = arith.constant 0 : index
    %328 = vector.load %arg2[%327, %c0_163] : memref<32x128xf32, #tpu.memory_space<vmem>>, vector<1x128xf32>
    %329 = arith.addf %322, %328 : vector<1x128xf32>
    %c9_164 = arith.constant 9 : index
    %c256_165 = arith.constant 256 : index
    %330 = vector.load %arg3[%c9_164, %c256_165] : memref<32x384xf32, #tpu.memory_space<vmem>>, vector<1x128xf32>
    tpu.vector_store %arg3[%c9_164, %c256_165], %329 {strides = array<i32>} : memref<32x384xf32, #tpu.memory_space<vmem>>, vector<1x128xf32>,
    %c50_i32 = arith.constant 50 : i32
    %331 = arith.addi %0, %c50_i32 : i32
    %c0_i32_166 = arith.constant 0 : i32
    %332 = arith.addi %331, %c0_i32_166 : i32
    %333 = arith.index_cast %332 : i32 to index
    %334 = memref.load %arg1[%333] : memref<160xi32, #tpu.memory_space<smem>>
    %335 = arith.index_cast %334 : i32 to index
    %c0_167 = arith.constant 0 : index
    %336 = vector.load %arg2[%335, %c0_167] : memref<32x128xf32, #tpu.memory_space<vmem>>, vector<1x128xf32>
    %c10 = arith.constant 10 : index
    %c0_168 = arith.constant 0 : index
    %337 = vector.load %arg3[%c10, %c0_168] : memref<32x384xf32, #tpu.memory_space<vmem>>, vector<1x128xf32>
    tpu.vector_store %arg3[%c10, %c0_168], %336 {strides = array<i32>} : memref<32x384xf32, #tpu.memory_space<vmem>>, vector<1x128xf32>,
    %c1_i32_169 = arith.constant 1 : i32
    %338 = arith.addi %331, %c1_i32_169 : i32
    %339 = arith.index_cast %338 : i32 to index
    %340 = memref.load %arg1[%339] : memref<160xi32, #tpu.memory_space<smem>>
    %341 = arith.index_cast %340 : i32 to index
    %c0_170 = arith.constant 0 : index
    %342 = vector.load %arg2[%341, %c0_170] : memref<32x128xf32, #tpu.memory_space<vmem>>, vector<1x128xf32>
    %c10_171 = arith.constant 10 : index
    %c128_172 = arith.constant 128 : index
    %343 = vector.load %arg3[%c10_171, %c128_172] : memref<32x384xf32, #tpu.memory_space<vmem>>, vector<1x128xf32>
    tpu.vector_store %arg3[%c10_171, %c128_172], %342 {strides = array<i32>} : memref<32x384xf32, #tpu.memory_space<vmem>>, vector<1x128xf32>,
    %c2_i32_173 = arith.constant 2 : i32
    %344 = arith.addi %331, %c2_i32_173 : i32
    %345 = arith.index_cast %344 : i32 to index
    %346 = memref.load %arg1[%345] : memref<160xi32, #tpu.memory_space<smem>>
    %347 = arith.index_cast %346 : i32 to index
    %c0_174 = arith.constant 0 : index
    %348 = vector.load %arg2[%347, %c0_174] : memref<32x128xf32, #tpu.memory_space<vmem>>, vector<1x128xf32>
    %c2_i32_175 = arith.constant 2 : i32
    %349 = arith.addi %331, %c2_i32_175 : i32
    %c1_i32_176 = arith.constant 1 : i32
    %350 = arith.addi %349, %c1_i32_176 : i32
    %351 = arith.index_cast %350 : i32 to index
    %352 = memref.load %arg1[%351] : memref<160xi32, #tpu.memory_space<smem>>
    %353 = arith.index_cast %352 : i32 to index
    %c0_177 = arith.constant 0 : index
    %354 = vector.load %arg2[%353, %c0_177] : memref<32x128xf32, #tpu.memory_space<vmem>>, vector<1x128xf32>
    %355 = arith.addf %348, %354 : vector<1x128xf32>
    %c2_i32_178 = arith.constant 2 : i32
    %356 = arith.addi %331, %c2_i32_178 : i32
    %c2_i32_179 = arith.constant 2 : i32
    %357 = arith.addi %356, %c2_i32_179 : i32
    %358 = arith.index_cast %357 : i32 to index
    %359 = memref.load %arg1[%358] : memref<160xi32, #tpu.memory_space<smem>>
    %360 = arith.index_cast %359 : i32 to index
    %c0_180 = arith.constant 0 : index
    %361 = vector.load %arg2[%360, %c0_180] : memref<32x128xf32, #tpu.memory_space<vmem>>, vector<1x128xf32>
    %362 = arith.addf %355, %361 : vector<1x128xf32>
    %c10_181 = arith.constant 10 : index
    %c256_182 = arith.constant 256 : index
    %363 = vector.load %arg3[%c10_181, %c256_182] : memref<32x384xf32, #tpu.memory_space<vmem>>, vector<1x128xf32>
    tpu.vector_store %arg3[%c10_181, %c256_182], %362 {strides = array<i32>} : memref<32x384xf32, #tpu.memory_space<vmem>>, vector<1x128xf32>,
    %c55_i32 = arith.constant 55 : i32
    %364 = arith.addi %0, %c55_i32 : i32
    %c0_i32_183 = arith.constant 0 : i32
    %365 = arith.addi %364, %c0_i32_183 : i32
    %366 = arith.index_cast %365 : i32 to index
    %367 = memref.load %arg1[%366] : memref<160xi32, #tpu.memory_space<smem>>
    %368 = arith.index_cast %367 : i32 to index
    %c0_184 = arith.constant 0 : index
    %369 = vector.load %arg2[%368, %c0_184] : memref<32x128xf32, #tpu.memory_space<vmem>>, vector<1x128xf32>
    %c11 = arith.constant 11 : index
    %c0_185 = arith.constant 0 : index
    %370 = vector.load %arg3[%c11, %c0_185] : memref<32x384xf32, #tpu.memory_space<vmem>>, vector<1x128xf32>
    tpu.vector_store %arg3[%c11, %c0_185], %369 {strides = array<i32>} : memref<32x384xf32, #tpu.memory_space<vmem>>, vector<1x128xf32>,
    %c1_i32_186 = arith.constant 1 : i32
    %371 = arith.addi %364, %c1_i32_186 : i32
    %372 = arith.index_cast %371 : i32 to index
    %373 = memref.load %arg1[%372] : memref<160xi32, #tpu.memory_space<smem>>
    %374 = arith.index_cast %373 : i32 to index
    %c0_187 = arith.constant 0 : index
    %375 = vector.load %arg2[%374, %c0_187] : memref<32x128xf32, #tpu.memory_space<vmem>>, vector<1x128xf32>
    %c11_188 = arith.constant 11 : index
    %c128_189 = arith.constant 128 : index
    %376 = vector.load %arg3[%c11_188, %c128_189] : memref<32x384xf32, #tpu.memory_space<vmem>>, vector<1x128xf32>
    tpu.vector_store %arg3[%c11_188, %c128_189], %375 {strides = array<i32>} : memref<32x384xf32, #tpu.memory_space<vmem>>, vector<1x128xf32>,
    %c2_i32_190 = arith.constant 2 : i32
    %377 = arith.addi %364, %c2_i32_190 : i32
    %378 = arith.index_cast %377 : i32 to index
    %379 = memref.load %arg1[%378] : memref<160xi32, #tpu.memory_space<smem>>
    %380 = arith.index_cast %379 : i32 to index
    %c0_191 = arith.constant 0 : index
    %381 = vector.load %arg2[%380, %c0_191] : memref<32x128xf32, #tpu.memory_space<vmem>>, vector<1x128xf32>
    %c2_i32_192 = arith.constant 2 : i32
    %382 = arith.addi %364, %c2_i32_192 : i32
    %c1_i32_193 = arith.constant 1 : i32
    %383 = arith.addi %382, %c1_i32_193 : i32
    %384 = arith.index_cast %383 : i32 to index
    %385 = memref.load %arg1[%384] : memref<160xi32, #tpu.memory_space<smem>>
    %386 = arith.index_cast %385 : i32 to index
    %c0_194 = arith.constant 0 : index
    %387 = vector.load %arg2[%386, %c0_194] : memref<32x128xf32, #tpu.memory_space<vmem>>, vector<1x128xf32>
    %388 = arith.addf %381, %387 : vector<1x128xf32>
    %c2_i32_195 = arith.constant 2 : i32
    %389 = arith.addi %364, %c2_i32_195 : i32
    %c2_i32_196 = arith.constant 2 : i32
    %390 = arith.addi %389, %c2_i32_196 : i32
    %391 = arith.index_cast %390 : i32 to index
    %392 = memref.load %arg1[%391] : memref<160xi32, #tpu.memory_space<smem>>
    %393 = arith.index_cast %392 : i32 to index
    %c0_197 = arith.constant 0 : index
    %394 = vector.load %arg2[%393, %c0_197] : memref<32x128xf32, #tpu.memory_space<vmem>>, vector<1x128xf32>
    %395 = arith.addf %388, %394 : vector<1x128xf32>
    %c11_198 = arith.constant 11 : index
    %c256_199 = arith.constant 256 : index
    %396 = vector.load %arg3[%c11_198, %c256_199] : memref<32x384xf32, #tpu.memory_space<vmem>>, vector<1x128xf32>
    tpu.vector_store %arg3[%c11_198, %c256_199], %395 {strides = array<i32>} : memref<32x384xf32, #tpu.memory_space<vmem>>, vector<1x128xf32>,
    %c60_i32 = arith.constant 60 : i32
    %397 = arith.addi %0, %c60_i32 : i32
    %c0_i32_200 = arith.constant 0 : i32
    %398 = arith.addi %397, %c0_i32_200 : i32
    %399 = arith.index_cast %398 : i32 to index
    %400 = memref.load %arg1[%399] : memref<160xi32, #tpu.memory_space<smem>>
    %401 = arith.index_cast %400 : i32 to index
    %c0_201 = arith.constant 0 : index
    %402 = vector.load %arg2[%401, %c0_201] : memref<32x128xf32, #tpu.memory_space<vmem>>, vector<1x128xf32>
    %c12 = arith.constant 12 : index
    %c0_202 = arith.constant 0 : index
    %403 = vector.load %arg3[%c12, %c0_202] : memref<32x384xf32, #tpu.memory_space<vmem>>, vector<1x128xf32>
    tpu.vector_store %arg3[%c12, %c0_202], %402 {strides = array<i32>} : memref<32x384xf32, #tpu.memory_space<vmem>>, vector<1x128xf32>,
    %c1_i32_203 = arith.constant 1 : i32
    %404 = arith.addi %397, %c1_i32_203 : i32
    %405 = arith.index_cast %404 : i32 to index
    %406 = memref.load %arg1[%405] : memref<160xi32, #tpu.memory_space<smem>>
    %407 = arith.index_cast %406 : i32 to index
    %c0_204 = arith.constant 0 : index
    %408 = vector.load %arg2[%407, %c0_204] : memref<32x128xf32, #tpu.memory_space<vmem>>, vector<1x128xf32>
    %c12_205 = arith.constant 12 : index
    %c128_206 = arith.constant 128 : index
    %409 = vector.load %arg3[%c12_205, %c128_206] : memref<32x384xf32, #tpu.memory_space<vmem>>, vector<1x128xf32>
    tpu.vector_store %arg3[%c12_205, %c128_206], %408 {strides = array<i32>} : memref<32x384xf32, #tpu.memory_space<vmem>>, vector<1x128xf32>,
    %c2_i32_207 = arith.constant 2 : i32
    %410 = arith.addi %397, %c2_i32_207 : i32
    %411 = arith.index_cast %410 : i32 to index
    %412 = memref.load %arg1[%411] : memref<160xi32, #tpu.memory_space<smem>>
    %413 = arith.index_cast %412 : i32 to index
    %c0_208 = arith.constant 0 : index
    %414 = vector.load %arg2[%413, %c0_208] : memref<32x128xf32, #tpu.memory_space<vmem>>, vector<1x128xf32>
    %c2_i32_209 = arith.constant 2 : i32
    %415 = arith.addi %397, %c2_i32_209 : i32
    %c1_i32_210 = arith.constant 1 : i32
    %416 = arith.addi %415, %c1_i32_210 : i32
    %417 = arith.index_cast %416 : i32 to index
    %418 = memref.load %arg1[%417] : memref<160xi32, #tpu.memory_space<smem>>
    %419 = arith.index_cast %418 : i32 to index
    %c0_211 = arith.constant 0 : index
    %420 = vector.load %arg2[%419, %c0_211] : memref<32x128xf32, #tpu.memory_space<vmem>>, vector<1x128xf32>
    %421 = arith.addf %414, %420 : vector<1x128xf32>
    %c2_i32_212 = arith.constant 2 : i32
    %422 = arith.addi %397, %c2_i32_212 : i32
    %c2_i32_213 = arith.constant 2 : i32
    %423 = arith.addi %422, %c2_i32_213 : i32
    %424 = arith.index_cast %423 : i32 to index
    %425 = memref.load %arg1[%424] : memref<160xi32, #tpu.memory_space<smem>>
    %426 = arith.index_cast %425 : i32 to index
    %c0_214 = arith.constant 0 : index
    %427 = vector.load %arg2[%426, %c0_214] : memref<32x128xf32, #tpu.memory_space<vmem>>, vector<1x128xf32>
    %428 = arith.addf %421, %427 : vector<1x128xf32>
    %c12_215 = arith.constant 12 : index
    %c256_216 = arith.constant 256 : index
    %429 = vector.load %arg3[%c12_215, %c256_216] : memref<32x384xf32, #tpu.memory_space<vmem>>, vector<1x128xf32>
    tpu.vector_store %arg3[%c12_215, %c256_216], %428 {strides = array<i32>} : memref<32x384xf32, #tpu.memory_space<vmem>>, vector<1x128xf32>,
    %c65_i32 = arith.constant 65 : i32
    %430 = arith.addi %0, %c65_i32 : i32
    %c0_i32_217 = arith.constant 0 : i32
    %431 = arith.addi %430, %c0_i32_217 : i32
    %432 = arith.index_cast %431 : i32 to index
    %433 = memref.load %arg1[%432] : memref<160xi32, #tpu.memory_space<smem>>
    %434 = arith.index_cast %433 : i32 to index
    %c0_218 = arith.constant 0 : index
    %435 = vector.load %arg2[%434, %c0_218] : memref<32x128xf32, #tpu.memory_space<vmem>>, vector<1x128xf32>
    %c13 = arith.constant 13 : index
    %c0_219 = arith.constant 0 : index
    %436 = vector.load %arg3[%c13, %c0_219] : memref<32x384xf32, #tpu.memory_space<vmem>>, vector<1x128xf32>
    tpu.vector_store %arg3[%c13, %c0_219], %435 {strides = array<i32>} : memref<32x384xf32, #tpu.memory_space<vmem>>, vector<1x128xf32>,
    %c1_i32_220 = arith.constant 1 : i32
    %437 = arith.addi %430, %c1_i32_220 : i32
    %438 = arith.index_cast %437 : i32 to index
    %439 = memref.load %arg1[%438] : memref<160xi32, #tpu.memory_space<smem>>
    %440 = arith.index_cast %439 : i32 to index
    %c0_221 = arith.constant 0 : index
    %441 = vector.load %arg2[%440, %c0_221] : memref<32x128xf32, #tpu.memory_space<vmem>>, vector<1x128xf32>
    %c13_222 = arith.constant 13 : index
    %c128_223 = arith.constant 128 : index
    %442 = vector.load %arg3[%c13_222, %c128_223] : memref<32x384xf32, #tpu.memory_space<vmem>>, vector<1x128xf32>
    tpu.vector_store %arg3[%c13_222, %c128_223], %441 {strides = array<i32>} : memref<32x384xf32, #tpu.memory_space<vmem>>, vector<1x128xf32>,
    %c2_i32_224 = arith.constant 2 : i32
    %443 = arith.addi %430, %c2_i32_224 : i32
    %444 = arith.index_cast %443 : i32 to index
    %445 = memref.load %arg1[%444] : memref<160xi32, #tpu.memory_space<smem>>
    %446 = arith.index_cast %445 : i32 to index
    %c0_225 = arith.constant 0 : index
    %447 = vector.load %arg2[%446, %c0_225] : memref<32x128xf32, #tpu.memory_space<vmem>>, vector<1x128xf32>
    %c2_i32_226 = arith.constant 2 : i32
    %448 = arith.addi %430, %c2_i32_226 : i32
    %c1_i32_227 = arith.constant 1 : i32
    %449 = arith.addi %448, %c1_i32_227 : i32
    %450 = arith.index_cast %449 : i32 to index
    %451 = memref.load %arg1[%450] : memref<160xi32, #tpu.memory_space<smem>>
    %452 = arith.index_cast %451 : i32 to index
    %c0_228 = arith.constant 0 : index
    %453 = vector.load %arg2[%452, %c0_228] : memref<32x128xf32, #tpu.memory_space<vmem>>, vector<1x128xf32>
    %454 = arith.addf %447, %453 : vector<1x128xf32>
    %c2_i32_229 = arith.constant 2 : i32
    %455 = arith.addi %430, %c2_i32_229 : i32
    %c2_i32_230 = arith.constant 2 : i32
    %456 = arith.addi %455, %c2_i32_230 : i32
    %457 = arith.index_cast %456 : i32 to index
    %458 = memref.load %arg1[%457] : memref<160xi32, #tpu.memory_space<smem>>
    %459 = arith.index_cast %458 : i32 to index
    %c0_231 = arith.constant 0 : index
    %460 = vector.load %arg2[%459, %c0_231] : memref<32x128xf32, #tpu.memory_space<vmem>>, vector<1x128xf32>
    %461 = arith.addf %454, %460 : vector<1x128xf32>
    %c13_232 = arith.constant 13 : index
    %c256_233 = arith.constant 256 : index
    %462 = vector.load %arg3[%c13_232, %c256_233] : memref<32x384xf32, #tpu.memory_space<vmem>>, vector<1x128xf32>
    tpu.vector_store %arg3[%c13_232, %c256_233], %461 {strides = array<i32>} : memref<32x384xf32, #tpu.memory_space<vmem>>, vector<1x128xf32>,
    %c70_i32 = arith.constant 70 : i32
    %463 = arith.addi %0, %c70_i32 : i32
    %c0_i32_234 = arith.constant 0 : i32
    %464 = arith.addi %463, %c0_i32_234 : i32
    %465 = arith.index_cast %464 : i32 to index
    %466 = memref.load %arg1[%465] : memref<160xi32, #tpu.memory_space<smem>>
    %467 = arith.index_cast %466 : i32 to index
    %c0_235 = arith.constant 0 : index
    %468 = vector.load %arg2[%467, %c0_235] : memref<32x128xf32, #tpu.memory_space<vmem>>, vector<1x128xf32>
    %c14 = arith.constant 14 : index
    %c0_236 = arith.constant 0 : index
    %469 = vector.load %arg3[%c14, %c0_236] : memref<32x384xf32, #tpu.memory_space<vmem>>, vector<1x128xf32>
    tpu.vector_store %arg3[%c14, %c0_236], %468 {strides = array<i32>} : memref<32x384xf32, #tpu.memory_space<vmem>>, vector<1x128xf32>,
    %c1_i32_237 = arith.constant 1 : i32
    %470 = arith.addi %463, %c1_i32_237 : i32
    %471 = arith.index_cast %470 : i32 to index
    %472 = memref.load %arg1[%471] : memref<160xi32, #tpu.memory_space<smem>>
    %473 = arith.index_cast %472 : i32 to index
    %c0_238 = arith.constant 0 : index
    %474 = vector.load %arg2[%473, %c0_238] : memref<32x128xf32, #tpu.memory_space<vmem>>, vector<1x128xf32>
    %c14_239 = arith.constant 14 : index
    %c128_240 = arith.constant 128 : index
    %475 = vector.load %arg3[%c14_239, %c128_240] : memref<32x384xf32, #tpu.memory_space<vmem>>, vector<1x128xf32>
    tpu.vector_store %arg3[%c14_239, %c128_240], %474 {strides = array<i32>} : memref<32x384xf32, #tpu.memory_space<vmem>>, vector<1x128xf32>,
    %c2_i32_241 = arith.constant 2 : i32
    %476 = arith.addi %463, %c2_i32_241 : i32
    %477 = arith.index_cast %476 : i32 to index
    %478 = memref.load %arg1[%477] : memref<160xi32, #tpu.memory_space<smem>>
    %479 = arith.index_cast %478 : i32 to index
    %c0_242 = arith.constant 0 : index
    %480 = vector.load %arg2[%479, %c0_242] : memref<32x128xf32, #tpu.memory_space<vmem>>, vector<1x128xf32>
    %c2_i32_243 = arith.constant 2 : i32
    %481 = arith.addi %463, %c2_i32_243 : i32
    %c1_i32_244 = arith.constant 1 : i32
    %482 = arith.addi %481, %c1_i32_244 : i32
    %483 = arith.index_cast %482 : i32 to index
    %484 = memref.load %arg1[%483] : memref<160xi32, #tpu.memory_space<smem>>
    %485 = arith.index_cast %484 : i32 to index
    %c0_245 = arith.constant 0 : index
    %486 = vector.load %arg2[%485, %c0_245] : memref<32x128xf32, #tpu.memory_space<vmem>>, vector<1x128xf32>
    %487 = arith.addf %480, %486 : vector<1x128xf32>
    %c2_i32_246 = arith.constant 2 : i32
    %488 = arith.addi %463, %c2_i32_246 : i32
    %c2_i32_247 = arith.constant 2 : i32
    %489 = arith.addi %488, %c2_i32_247 : i32
    %490 = arith.index_cast %489 : i32 to index
    %491 = memref.load %arg1[%490] : memref<160xi32, #tpu.memory_space<smem>>
    %492 = arith.index_cast %491 : i32 to index
    %c0_248 = arith.constant 0 : index
    %493 = vector.load %arg2[%492, %c0_248] : memref<32x128xf32, #tpu.memory_space<vmem>>, vector<1x128xf32>
    %494 = arith.addf %487, %493 : vector<1x128xf32>
    %c14_249 = arith.constant 14 : index
    %c256_250 = arith.constant 256 : index
    %495 = vector.load %arg3[%c14_249, %c256_250] : memref<32x384xf32, #tpu.memory_space<vmem>>, vector<1x128xf32>
    tpu.vector_store %arg3[%c14_249, %c256_250], %494 {strides = array<i32>} : memref<32x384xf32, #tpu.memory_space<vmem>>, vector<1x128xf32>,
    %c75_i32 = arith.constant 75 : i32
    %496 = arith.addi %0, %c75_i32 : i32
    %c0_i32_251 = arith.constant 0 : i32
    %497 = arith.addi %496, %c0_i32_251 : i32
    %498 = arith.index_cast %497 : i32 to index
    %499 = memref.load %arg1[%498] : memref<160xi32, #tpu.memory_space<smem>>
    %500 = arith.index_cast %499 : i32 to index
    %c0_252 = arith.constant 0 : index
    %501 = vector.load %arg2[%500, %c0_252] : memref<32x128xf32, #tpu.memory_space<vmem>>, vector<1x128xf32>
    %c15 = arith.constant 15 : index
    %c0_253 = arith.constant 0 : index
    %502 = vector.load %arg3[%c15, %c0_253] : memref<32x384xf32, #tpu.memory_space<vmem>>, vector<1x128xf32>
    tpu.vector_store %arg3[%c15, %c0_253], %501 {strides = array<i32>} : memref<32x384xf32, #tpu.memory_space<vmem>>, vector<1x128xf32>,
    %c1_i32_254 = arith.constant 1 : i32
    %503 = arith.addi %496, %c1_i32_254 : i32
    %504 = arith.index_cast %503 : i32 to index
    %505 = memref.load %arg1[%504] : memref<160xi32, #tpu.memory_space<smem>>
    %506 = arith.index_cast %505 : i32 to index
    %c0_255 = arith.constant 0 : index
    %507 = vector.load %arg2[%506, %c0_255] : memref<32x128xf32, #tpu.memory_space<vmem>>, vector<1x128xf32>
    %c15_256 = arith.constant 15 : index
    %c128_257 = arith.constant 128 : index
    %508 = vector.load %arg3[%c15_256, %c128_257] : memref<32x384xf32, #tpu.memory_space<vmem>>, vector<1x128xf32>
    tpu.vector_store %arg3[%c15_256, %c128_257], %507 {strides = array<i32>} : memref<32x384xf32, #tpu.memory_space<vmem>>, vector<1x128xf32>,
    %c2_i32_258 = arith.constant 2 : i32
    %509 = arith.addi %496, %c2_i32_258 : i32
    %510 = arith.index_cast %509 : i32 to index
    %511 = memref.load %arg1[%510] : memref<160xi32, #tpu.memory_space<smem>>
    %512 = arith.index_cast %511 : i32 to index
    %c0_259 = arith.constant 0 : index
    %513 = vector.load %arg2[%512, %c0_259] : memref<32x128xf32, #tpu.memory_space<vmem>>, vector<1x128xf32>
    %c2_i32_260 = arith.constant 2 : i32
    %514 = arith.addi %496, %c2_i32_260 : i32
    %c1_i32_261 = arith.constant 1 : i32
    %515 = arith.addi %514, %c1_i32_261 : i32
    %516 = arith.index_cast %515 : i32 to index
    %517 = memref.load %arg1[%516] : memref<160xi32, #tpu.memory_space<smem>>
    %518 = arith.index_cast %517 : i32 to index
    %c0_262 = arith.constant 0 : index
    %519 = vector.load %arg2[%518, %c0_262] : memref<32x128xf32, #tpu.memory_space<vmem>>, vector<1x128xf32>
    %520 = arith.addf %513, %519 : vector<1x128xf32>
    %c2_i32_263 = arith.constant 2 : i32
    %521 = arith.addi %496, %c2_i32_263 : i32
    %c2_i32_264 = arith.constant 2 : i32
    %522 = arith.addi %521, %c2_i32_264 : i32
    %523 = arith.index_cast %522 : i32 to index
    %524 = memref.load %arg1[%523] : memref<160xi32, #tpu.memory_space<smem>>
    %525 = arith.index_cast %524 : i32 to index
    %c0_265 = arith.constant 0 : index
    %526 = vector.load %arg2[%525, %c0_265] : memref<32x128xf32, #tpu.memory_space<vmem>>, vector<1x128xf32>
    %527 = arith.addf %520, %526 : vector<1x128xf32>
    %c15_266 = arith.constant 15 : index
    %c256_267 = arith.constant 256 : index
    %528 = vector.load %arg3[%c15_266, %c256_267] : memref<32x384xf32, #tpu.memory_space<vmem>>, vector<1x128xf32>
    tpu.vector_store %arg3[%c15_266, %c256_267], %527 {strides = array<i32>} : memref<32x384xf32, #tpu.memory_space<vmem>>, vector<1x128xf32>,
    %c80_i32 = arith.constant 80 : i32
    %529 = arith.addi %0, %c80_i32 : i32
    %c0_i32_268 = arith.constant 0 : i32
    %530 = arith.addi %529, %c0_i32_268 : i32
    %531 = arith.index_cast %530 : i32 to index
    %532 = memref.load %arg1[%531] : memref<160xi32, #tpu.memory_space<smem>>
    %533 = arith.index_cast %532 : i32 to index
    %c0_269 = arith.constant 0 : index
    %534 = vector.load %arg2[%533, %c0_269] : memref<32x128xf32, #tpu.memory_space<vmem>>, vector<1x128xf32>
    %c16 = arith.constant 16 : index
    %c0_270 = arith.constant 0 : index
    %535 = vector.load %arg3[%c16, %c0_270] : memref<32x384xf32, #tpu.memory_space<vmem>>, vector<1x128xf32>
    tpu.vector_store %arg3[%c16, %c0_270], %534 {strides = array<i32>} : memref<32x384xf32, #tpu.memory_space<vmem>>, vector<1x128xf32>,
    %c1_i32_271 = arith.constant 1 : i32
    %536 = arith.addi %529, %c1_i32_271 : i32
    %537 = arith.index_cast %536 : i32 to index
    %538 = memref.load %arg1[%537] : memref<160xi32, #tpu.memory_space<smem>>
    %539 = arith.index_cast %538 : i32 to index
    %c0_272 = arith.constant 0 : index
    %540 = vector.load %arg2[%539, %c0_272] : memref<32x128xf32, #tpu.memory_space<vmem>>, vector<1x128xf32>
    %c16_273 = arith.constant 16 : index
    %c128_274 = arith.constant 128 : index
    %541 = vector.load %arg3[%c16_273, %c128_274] : memref<32x384xf32, #tpu.memory_space<vmem>>, vector<1x128xf32>
    tpu.vector_store %arg3[%c16_273, %c128_274], %540 {strides = array<i32>} : memref<32x384xf32, #tpu.memory_space<vmem>>, vector<1x128xf32>,
    %c2_i32_275 = arith.constant 2 : i32
    %542 = arith.addi %529, %c2_i32_275 : i32
    %543 = arith.index_cast %542 : i32 to index
    %544 = memref.load %arg1[%543] : memref<160xi32, #tpu.memory_space<smem>>
    %545 = arith.index_cast %544 : i32 to index
    %c0_276 = arith.constant 0 : index
    %546 = vector.load %arg2[%545, %c0_276] : memref<32x128xf32, #tpu.memory_space<vmem>>, vector<1x128xf32>
    %c2_i32_277 = arith.constant 2 : i32
    %547 = arith.addi %529, %c2_i32_277 : i32
    %c1_i32_278 = arith.constant 1 : i32
    %548 = arith.addi %547, %c1_i32_278 : i32
    %549 = arith.index_cast %548 : i32 to index
    %550 = memref.load %arg1[%549] : memref<160xi32, #tpu.memory_space<smem>>
    %551 = arith.index_cast %550 : i32 to index
    %c0_279 = arith.constant 0 : index
    %552 = vector.load %arg2[%551, %c0_279] : memref<32x128xf32, #tpu.memory_space<vmem>>, vector<1x128xf32>
    %553 = arith.addf %546, %552 : vector<1x128xf32>
    %c2_i32_280 = arith.constant 2 : i32
    %554 = arith.addi %529, %c2_i32_280 : i32
    %c2_i32_281 = arith.constant 2 : i32
    %555 = arith.addi %554, %c2_i32_281 : i32
    %556 = arith.index_cast %555 : i32 to index
    %557 = memref.load %arg1[%556] : memref<160xi32, #tpu.memory_space<smem>>
    %558 = arith.index_cast %557 : i32 to index
    %c0_282 = arith.constant 0 : index
    %559 = vector.load %arg2[%558, %c0_282] : memref<32x128xf32, #tpu.memory_space<vmem>>, vector<1x128xf32>
    %560 = arith.addf %553, %559 : vector<1x128xf32>
    %c16_283 = arith.constant 16 : index
    %c256_284 = arith.constant 256 : index
    %561 = vector.load %arg3[%c16_283, %c256_284] : memref<32x384xf32, #tpu.memory_space<vmem>>, vector<1x128xf32>
    tpu.vector_store %arg3[%c16_283, %c256_284], %560 {strides = array<i32>} : memref<32x384xf32, #tpu.memory_space<vmem>>, vector<1x128xf32>,
    %c85_i32 = arith.constant 85 : i32
    %562 = arith.addi %0, %c85_i32 : i32
    %c0_i32_285 = arith.constant 0 : i32
    %563 = arith.addi %562, %c0_i32_285 : i32
    %564 = arith.index_cast %563 : i32 to index
    %565 = memref.load %arg1[%564] : memref<160xi32, #tpu.memory_space<smem>>
    %566 = arith.index_cast %565 : i32 to index
    %c0_286 = arith.constant 0 : index
    %567 = vector.load %arg2[%566, %c0_286] : memref<32x128xf32, #tpu.memory_space<vmem>>, vector<1x128xf32>
    %c17 = arith.constant 17 : index
    %c0_287 = arith.constant 0 : index
    %568 = vector.load %arg3[%c17, %c0_287] : memref<32x384xf32, #tpu.memory_space<vmem>>, vector<1x128xf32>
    tpu.vector_store %arg3[%c17, %c0_287], %567 {strides = array<i32>} : memref<32x384xf32, #tpu.memory_space<vmem>>, vector<1x128xf32>,
    %c1_i32_288 = arith.constant 1 : i32
    %569 = arith.addi %562, %c1_i32_288 : i32
    %570 = arith.index_cast %569 : i32 to index
    %571 = memref.load %arg1[%570] : memref<160xi32, #tpu.memory_space<smem>>
    %572 = arith.index_cast %571 : i32 to index
    %c0_289 = arith.constant 0 : index
    %573 = vector.load %arg2[%572, %c0_289] : memref<32x128xf32, #tpu.memory_space<vmem>>, vector<1x128xf32>
    %c17_290 = arith.constant 17 : index
    %c128_291 = arith.constant 128 : index
    %574 = vector.load %arg3[%c17_290, %c128_291] : memref<32x384xf32, #tpu.memory_space<vmem>>, vector<1x128xf32>
    tpu.vector_store %arg3[%c17_290, %c128_291], %573 {strides = array<i32>} : memref<32x384xf32, #tpu.memory_space<vmem>>, vector<1x128xf32>,
    %c2_i32_292 = arith.constant 2 : i32
    %575 = arith.addi %562, %c2_i32_292 : i32
    %576 = arith.index_cast %575 : i32 to index
    %577 = memref.load %arg1[%576] : memref<160xi32, #tpu.memory_space<smem>>
    %578 = arith.index_cast %577 : i32 to index
    %c0_293 = arith.constant 0 : index
    %579 = vector.load %arg2[%578, %c0_293] : memref<32x128xf32, #tpu.memory_space<vmem>>, vector<1x128xf32>
    %c2_i32_294 = arith.constant 2 : i32
    %580 = arith.addi %562, %c2_i32_294 : i32
    %c1_i32_295 = arith.constant 1 : i32
    %581 = arith.addi %580, %c1_i32_295 : i32
    %582 = arith.index_cast %581 : i32 to index
    %583 = memref.load %arg1[%582] : memref<160xi32, #tpu.memory_space<smem>>
    %584 = arith.index_cast %583 : i32 to index
    %c0_296 = arith.constant 0 : index
    %585 = vector.load %arg2[%584, %c0_296] : memref<32x128xf32, #tpu.memory_space<vmem>>, vector<1x128xf32>
    %586 = arith.addf %579, %585 : vector<1x128xf32>
    %c2_i32_297 = arith.constant 2 : i32
    %587 = arith.addi %562, %c2_i32_297 : i32
    %c2_i32_298 = arith.constant 2 : i32
    %588 = arith.addi %587, %c2_i32_298 : i32
    %589 = arith.index_cast %588 : i32 to index
    %590 = memref.load %arg1[%589] : memref<160xi32, #tpu.memory_space<smem>>
    %591 = arith.index_cast %590 : i32 to index
    %c0_299 = arith.constant 0 : index
    %592 = vector.load %arg2[%591, %c0_299] : memref<32x128xf32, #tpu.memory_space<vmem>>, vector<1x128xf32>
    %593 = arith.addf %586, %592 : vector<1x128xf32>
    %c17_300 = arith.constant 17 : index
    %c256_301 = arith.constant 256 : index
    %594 = vector.load %arg3[%c17_300, %c256_301] : memref<32x384xf32, #tpu.memory_space<vmem>>, vector<1x128xf32>
    tpu.vector_store %arg3[%c17_300, %c256_301], %593 {strides = array<i32>} : memref<32x384xf32, #tpu.memory_space<vmem>>, vector<1x128xf32>,
    %c90_i32 = arith.constant 90 : i32
    %595 = arith.addi %0, %c90_i32 : i32
    %c0_i32_302 = arith.constant 0 : i32
    %596 = arith.addi %595, %c0_i32_302 : i32
    %597 = arith.index_cast %596 : i32 to index
    %598 = memref.load %arg1[%597] : memref<160xi32, #tpu.memory_space<smem>>
    %599 = arith.index_cast %598 : i32 to index
    %c0_303 = arith.constant 0 : index
    %600 = vector.load %arg2[%599, %c0_303] : memref<32x128xf32, #tpu.memory_space<vmem>>, vector<1x128xf32>
    %c18 = arith.constant 18 : index
    %c0_304 = arith.constant 0 : index
    %601 = vector.load %arg3[%c18, %c0_304] : memref<32x384xf32, #tpu.memory_space<vmem>>, vector<1x128xf32>
    tpu.vector_store %arg3[%c18, %c0_304], %600 {strides = array<i32>} : memref<32x384xf32, #tpu.memory_space<vmem>>, vector<1x128xf32>,
    %c1_i32_305 = arith.constant 1 : i32
    %602 = arith.addi %595, %c1_i32_305 : i32
    %603 = arith.index_cast %602 : i32 to index
    %604 = memref.load %arg1[%603] : memref<160xi32, #tpu.memory_space<smem>>
    %605 = arith.index_cast %604 : i32 to index
    %c0_306 = arith.constant 0 : index
    %606 = vector.load %arg2[%605, %c0_306] : memref<32x128xf32, #tpu.memory_space<vmem>>, vector<1x128xf32>
    %c18_307 = arith.constant 18 : index
    %c128_308 = arith.constant 128 : index
    %607 = vector.load %arg3[%c18_307, %c128_308] : memref<32x384xf32, #tpu.memory_space<vmem>>, vector<1x128xf32>
    tpu.vector_store %arg3[%c18_307, %c128_308], %606 {strides = array<i32>} : memref<32x384xf32, #tpu.memory_space<vmem>>, vector<1x128xf32>,
    %c2_i32_309 = arith.constant 2 : i32
    %608 = arith.addi %595, %c2_i32_309 : i32
    %609 = arith.index_cast %608 : i32 to index
    %610 = memref.load %arg1[%609] : memref<160xi32, #tpu.memory_space<smem>>
    %611 = arith.index_cast %610 : i32 to index
    %c0_310 = arith.constant 0 : index
    %612 = vector.load %arg2[%611, %c0_310] : memref<32x128xf32, #tpu.memory_space<vmem>>, vector<1x128xf32>
    %c2_i32_311 = arith.constant 2 : i32
    %613 = arith.addi %595, %c2_i32_311 : i32
    %c1_i32_312 = arith.constant 1 : i32
    %614 = arith.addi %613, %c1_i32_312 : i32
    %615 = arith.index_cast %614 : i32 to index
    %616 = memref.load %arg1[%615] : memref<160xi32, #tpu.memory_space<smem>>
    %617 = arith.index_cast %616 : i32 to index
    %c0_313 = arith.constant 0 : index
    %618 = vector.load %arg2[%617, %c0_313] : memref<32x128xf32, #tpu.memory_space<vmem>>, vector<1x128xf32>
    %619 = arith.addf %612, %618 : vector<1x128xf32>
    %c2_i32_314 = arith.constant 2 : i32
    %620 = arith.addi %595, %c2_i32_314 : i32
    %c2_i32_315 = arith.constant 2 : i32
    %621 = arith.addi %620, %c2_i32_315 : i32
    %622 = arith.index_cast %621 : i32 to index
    %623 = memref.load %arg1[%622] : memref<160xi32, #tpu.memory_space<smem>>
    %624 = arith.index_cast %623 : i32 to index
    %c0_316 = arith.constant 0 : index
    %625 = vector.load %arg2[%624, %c0_316] : memref<32x128xf32, #tpu.memory_space<vmem>>, vector<1x128xf32>
    %626 = arith.addf %619, %625 : vector<1x128xf32>
    %c18_317 = arith.constant 18 : index
    %c256_318 = arith.constant 256 : index
    %627 = vector.load %arg3[%c18_317, %c256_318] : memref<32x384xf32, #tpu.memory_space<vmem>>, vector<1x128xf32>
    tpu.vector_store %arg3[%c18_317, %c256_318], %626 {strides = array<i32>} : memref<32x384xf32, #tpu.memory_space<vmem>>, vector<1x128xf32>,
    %c95_i32 = arith.constant 95 : i32
    %628 = arith.addi %0, %c95_i32 : i32
    %c0_i32_319 = arith.constant 0 : i32
    %629 = arith.addi %628, %c0_i32_319 : i32
    %630 = arith.index_cast %629 : i32 to index
    %631 = memref.load %arg1[%630] : memref<160xi32, #tpu.memory_space<smem>>
    %632 = arith.index_cast %631 : i32 to index
    %c0_320 = arith.constant 0 : index
    %633 = vector.load %arg2[%632, %c0_320] : memref<32x128xf32, #tpu.memory_space<vmem>>, vector<1x128xf32>
    %c19 = arith.constant 19 : index
    %c0_321 = arith.constant 0 : index
    %634 = vector.load %arg3[%c19, %c0_321] : memref<32x384xf32, #tpu.memory_space<vmem>>, vector<1x128xf32>
    tpu.vector_store %arg3[%c19, %c0_321], %633 {strides = array<i32>} : memref<32x384xf32, #tpu.memory_space<vmem>>, vector<1x128xf32>,
    %c1_i32_322 = arith.constant 1 : i32
    %635 = arith.addi %628, %c1_i32_322 : i32
    %636 = arith.index_cast %635 : i32 to index
    %637 = memref.load %arg1[%636] : memref<160xi32, #tpu.memory_space<smem>>
    %638 = arith.index_cast %637 : i32 to index
    %c0_323 = arith.constant 0 : index
    %639 = vector.load %arg2[%638, %c0_323] : memref<32x128xf32, #tpu.memory_space<vmem>>, vector<1x128xf32>
    %c19_324 = arith.constant 19 : index
    %c128_325 = arith.constant 128 : index
    %640 = vector.load %arg3[%c19_324, %c128_325] : memref<32x384xf32, #tpu.memory_space<vmem>>, vector<1x128xf32>
    tpu.vector_store %arg3[%c19_324, %c128_325], %639 {strides = array<i32>} : memref<32x384xf32, #tpu.memory_space<vmem>>, vector<1x128xf32>,
    %c2_i32_326 = arith.constant 2 : i32
    %641 = arith.addi %628, %c2_i32_326 : i32
    %642 = arith.index_cast %641 : i32 to index
    %643 = memref.load %arg1[%642] : memref<160xi32, #tpu.memory_space<smem>>
    %644 = arith.index_cast %643 : i32 to index
    %c0_327 = arith.constant 0 : index
    %645 = vector.load %arg2[%644, %c0_327] : memref<32x128xf32, #tpu.memory_space<vmem>>, vector<1x128xf32>
    %c2_i32_328 = arith.constant 2 : i32
    %646 = arith.addi %628, %c2_i32_328 : i32
    %c1_i32_329 = arith.constant 1 : i32
    %647 = arith.addi %646, %c1_i32_329 : i32
    %648 = arith.index_cast %647 : i32 to index
    %649 = memref.load %arg1[%648] : memref<160xi32, #tpu.memory_space<smem>>
    %650 = arith.index_cast %649 : i32 to index
    %c0_330 = arith.constant 0 : index
    %651 = vector.load %arg2[%650, %c0_330] : memref<32x128xf32, #tpu.memory_space<vmem>>, vector<1x128xf32>
    %652 = arith.addf %645, %651 : vector<1x128xf32>
    %c2_i32_331 = arith.constant 2 : i32
    %653 = arith.addi %628, %c2_i32_331 : i32
    %c2_i32_332 = arith.constant 2 : i32
    %654 = arith.addi %653, %c2_i32_332 : i32
    %655 = arith.index_cast %654 : i32 to index
    %656 = memref.load %arg1[%655] : memref<160xi32, #tpu.memory_space<smem>>
    %657 = arith.index_cast %656 : i32 to index
    %c0_333 = arith.constant 0 : index
    %658 = vector.load %arg2[%657, %c0_333] : memref<32x128xf32, #tpu.memory_space<vmem>>, vector<1x128xf32>
    %659 = arith.addf %652, %658 : vector<1x128xf32>
    %c19_334 = arith.constant 19 : index
    %c256_335 = arith.constant 256 : index
    %660 = vector.load %arg3[%c19_334, %c256_335] : memref<32x384xf32, #tpu.memory_space<vmem>>, vector<1x128xf32>
    tpu.vector_store %arg3[%c19_334, %c256_335], %659 {strides = array<i32>} : memref<32x384xf32, #tpu.memory_space<vmem>>, vector<1x128xf32>,
    %c100_i32 = arith.constant 100 : i32
    %661 = arith.addi %0, %c100_i32 : i32
    %c0_i32_336 = arith.constant 0 : i32
    %662 = arith.addi %661, %c0_i32_336 : i32
    %663 = arith.index_cast %662 : i32 to index
    %664 = memref.load %arg1[%663] : memref<160xi32, #tpu.memory_space<smem>>
    %665 = arith.index_cast %664 : i32 to index
    %c0_337 = arith.constant 0 : index
    %666 = vector.load %arg2[%665, %c0_337] : memref<32x128xf32, #tpu.memory_space<vmem>>, vector<1x128xf32>
    %c20 = arith.constant 20 : index
    %c0_338 = arith.constant 0 : index
    %667 = vector.load %arg3[%c20, %c0_338] : memref<32x384xf32, #tpu.memory_space<vmem>>, vector<1x128xf32>
    tpu.vector_store %arg3[%c20, %c0_338], %666 {strides = array<i32>} : memref<32x384xf32, #tpu.memory_space<vmem>>, vector<1x128xf32>,
    %c1_i32_339 = arith.constant 1 : i32
    %668 = arith.addi %661, %c1_i32_339 : i32
    %669 = arith.index_cast %668 : i32 to index
    %670 = memref.load %arg1[%669] : memref<160xi32, #tpu.memory_space<smem>>
    %671 = arith.index_cast %670 : i32 to index
    %c0_340 = arith.constant 0 : index
    %672 = vector.load %arg2[%671, %c0_340] : memref<32x128xf32, #tpu.memory_space<vmem>>, vector<1x128xf32>
    %c20_341 = arith.constant 20 : index
    %c128_342 = arith.constant 128 : index
    %673 = vector.load %arg3[%c20_341, %c128_342] : memref<32x384xf32, #tpu.memory_space<vmem>>, vector<1x128xf32>
    tpu.vector_store %arg3[%c20_341, %c128_342], %672 {strides = array<i32>} : memref<32x384xf32, #tpu.memory_space<vmem>>, vector<1x128xf32>,
    %c2_i32_343 = arith.constant 2 : i32
    %674 = arith.addi %661, %c2_i32_343 : i32
    %675 = arith.index_cast %674 : i32 to index
    %676 = memref.load %arg1[%675] : memref<160xi32, #tpu.memory_space<smem>>
    %677 = arith.index_cast %676 : i32 to index
    %c0_344 = arith.constant 0 : index
    %678 = vector.load %arg2[%677, %c0_344] : memref<32x128xf32, #tpu.memory_space<vmem>>, vector<1x128xf32>
    %c2_i32_345 = arith.constant 2 : i32
    %679 = arith.addi %661, %c2_i32_345 : i32
    %c1_i32_346 = arith.constant 1 : i32
    %680 = arith.addi %679, %c1_i32_346 : i32
    %681 = arith.index_cast %680 : i32 to index
    %682 = memref.load %arg1[%681] : memref<160xi32, #tpu.memory_space<smem>>
    %683 = arith.index_cast %682 : i32 to index
    %c0_347 = arith.constant 0 : index
    %684 = vector.load %arg2[%683, %c0_347] : memref<32x128xf32, #tpu.memory_space<vmem>>, vector<1x128xf32>
    %685 = arith.addf %678, %684 : vector<1x128xf32>
    %c2_i32_348 = arith.constant 2 : i32
    %686 = arith.addi %661, %c2_i32_348 : i32
    %c2_i32_349 = arith.constant 2 : i32
    %687 = arith.addi %686, %c2_i32_349 : i32
    %688 = arith.index_cast %687 : i32 to index
    %689 = memref.load %arg1[%688] : memref<160xi32, #tpu.memory_space<smem>>
    %690 = arith.index_cast %689 : i32 to index
    %c0_350 = arith.constant 0 : index
    %691 = vector.load %arg2[%690, %c0_350] : memref<32x128xf32, #tpu.memory_space<vmem>>, vector<1x128xf32>
    %692 = arith.addf %685, %691 : vector<1x128xf32>
    %c20_351 = arith.constant 20 : index
    %c256_352 = arith.constant 256 : index
    %693 = vector.load %arg3[%c20_351, %c256_352] : memref<32x384xf32, #tpu.memory_space<vmem>>, vector<1x128xf32>
    tpu.vector_store %arg3[%c20_351, %c256_352], %692 {strides = array<i32>} : memref<32x384xf32, #tpu.memory_space<vmem>>, vector<1x128xf32>,
    %c105_i32 = arith.constant 105 : i32
    %694 = arith.addi %0, %c105_i32 : i32
    %c0_i32_353 = arith.constant 0 : i32
    %695 = arith.addi %694, %c0_i32_353 : i32
    %696 = arith.index_cast %695 : i32 to index
    %697 = memref.load %arg1[%696] : memref<160xi32, #tpu.memory_space<smem>>
    %698 = arith.index_cast %697 : i32 to index
    %c0_354 = arith.constant 0 : index
    %699 = vector.load %arg2[%698, %c0_354] : memref<32x128xf32, #tpu.memory_space<vmem>>, vector<1x128xf32>
    %c21 = arith.constant 21 : index
    %c0_355 = arith.constant 0 : index
    %700 = vector.load %arg3[%c21, %c0_355] : memref<32x384xf32, #tpu.memory_space<vmem>>, vector<1x128xf32>
    tpu.vector_store %arg3[%c21, %c0_355], %699 {strides = array<i32>} : memref<32x384xf32, #tpu.memory_space<vmem>>, vector<1x128xf32>,
    %c1_i32_356 = arith.constant 1 : i32
    %701 = arith.addi %694, %c1_i32_356 : i32
    %702 = arith.index_cast %701 : i32 to index
    %703 = memref.load %arg1[%702] : memref<160xi32, #tpu.memory_space<smem>>
    %704 = arith.index_cast %703 : i32 to index
    %c0_357 = arith.constant 0 : index
    %705 = vector.load %arg2[%704, %c0_357] : memref<32x128xf32, #tpu.memory_space<vmem>>, vector<1x128xf32>
    %c21_358 = arith.constant 21 : index
    %c128_359 = arith.constant 128 : index
    %706 = vector.load %arg3[%c21_358, %c128_359] : memref<32x384xf32, #tpu.memory_space<vmem>>, vector<1x128xf32>
    tpu.vector_store %arg3[%c21_358, %c128_359], %705 {strides = array<i32>} : memref<32x384xf32, #tpu.memory_space<vmem>>, vector<1x128xf32>,
    %c2_i32_360 = arith.constant 2 : i32
    %707 = arith.addi %694, %c2_i32_360 : i32
    %708 = arith.index_cast %707 : i32 to index
    %709 = memref.load %arg1[%708] : memref<160xi32, #tpu.memory_space<smem>>
    %710 = arith.index_cast %709 : i32 to index
    %c0_361 = arith.constant 0 : index
    %711 = vector.load %arg2[%710, %c0_361] : memref<32x128xf32, #tpu.memory_space<vmem>>, vector<1x128xf32>
    %c2_i32_362 = arith.constant 2 : i32
    %712 = arith.addi %694, %c2_i32_362 : i32
    %c1_i32_363 = arith.constant 1 : i32
    %713 = arith.addi %712, %c1_i32_363 : i32
    %714 = arith.index_cast %713 : i32 to index
    %715 = memref.load %arg1[%714] : memref<160xi32, #tpu.memory_space<smem>>
    %716 = arith.index_cast %715 : i32 to index
    %c0_364 = arith.constant 0 : index
    %717 = vector.load %arg2[%716, %c0_364] : memref<32x128xf32, #tpu.memory_space<vmem>>, vector<1x128xf32>
    %718 = arith.addf %711, %717 : vector<1x128xf32>
    %c2_i32_365 = arith.constant 2 : i32
    %719 = arith.addi %694, %c2_i32_365 : i32
    %c2_i32_366 = arith.constant 2 : i32
    %720 = arith.addi %719, %c2_i32_366 : i32
    %721 = arith.index_cast %720 : i32 to index
    %722 = memref.load %arg1[%721] : memref<160xi32, #tpu.memory_space<smem>>
    %723 = arith.index_cast %722 : i32 to index
    %c0_367 = arith.constant 0 : index
    %724 = vector.load %arg2[%723, %c0_367] : memref<32x128xf32, #tpu.memory_space<vmem>>, vector<1x128xf32>
    %725 = arith.addf %718, %724 : vector<1x128xf32>
    %c21_368 = arith.constant 21 : index
    %c256_369 = arith.constant 256 : index
    %726 = vector.load %arg3[%c21_368, %c256_369] : memref<32x384xf32, #tpu.memory_space<vmem>>, vector<1x128xf32>
    tpu.vector_store %arg3[%c21_368, %c256_369], %725 {strides = array<i32>} : memref<32x384xf32, #tpu.memory_space<vmem>>, vector<1x128xf32>,
    %c110_i32 = arith.constant 110 : i32
    %727 = arith.addi %0, %c110_i32 : i32
    %c0_i32_370 = arith.constant 0 : i32
    %728 = arith.addi %727, %c0_i32_370 : i32
    %729 = arith.index_cast %728 : i32 to index
    %730 = memref.load %arg1[%729] : memref<160xi32, #tpu.memory_space<smem>>
    %731 = arith.index_cast %730 : i32 to index
    %c0_371 = arith.constant 0 : index
    %732 = vector.load %arg2[%731, %c0_371] : memref<32x128xf32, #tpu.memory_space<vmem>>, vector<1x128xf32>
    %c22 = arith.constant 22 : index
    %c0_372 = arith.constant 0 : index
    %733 = vector.load %arg3[%c22, %c0_372] : memref<32x384xf32, #tpu.memory_space<vmem>>, vector<1x128xf32>
    tpu.vector_store %arg3[%c22, %c0_372], %732 {strides = array<i32>} : memref<32x384xf32, #tpu.memory_space<vmem>>, vector<1x128xf32>,
    %c1_i32_373 = arith.constant 1 : i32
    %734 = arith.addi %727, %c1_i32_373 : i32
    %735 = arith.index_cast %734 : i32 to index
    %736 = memref.load %arg1[%735] : memref<160xi32, #tpu.memory_space<smem>>
    %737 = arith.index_cast %736 : i32 to index
    %c0_374 = arith.constant 0 : index
    %738 = vector.load %arg2[%737, %c0_374] : memref<32x128xf32, #tpu.memory_space<vmem>>, vector<1x128xf32>
    %c22_375 = arith.constant 22 : index
    %c128_376 = arith.constant 128 : index
    %739 = vector.load %arg3[%c22_375, %c128_376] : memref<32x384xf32, #tpu.memory_space<vmem>>, vector<1x128xf32>
    tpu.vector_store %arg3[%c22_375, %c128_376], %738 {strides = array<i32>} : memref<32x384xf32, #tpu.memory_space<vmem>>, vector<1x128xf32>,
    %c2_i32_377 = arith.constant 2 : i32
    %740 = arith.addi %727, %c2_i32_377 : i32
    %741 = arith.index_cast %740 : i32 to index
    %742 = memref.load %arg1[%741] : memref<160xi32, #tpu.memory_space<smem>>
    %743 = arith.index_cast %742 : i32 to index
    %c0_378 = arith.constant 0 : index
    %744 = vector.load %arg2[%743, %c0_378] : memref<32x128xf32, #tpu.memory_space<vmem>>, vector<1x128xf32>
    %c2_i32_379 = arith.constant 2 : i32
    %745 = arith.addi %727, %c2_i32_379 : i32
    %c1_i32_380 = arith.constant 1 : i32
    %746 = arith.addi %745, %c1_i32_380 : i32
    %747 = arith.index_cast %746 : i32 to index
    %748 = memref.load %arg1[%747] : memref<160xi32, #tpu.memory_space<smem>>
    %749 = arith.index_cast %748 : i32 to index
    %c0_381 = arith.constant 0 : index
    %750 = vector.load %arg2[%749, %c0_381] : memref<32x128xf32, #tpu.memory_space<vmem>>, vector<1x128xf32>
    %751 = arith.addf %744, %750 : vector<1x128xf32>
    %c2_i32_382 = arith.constant 2 : i32
    %752 = arith.addi %727, %c2_i32_382 : i32
    %c2_i32_383 = arith.constant 2 : i32
    %753 = arith.addi %752, %c2_i32_383 : i32
    %754 = arith.index_cast %753 : i32 to index
    %755 = memref.load %arg1[%754] : memref<160xi32, #tpu.memory_space<smem>>
    %756 = arith.index_cast %755 : i32 to index
    %c0_384 = arith.constant 0 : index
    %757 = vector.load %arg2[%756, %c0_384] : memref<32x128xf32, #tpu.memory_space<vmem>>, vector<1x128xf32>
    %758 = arith.addf %751, %757 : vector<1x128xf32>
    %c22_385 = arith.constant 22 : index
    %c256_386 = arith.constant 256 : index
    %759 = vector.load %arg3[%c22_385, %c256_386] : memref<32x384xf32, #tpu.memory_space<vmem>>, vector<1x128xf32>
    tpu.vector_store %arg3[%c22_385, %c256_386], %758 {strides = array<i32>} : memref<32x384xf32, #tpu.memory_space<vmem>>, vector<1x128xf32>,
    %c115_i32 = arith.constant 115 : i32
    %760 = arith.addi %0, %c115_i32 : i32
    %c0_i32_387 = arith.constant 0 : i32
    %761 = arith.addi %760, %c0_i32_387 : i32
    %762 = arith.index_cast %761 : i32 to index
    %763 = memref.load %arg1[%762] : memref<160xi32, #tpu.memory_space<smem>>
    %764 = arith.index_cast %763 : i32 to index
    %c0_388 = arith.constant 0 : index
    %765 = vector.load %arg2[%764, %c0_388] : memref<32x128xf32, #tpu.memory_space<vmem>>, vector<1x128xf32>
    %c23 = arith.constant 23 : index
    %c0_389 = arith.constant 0 : index
    %766 = vector.load %arg3[%c23, %c0_389] : memref<32x384xf32, #tpu.memory_space<vmem>>, vector<1x128xf32>
    tpu.vector_store %arg3[%c23, %c0_389], %765 {strides = array<i32>} : memref<32x384xf32, #tpu.memory_space<vmem>>, vector<1x128xf32>,
    %c1_i32_390 = arith.constant 1 : i32
    %767 = arith.addi %760, %c1_i32_390 : i32
    %768 = arith.index_cast %767 : i32 to index
    %769 = memref.load %arg1[%768] : memref<160xi32, #tpu.memory_space<smem>>
    %770 = arith.index_cast %769 : i32 to index
    %c0_391 = arith.constant 0 : index
    %771 = vector.load %arg2[%770, %c0_391] : memref<32x128xf32, #tpu.memory_space<vmem>>, vector<1x128xf32>
    %c23_392 = arith.constant 23 : index
    %c128_393 = arith.constant 128 : index
    %772 = vector.load %arg3[%c23_392, %c128_393] : memref<32x384xf32, #tpu.memory_space<vmem>>, vector<1x128xf32>
    tpu.vector_store %arg3[%c23_392, %c128_393], %771 {strides = array<i32>} : memref<32x384xf32, #tpu.memory_space<vmem>>, vector<1x128xf32>,
    %c2_i32_394 = arith.constant 2 : i32
    %773 = arith.addi %760, %c2_i32_394 : i32
    %774 = arith.index_cast %773 : i32 to index
    %775 = memref.load %arg1[%774] : memref<160xi32, #tpu.memory_space<smem>>
    %776 = arith.index_cast %775 : i32 to index
    %c0_395 = arith.constant 0 : index
    %777 = vector.load %arg2[%776, %c0_395] : memref<32x128xf32, #tpu.memory_space<vmem>>, vector<1x128xf32>
    %c2_i32_396 = arith.constant 2 : i32
    %778 = arith.addi %760, %c2_i32_396 : i32
    %c1_i32_397 = arith.constant 1 : i32
    %779 = arith.addi %778, %c1_i32_397 : i32
    %780 = arith.index_cast %779 : i32 to index
    %781 = memref.load %arg1[%780] : memref<160xi32, #tpu.memory_space<smem>>
    %782 = arith.index_cast %781 : i32 to index
    %c0_398 = arith.constant 0 : index
    %783 = vector.load %arg2[%782, %c0_398] : memref<32x128xf32, #tpu.memory_space<vmem>>, vector<1x128xf32>
    %784 = arith.addf %777, %783 : vector<1x128xf32>
    %c2_i32_399 = arith.constant 2 : i32
    %785 = arith.addi %760, %c2_i32_399 : i32
    %c2_i32_400 = arith.constant 2 : i32
    %786 = arith.addi %785, %c2_i32_400 : i32
    %787 = arith.index_cast %786 : i32 to index
    %788 = memref.load %arg1[%787] : memref<160xi32, #tpu.memory_space<smem>>
    %789 = arith.index_cast %788 : i32 to index
    %c0_401 = arith.constant 0 : index
    %790 = vector.load %arg2[%789, %c0_401] : memref<32x128xf32, #tpu.memory_space<vmem>>, vector<1x128xf32>
    %791 = arith.addf %784, %790 : vector<1x128xf32>
    %c23_402 = arith.constant 23 : index
    %c256_403 = arith.constant 256 : index
    %792 = vector.load %arg3[%c23_402, %c256_403] : memref<32x384xf32, #tpu.memory_space<vmem>>, vector<1x128xf32>
    tpu.vector_store %arg3[%c23_402, %c256_403], %791 {strides = array<i32>} : memref<32x384xf32, #tpu.memory_space<vmem>>, vector<1x128xf32>,
    %c120_i32 = arith.constant 120 : i32
    %793 = arith.addi %0, %c120_i32 : i32
    %c0_i32_404 = arith.constant 0 : i32
    %794 = arith.addi %793, %c0_i32_404 : i32
    %795 = arith.index_cast %794 : i32 to index
    %796 = memref.load %arg1[%795] : memref<160xi32, #tpu.memory_space<smem>>
    %797 = arith.index_cast %796 : i32 to index
    %c0_405 = arith.constant 0 : index
    %798 = vector.load %arg2[%797, %c0_405] : memref<32x128xf32, #tpu.memory_space<vmem>>, vector<1x128xf32>
    %c24 = arith.constant 24 : index
    %c0_406 = arith.constant 0 : index
    %799 = vector.load %arg3[%c24, %c0_406] : memref<32x384xf32, #tpu.memory_space<vmem>>, vector<1x128xf32>
    tpu.vector_store %arg3[%c24, %c0_406], %798 {strides = array<i32>} : memref<32x384xf32, #tpu.memory_space<vmem>>, vector<1x128xf32>,
    %c1_i32_407 = arith.constant 1 : i32
    %800 = arith.addi %793, %c1_i32_407 : i32
    %801 = arith.index_cast %800 : i32 to index
    %802 = memref.load %arg1[%801] : memref<160xi32, #tpu.memory_space<smem>>
    %803 = arith.index_cast %802 : i32 to index
    %c0_408 = arith.constant 0 : index
    %804 = vector.load %arg2[%803, %c0_408] : memref<32x128xf32, #tpu.memory_space<vmem>>, vector<1x128xf32>
    %c24_409 = arith.constant 24 : index
    %c128_410 = arith.constant 128 : index
    %805 = vector.load %arg3[%c24_409, %c128_410] : memref<32x384xf32, #tpu.memory_space<vmem>>, vector<1x128xf32>
    tpu.vector_store %arg3[%c24_409, %c128_410], %804 {strides = array<i32>} : memref<32x384xf32, #tpu.memory_space<vmem>>, vector<1x128xf32>,
    %c2_i32_411 = arith.constant 2 : i32
    %806 = arith.addi %793, %c2_i32_411 : i32
    %807 = arith.index_cast %806 : i32 to index
    %808 = memref.load %arg1[%807] : memref<160xi32, #tpu.memory_space<smem>>
    %809 = arith.index_cast %808 : i32 to index
    %c0_412 = arith.constant 0 : index
    %810 = vector.load %arg2[%809, %c0_412] : memref<32x128xf32, #tpu.memory_space<vmem>>, vector<1x128xf32>
    %c2_i32_413 = arith.constant 2 : i32
    %811 = arith.addi %793, %c2_i32_413 : i32
    %c1_i32_414 = arith.constant 1 : i32
    %812 = arith.addi %811, %c1_i32_414 : i32
    %813 = arith.index_cast %812 : i32 to index
    %814 = memref.load %arg1[%813] : memref<160xi32, #tpu.memory_space<smem>>
    %815 = arith.index_cast %814 : i32 to index
    %c0_415 = arith.constant 0 : index
    %816 = vector.load %arg2[%815, %c0_415] : memref<32x128xf32, #tpu.memory_space<vmem>>, vector<1x128xf32>
    %817 = arith.addf %810, %816 : vector<1x128xf32>
    %c2_i32_416 = arith.constant 2 : i32
    %818 = arith.addi %793, %c2_i32_416 : i32
    %c2_i32_417 = arith.constant 2 : i32
    %819 = arith.addi %818, %c2_i32_417 : i32
    %820 = arith.index_cast %819 : i32 to index
    %821 = memref.load %arg1[%820] : memref<160xi32, #tpu.memory_space<smem>>
    %822 = arith.index_cast %821 : i32 to index
    %c0_418 = arith.constant 0 : index
    %823 = vector.load %arg2[%822, %c0_418] : memref<32x128xf32, #tpu.memory_space<vmem>>, vector<1x128xf32>
    %824 = arith.addf %817, %823 : vector<1x128xf32>
    %c24_419 = arith.constant 24 : index
    %c256_420 = arith.constant 256 : index
    %825 = vector.load %arg3[%c24_419, %c256_420] : memref<32x384xf32, #tpu.memory_space<vmem>>, vector<1x128xf32>
    tpu.vector_store %arg3[%c24_419, %c256_420], %824 {strides = array<i32>} : memref<32x384xf32, #tpu.memory_space<vmem>>, vector<1x128xf32>,
    %c125_i32 = arith.constant 125 : i32
    %826 = arith.addi %0, %c125_i32 : i32
    %c0_i32_421 = arith.constant 0 : i32
    %827 = arith.addi %826, %c0_i32_421 : i32
    %828 = arith.index_cast %827 : i32 to index
    %829 = memref.load %arg1[%828] : memref<160xi32, #tpu.memory_space<smem>>
    %830 = arith.index_cast %829 : i32 to index
    %c0_422 = arith.constant 0 : index
    %831 = vector.load %arg2[%830, %c0_422] : memref<32x128xf32, #tpu.memory_space<vmem>>, vector<1x128xf32>
    %c25 = arith.constant 25 : index
    %c0_423 = arith.constant 0 : index
    %832 = vector.load %arg3[%c25, %c0_423] : memref<32x384xf32, #tpu.memory_space<vmem>>, vector<1x128xf32>
    tpu.vector_store %arg3[%c25, %c0_423], %831 {strides = array<i32>} : memref<32x384xf32, #tpu.memory_space<vmem>>, vector<1x128xf32>,
    %c1_i32_424 = arith.constant 1 : i32
    %833 = arith.addi %826, %c1_i32_424 : i32
    %834 = arith.index_cast %833 : i32 to index
    %835 = memref.load %arg1[%834] : memref<160xi32, #tpu.memory_space<smem>>
    %836 = arith.index_cast %835 : i32 to index
    %c0_425 = arith.constant 0 : index
    %837 = vector.load %arg2[%836, %c0_425] : memref<32x128xf32, #tpu.memory_space<vmem>>, vector<1x128xf32>
    %c25_426 = arith.constant 25 : index
    %c128_427 = arith.constant 128 : index
    %838 = vector.load %arg3[%c25_426, %c128_427] : memref<32x384xf32, #tpu.memory_space<vmem>>, vector<1x128xf32>
    tpu.vector_store %arg3[%c25_426, %c128_427], %837 {strides = array<i32>} : memref<32x384xf32, #tpu.memory_space<vmem>>, vector<1x128xf32>,
    %c2_i32_428 = arith.constant 2 : i32
    %839 = arith.addi %826, %c2_i32_428 : i32
    %840 = arith.index_cast %839 : i32 to index
    %841 = memref.load %arg1[%840] : memref<160xi32, #tpu.memory_space<smem>>
    %842 = arith.index_cast %841 : i32 to index
    %c0_429 = arith.constant 0 : index
    %843 = vector.load %arg2[%842, %c0_429] : memref<32x128xf32, #tpu.memory_space<vmem>>, vector<1x128xf32>
    %c2_i32_430 = arith.constant 2 : i32
    %844 = arith.addi %826, %c2_i32_430 : i32
    %c1_i32_431 = arith.constant 1 : i32
    %845 = arith.addi %844, %c1_i32_431 : i32
    %846 = arith.index_cast %845 : i32 to index
    %847 = memref.load %arg1[%846] : memref<160xi32, #tpu.memory_space<smem>>
    %848 = arith.index_cast %847 : i32 to index
    %c0_432 = arith.constant 0 : index
    %849 = vector.load %arg2[%848, %c0_432] : memref<32x128xf32, #tpu.memory_space<vmem>>, vector<1x128xf32>
    %850 = arith.addf %843, %849 : vector<1x128xf32>
    %c2_i32_433 = arith.constant 2 : i32
    %851 = arith.addi %826, %c2_i32_433 : i32
    %c2_i32_434 = arith.constant 2 : i32
    %852 = arith.addi %851, %c2_i32_434 : i32
    %853 = arith.index_cast %852 : i32 to index
    %854 = memref.load %arg1[%853] : memref<160xi32, #tpu.memory_space<smem>>
    %855 = arith.index_cast %854 : i32 to index
    %c0_435 = arith.constant 0 : index
    %856 = vector.load %arg2[%855, %c0_435] : memref<32x128xf32, #tpu.memory_space<vmem>>, vector<1x128xf32>
    %857 = arith.addf %850, %856 : vector<1x128xf32>
    %c25_436 = arith.constant 25 : index
    %c256_437 = arith.constant 256 : index
    %858 = vector.load %arg3[%c25_436, %c256_437] : memref<32x384xf32, #tpu.memory_space<vmem>>, vector<1x128xf32>
    tpu.vector_store %arg3[%c25_436, %c256_437], %857 {strides = array<i32>} : memref<32x384xf32, #tpu.memory_space<vmem>>, vector<1x128xf32>,
    %c130_i32 = arith.constant 130 : i32
    %859 = arith.addi %0, %c130_i32 : i32
    %c0_i32_438 = arith.constant 0 : i32
    %860 = arith.addi %859, %c0_i32_438 : i32
    %861 = arith.index_cast %860 : i32 to index
    %862 = memref.load %arg1[%861] : memref<160xi32, #tpu.memory_space<smem>>
    %863 = arith.index_cast %862 : i32 to index
    %c0_439 = arith.constant 0 : index
    %864 = vector.load %arg2[%863, %c0_439] : memref<32x128xf32, #tpu.memory_space<vmem>>, vector<1x128xf32>
    %c26 = arith.constant 26 : index
    %c0_440 = arith.constant 0 : index
    %865 = vector.load %arg3[%c26, %c0_440] : memref<32x384xf32, #tpu.memory_space<vmem>>, vector<1x128xf32>
    tpu.vector_store %arg3[%c26, %c0_440], %864 {strides = array<i32>} : memref<32x384xf32, #tpu.memory_space<vmem>>, vector<1x128xf32>,
    %c1_i32_441 = arith.constant 1 : i32
    %866 = arith.addi %859, %c1_i32_441 : i32
    %867 = arith.index_cast %866 : i32 to index
    %868 = memref.load %arg1[%867] : memref<160xi32, #tpu.memory_space<smem>>
    %869 = arith.index_cast %868 : i32 to index
    %c0_442 = arith.constant 0 : index
    %870 = vector.load %arg2[%869, %c0_442] : memref<32x128xf32, #tpu.memory_space<vmem>>, vector<1x128xf32>
    %c26_443 = arith.constant 26 : index
    %c128_444 = arith.constant 128 : index
    %871 = vector.load %arg3[%c26_443, %c128_444] : memref<32x384xf32, #tpu.memory_space<vmem>>, vector<1x128xf32>
    tpu.vector_store %arg3[%c26_443, %c128_444], %870 {strides = array<i32>} : memref<32x384xf32, #tpu.memory_space<vmem>>, vector<1x128xf32>,
    %c2_i32_445 = arith.constant 2 : i32
    %872 = arith.addi %859, %c2_i32_445 : i32
    %873 = arith.index_cast %872 : i32 to index
    %874 = memref.load %arg1[%873] : memref<160xi32, #tpu.memory_space<smem>>
    %875 = arith.index_cast %874 : i32 to index
    %c0_446 = arith.constant 0 : index
    %876 = vector.load %arg2[%875, %c0_446] : memref<32x128xf32, #tpu.memory_space<vmem>>, vector<1x128xf32>
    %c2_i32_447 = arith.constant 2 : i32
    %877 = arith.addi %859, %c2_i32_447 : i32
    %c1_i32_448 = arith.constant 1 : i32
    %878 = arith.addi %877, %c1_i32_448 : i32
    %879 = arith.index_cast %878 : i32 to index
    %880 = memref.load %arg1[%879] : memref<160xi32, #tpu.memory_space<smem>>
    %881 = arith.index_cast %880 : i32 to index
    %c0_449 = arith.constant 0 : index
    %882 = vector.load %arg2[%881, %c0_449] : memref<32x128xf32, #tpu.memory_space<vmem>>, vector<1x128xf32>
    %883 = arith.addf %876, %882 : vector<1x128xf32>
    %c2_i32_450 = arith.constant 2 : i32
    %884 = arith.addi %859, %c2_i32_450 : i32
    %c2_i32_451 = arith.constant 2 : i32
    %885 = arith.addi %884, %c2_i32_451 : i32
    %886 = arith.index_cast %885 : i32 to index
    %887 = memref.load %arg1[%886] : memref<160xi32, #tpu.memory_space<smem>>
    %888 = arith.index_cast %887 : i32 to index
    %c0_452 = arith.constant 0 : index
    %889 = vector.load %arg2[%888, %c0_452] : memref<32x128xf32, #tpu.memory_space<vmem>>, vector<1x128xf32>
    %890 = arith.addf %883, %889 : vector<1x128xf32>
    %c26_453 = arith.constant 26 : index
    %c256_454 = arith.constant 256 : index
    %891 = vector.load %arg3[%c26_453, %c256_454] : memref<32x384xf32, #tpu.memory_space<vmem>>, vector<1x128xf32>
    tpu.vector_store %arg3[%c26_453, %c256_454], %890 {strides = array<i32>} : memref<32x384xf32, #tpu.memory_space<vmem>>, vector<1x128xf32>,
    %c135_i32 = arith.constant 135 : i32
    %892 = arith.addi %0, %c135_i32 : i32
    %c0_i32_455 = arith.constant 0 : i32
    %893 = arith.addi %892, %c0_i32_455 : i32
    %894 = arith.index_cast %893 : i32 to index
    %895 = memref.load %arg1[%894] : memref<160xi32, #tpu.memory_space<smem>>
    %896 = arith.index_cast %895 : i32 to index
    %c0_456 = arith.constant 0 : index
    %897 = vector.load %arg2[%896, %c0_456] : memref<32x128xf32, #tpu.memory_space<vmem>>, vector<1x128xf32>
    %c27 = arith.constant 27 : index
    %c0_457 = arith.constant 0 : index
    %898 = vector.load %arg3[%c27, %c0_457] : memref<32x384xf32, #tpu.memory_space<vmem>>, vector<1x128xf32>
    tpu.vector_store %arg3[%c27, %c0_457], %897 {strides = array<i32>} : memref<32x384xf32, #tpu.memory_space<vmem>>, vector<1x128xf32>,
    %c1_i32_458 = arith.constant 1 : i32
    %899 = arith.addi %892, %c1_i32_458 : i32
    %900 = arith.index_cast %899 : i32 to index
    %901 = memref.load %arg1[%900] : memref<160xi32, #tpu.memory_space<smem>>
    %902 = arith.index_cast %901 : i32 to index
    %c0_459 = arith.constant 0 : index
    %903 = vector.load %arg2[%902, %c0_459] : memref<32x128xf32, #tpu.memory_space<vmem>>, vector<1x128xf32>
    %c27_460 = arith.constant 27 : index
    %c128_461 = arith.constant 128 : index
    %904 = vector.load %arg3[%c27_460, %c128_461] : memref<32x384xf32, #tpu.memory_space<vmem>>, vector<1x128xf32>
    tpu.vector_store %arg3[%c27_460, %c128_461], %903 {strides = array<i32>} : memref<32x384xf32, #tpu.memory_space<vmem>>, vector<1x128xf32>,
    %c2_i32_462 = arith.constant 2 : i32
    %905 = arith.addi %892, %c2_i32_462 : i32
    %906 = arith.index_cast %905 : i32 to index
    %907 = memref.load %arg1[%906] : memref<160xi32, #tpu.memory_space<smem>>
    %908 = arith.index_cast %907 : i32 to index
    %c0_463 = arith.constant 0 : index
    %909 = vector.load %arg2[%908, %c0_463] : memref<32x128xf32, #tpu.memory_space<vmem>>, vector<1x128xf32>
    %c2_i32_464 = arith.constant 2 : i32
    %910 = arith.addi %892, %c2_i32_464 : i32
    %c1_i32_465 = arith.constant 1 : i32
    %911 = arith.addi %910, %c1_i32_465 : i32
    %912 = arith.index_cast %911 : i32 to index
    %913 = memref.load %arg1[%912] : memref<160xi32, #tpu.memory_space<smem>>
    %914 = arith.index_cast %913 : i32 to index
    %c0_466 = arith.constant 0 : index
    %915 = vector.load %arg2[%914, %c0_466] : memref<32x128xf32, #tpu.memory_space<vmem>>, vector<1x128xf32>
    %916 = arith.addf %909, %915 : vector<1x128xf32>
    %c2_i32_467 = arith.constant 2 : i32
    %917 = arith.addi %892, %c2_i32_467 : i32
    %c2_i32_468 = arith.constant 2 : i32
    %918 = arith.addi %917, %c2_i32_468 : i32
    %919 = arith.index_cast %918 : i32 to index
    %920 = memref.load %arg1[%919] : memref<160xi32, #tpu.memory_space<smem>>
    %921 = arith.index_cast %920 : i32 to index
    %c0_469 = arith.constant 0 : index
    %922 = vector.load %arg2[%921, %c0_469] : memref<32x128xf32, #tpu.memory_space<vmem>>, vector<1x128xf32>
    %923 = arith.addf %916, %922 : vector<1x128xf32>
    %c27_470 = arith.constant 27 : index
    %c256_471 = arith.constant 256 : index
    %924 = vector.load %arg3[%c27_470, %c256_471] : memref<32x384xf32, #tpu.memory_space<vmem>>, vector<1x128xf32>
    tpu.vector_store %arg3[%c27_470, %c256_471], %923 {strides = array<i32>} : memref<32x384xf32, #tpu.memory_space<vmem>>, vector<1x128xf32>,
    %c140_i32 = arith.constant 140 : i32
    %925 = arith.addi %0, %c140_i32 : i32
    %c0_i32_472 = arith.constant 0 : i32
    %926 = arith.addi %925, %c0_i32_472 : i32
    %927 = arith.index_cast %926 : i32 to index
    %928 = memref.load %arg1[%927] : memref<160xi32, #tpu.memory_space<smem>>
    %929 = arith.index_cast %928 : i32 to index
    %c0_473 = arith.constant 0 : index
    %930 = vector.load %arg2[%929, %c0_473] : memref<32x128xf32, #tpu.memory_space<vmem>>, vector<1x128xf32>
    %c28 = arith.constant 28 : index
    %c0_474 = arith.constant 0 : index
    %931 = vector.load %arg3[%c28, %c0_474] : memref<32x384xf32, #tpu.memory_space<vmem>>, vector<1x128xf32>
    tpu.vector_store %arg3[%c28, %c0_474], %930 {strides = array<i32>} : memref<32x384xf32, #tpu.memory_space<vmem>>, vector<1x128xf32>,
    %c1_i32_475 = arith.constant 1 : i32
    %932 = arith.addi %925, %c1_i32_475 : i32
    %933 = arith.index_cast %932 : i32 to index
    %934 = memref.load %arg1[%933] : memref<160xi32, #tpu.memory_space<smem>>
    %935 = arith.index_cast %934 : i32 to index
    %c0_476 = arith.constant 0 : index
    %936 = vector.load %arg2[%935, %c0_476] : memref<32x128xf32, #tpu.memory_space<vmem>>, vector<1x128xf32>
    %c28_477 = arith.constant 28 : index
    %c128_478 = arith.constant 128 : index
    %937 = vector.load %arg3[%c28_477, %c128_478] : memref<32x384xf32, #tpu.memory_space<vmem>>, vector<1x128xf32>
    tpu.vector_store %arg3[%c28_477, %c128_478], %936 {strides = array<i32>} : memref<32x384xf32, #tpu.memory_space<vmem>>, vector<1x128xf32>,
    %c2_i32_479 = arith.constant 2 : i32
    %938 = arith.addi %925, %c2_i32_479 : i32
    %939 = arith.index_cast %938 : i32 to index
    %940 = memref.load %arg1[%939] : memref<160xi32, #tpu.memory_space<smem>>
    %941 = arith.index_cast %940 : i32 to index
    %c0_480 = arith.constant 0 : index
    %942 = vector.load %arg2[%941, %c0_480] : memref<32x128xf32, #tpu.memory_space<vmem>>, vector<1x128xf32>
    %c2_i32_481 = arith.constant 2 : i32
    %943 = arith.addi %925, %c2_i32_481 : i32
    %c1_i32_482 = arith.constant 1 : i32
    %944 = arith.addi %943, %c1_i32_482 : i32
    %945 = arith.index_cast %944 : i32 to index
    %946 = memref.load %arg1[%945] : memref<160xi32, #tpu.memory_space<smem>>
    %947 = arith.index_cast %946 : i32 to index
    %c0_483 = arith.constant 0 : index
    %948 = vector.load %arg2[%947, %c0_483] : memref<32x128xf32, #tpu.memory_space<vmem>>, vector<1x128xf32>
    %949 = arith.addf %942, %948 : vector<1x128xf32>
    %c2_i32_484 = arith.constant 2 : i32
    %950 = arith.addi %925, %c2_i32_484 : i32
    %c2_i32_485 = arith.constant 2 : i32
    %951 = arith.addi %950, %c2_i32_485 : i32
    %952 = arith.index_cast %951 : i32 to index
    %953 = memref.load %arg1[%952] : memref<160xi32, #tpu.memory_space<smem>>
    %954 = arith.index_cast %953 : i32 to index
    %c0_486 = arith.constant 0 : index
    %955 = vector.load %arg2[%954, %c0_486] : memref<32x128xf32, #tpu.memory_space<vmem>>, vector<1x128xf32>
    %956 = arith.addf %949, %955 : vector<1x128xf32>
    %c28_487 = arith.constant 28 : index
    %c256_488 = arith.constant 256 : index
    %957 = vector.load %arg3[%c28_487, %c256_488] : memref<32x384xf32, #tpu.memory_space<vmem>>, vector<1x128xf32>
    tpu.vector_store %arg3[%c28_487, %c256_488], %956 {strides = array<i32>} : memref<32x384xf32, #tpu.memory_space<vmem>>, vector<1x128xf32>,
    %c145_i32 = arith.constant 145 : i32
    %958 = arith.addi %0, %c145_i32 : i32
    %c0_i32_489 = arith.constant 0 : i32
    %959 = arith.addi %958, %c0_i32_489 : i32
    %960 = arith.index_cast %959 : i32 to index
    %961 = memref.load %arg1[%960] : memref<160xi32, #tpu.memory_space<smem>>
    %962 = arith.index_cast %961 : i32 to index
    %c0_490 = arith.constant 0 : index
    %963 = vector.load %arg2[%962, %c0_490] : memref<32x128xf32, #tpu.memory_space<vmem>>, vector<1x128xf32>
    %c29 = arith.constant 29 : index
    %c0_491 = arith.constant 0 : index
    %964 = vector.load %arg3[%c29, %c0_491] : memref<32x384xf32, #tpu.memory_space<vmem>>, vector<1x128xf32>
    tpu.vector_store %arg3[%c29, %c0_491], %963 {strides = array<i32>} : memref<32x384xf32, #tpu.memory_space<vmem>>, vector<1x128xf32>,
    %c1_i32_492 = arith.constant 1 : i32
    %965 = arith.addi %958, %c1_i32_492 : i32
    %966 = arith.index_cast %965 : i32 to index
    %967 = memref.load %arg1[%966] : memref<160xi32, #tpu.memory_space<smem>>
    %968 = arith.index_cast %967 : i32 to index
    %c0_493 = arith.constant 0 : index
    %969 = vector.load %arg2[%968, %c0_493] : memref<32x128xf32, #tpu.memory_space<vmem>>, vector<1x128xf32>
    %c29_494 = arith.constant 29 : index
    %c128_495 = arith.constant 128 : index
    %970 = vector.load %arg3[%c29_494, %c128_495] : memref<32x384xf32, #tpu.memory_space<vmem>>, vector<1x128xf32>
    tpu.vector_store %arg3[%c29_494, %c128_495], %969 {strides = array<i32>} : memref<32x384xf32, #tpu.memory_space<vmem>>, vector<1x128xf32>,
    %c2_i32_496 = arith.constant 2 : i32
    %971 = arith.addi %958, %c2_i32_496 : i32
    %972 = arith.index_cast %971 : i32 to index
    %973 = memref.load %arg1[%972] : memref<160xi32, #tpu.memory_space<smem>>
    %974 = arith.index_cast %973 : i32 to index
    %c0_497 = arith.constant 0 : index
    %975 = vector.load %arg2[%974, %c0_497] : memref<32x128xf32, #tpu.memory_space<vmem>>, vector<1x128xf32>
    %c2_i32_498 = arith.constant 2 : i32
    %976 = arith.addi %958, %c2_i32_498 : i32
    %c1_i32_499 = arith.constant 1 : i32
    %977 = arith.addi %976, %c1_i32_499 : i32
    %978 = arith.index_cast %977 : i32 to index
    %979 = memref.load %arg1[%978] : memref<160xi32, #tpu.memory_space<smem>>
    %980 = arith.index_cast %979 : i32 to index
    %c0_500 = arith.constant 0 : index
    %981 = vector.load %arg2[%980, %c0_500] : memref<32x128xf32, #tpu.memory_space<vmem>>, vector<1x128xf32>
    %982 = arith.addf %975, %981 : vector<1x128xf32>
    %c2_i32_501 = arith.constant 2 : i32
    %983 = arith.addi %958, %c2_i32_501 : i32
    %c2_i32_502 = arith.constant 2 : i32
    %984 = arith.addi %983, %c2_i32_502 : i32
    %985 = arith.index_cast %984 : i32 to index
    %986 = memref.load %arg1[%985] : memref<160xi32, #tpu.memory_space<smem>>
    %987 = arith.index_cast %986 : i32 to index
    %c0_503 = arith.constant 0 : index
    %988 = vector.load %arg2[%987, %c0_503] : memref<32x128xf32, #tpu.memory_space<vmem>>, vector<1x128xf32>
    %989 = arith.addf %982, %988 : vector<1x128xf32>
    %c29_504 = arith.constant 29 : index
    %c256_505 = arith.constant 256 : index
    %990 = vector.load %arg3[%c29_504, %c256_505] : memref<32x384xf32, #tpu.memory_space<vmem>>, vector<1x128xf32>
    tpu.vector_store %arg3[%c29_504, %c256_505], %989 {strides = array<i32>} : memref<32x384xf32, #tpu.memory_space<vmem>>, vector<1x128xf32>,
    %c150_i32 = arith.constant 150 : i32
    %991 = arith.addi %0, %c150_i32 : i32
    %c0_i32_506 = arith.constant 0 : i32
    %992 = arith.addi %991, %c0_i32_506 : i32
    %993 = arith.index_cast %992 : i32 to index
    %994 = memref.load %arg1[%993] : memref<160xi32, #tpu.memory_space<smem>>
    %995 = arith.index_cast %994 : i32 to index
    %c0_507 = arith.constant 0 : index
    %996 = vector.load %arg2[%995, %c0_507] : memref<32x128xf32, #tpu.memory_space<vmem>>, vector<1x128xf32>
    %c30 = arith.constant 30 : index
    %c0_508 = arith.constant 0 : index
    %997 = vector.load %arg3[%c30, %c0_508] : memref<32x384xf32, #tpu.memory_space<vmem>>, vector<1x128xf32>
    tpu.vector_store %arg3[%c30, %c0_508], %996 {strides = array<i32>} : memref<32x384xf32, #tpu.memory_space<vmem>>, vector<1x128xf32>,
    %c1_i32_509 = arith.constant 1 : i32
    %998 = arith.addi %991, %c1_i32_509 : i32
    %999 = arith.index_cast %998 : i32 to index
    %1000 = memref.load %arg1[%999] : memref<160xi32, #tpu.memory_space<smem>>
    %1001 = arith.index_cast %1000 : i32 to index
    %c0_510 = arith.constant 0 : index
    %1002 = vector.load %arg2[%1001, %c0_510] : memref<32x128xf32, #tpu.memory_space<vmem>>, vector<1x128xf32>
    %c30_511 = arith.constant 30 : index
    %c128_512 = arith.constant 128 : index
    %1003 = vector.load %arg3[%c30_511, %c128_512] : memref<32x384xf32, #tpu.memory_space<vmem>>, vector<1x128xf32>
    tpu.vector_store %arg3[%c30_511, %c128_512], %1002 {strides = array<i32>} : memref<32x384xf32, #tpu.memory_space<vmem>>, vector<1x128xf32>,
    %c2_i32_513 = arith.constant 2 : i32
    %1004 = arith.addi %991, %c2_i32_513 : i32
    %1005 = arith.index_cast %1004 : i32 to index
    %1006 = memref.load %arg1[%1005] : memref<160xi32, #tpu.memory_space<smem>>
    %1007 = arith.index_cast %1006 : i32 to index
    %c0_514 = arith.constant 0 : index
    %1008 = vector.load %arg2[%1007, %c0_514] : memref<32x128xf32, #tpu.memory_space<vmem>>, vector<1x128xf32>
    %c2_i32_515 = arith.constant 2 : i32
    %1009 = arith.addi %991, %c2_i32_515 : i32
    %c1_i32_516 = arith.constant 1 : i32
    %1010 = arith.addi %1009, %c1_i32_516 : i32
    %1011 = arith.index_cast %1010 : i32 to index
    %1012 = memref.load %arg1[%1011] : memref<160xi32, #tpu.memory_space<smem>>
    %1013 = arith.index_cast %1012 : i32 to index
    %c0_517 = arith.constant 0 : index
    %1014 = vector.load %arg2[%1013, %c0_517] : memref<32x128xf32, #tpu.memory_space<vmem>>, vector<1x128xf32>
    %1015 = arith.addf %1008, %1014 : vector<1x128xf32>
    %c2_i32_518 = arith.constant 2 : i32
    %1016 = arith.addi %991, %c2_i32_518 : i32
    %c2_i32_519 = arith.constant 2 : i32
    %1017 = arith.addi %1016, %c2_i32_519 : i32
    %1018 = arith.index_cast %1017 : i32 to index
    %1019 = memref.load %arg1[%1018] : memref<160xi32, #tpu.memory_space<smem>>
    %1020 = arith.index_cast %1019 : i32 to index
    %c0_520 = arith.constant 0 : index
    %1021 = vector.load %arg2[%1020, %c0_520] : memref<32x128xf32, #tpu.memory_space<vmem>>, vector<1x128xf32>
    %1022 = arith.addf %1015, %1021 : vector<1x128xf32>
    %c30_521 = arith.constant 30 : index
    %c256_522 = arith.constant 256 : index
    %1023 = vector.load %arg3[%c30_521, %c256_522] : memref<32x384xf32, #tpu.memory_space<vmem>>, vector<1x128xf32>
    tpu.vector_store %arg3[%c30_521, %c256_522], %1022 {strides = array<i32>} : memref<32x384xf32, #tpu.memory_space<vmem>>, vector<1x128xf32>,
    %c155_i32 = arith.constant 155 : i32
    %1024 = arith.addi %0, %c155_i32 : i32
    %c0_i32_523 = arith.constant 0 : i32
    %1025 = arith.addi %1024, %c0_i32_523 : i32
    %1026 = arith.index_cast %1025 : i32 to index
    %1027 = memref.load %arg1[%1026] : memref<160xi32, #tpu.memory_space<smem>>
    %1028 = arith.index_cast %1027 : i32 to index
    %c0_524 = arith.constant 0 : index
    %1029 = vector.load %arg2[%1028, %c0_524] : memref<32x128xf32, #tpu.memory_space<vmem>>, vector<1x128xf32>
    %c31 = arith.constant 31 : index
    %c0_525 = arith.constant 0 : index
    %1030 = vector.load %arg3[%c31, %c0_525] : memref<32x384xf32, #tpu.memory_space<vmem>>, vector<1x128xf32>
    tpu.vector_store %arg3[%c31, %c0_525], %1029 {strides = array<i32>} : memref<32x384xf32, #tpu.memory_space<vmem>>, vector<1x128xf32>,
    %c1_i32_526 = arith.constant 1 : i32
    %1031 = arith.addi %1024, %c1_i32_526 : i32
    %1032 = arith.index_cast %1031 : i32 to index
    %1033 = memref.load %arg1[%1032] : memref<160xi32, #tpu.memory_space<smem>>
    %1034 = arith.index_cast %1033 : i32 to index
    %c0_527 = arith.constant 0 : index
    %1035 = vector.load %arg2[%1034, %c0_527] : memref<32x128xf32, #tpu.memory_space<vmem>>, vector<1x128xf32>
    %c31_528 = arith.constant 31 : index
    %c128_529 = arith.constant 128 : index
    %1036 = vector.load %arg3[%c31_528, %c128_529] : memref<32x384xf32, #tpu.memory_space<vmem>>, vector<1x128xf32>
    tpu.vector_store %arg3[%c31_528, %c128_529], %1035 {strides = array<i32>} : memref<32x384xf32, #tpu.memory_space<vmem>>, vector<1x128xf32>,
    %c2_i32_530 = arith.constant 2 : i32
    %1037 = arith.addi %1024, %c2_i32_530 : i32
    %1038 = arith.index_cast %1037 : i32 to index
    %1039 = memref.load %arg1[%1038] : memref<160xi32, #tpu.memory_space<smem>>
    %1040 = arith.index_cast %1039 : i32 to index
    %c0_531 = arith.constant 0 : index
    %1041 = vector.load %arg2[%1040, %c0_531] : memref<32x128xf32, #tpu.memory_space<vmem>>, vector<1x128xf32>
    %c2_i32_532 = arith.constant 2 : i32
    %1042 = arith.addi %1024, %c2_i32_532 : i32
    %c1_i32_533 = arith.constant 1 : i32
    %1043 = arith.addi %1042, %c1_i32_533 : i32
    %1044 = arith.index_cast %1043 : i32 to index
    %1045 = memref.load %arg1[%1044] : memref<160xi32, #tpu.memory_space<smem>>
    %1046 = arith.index_cast %1045 : i32 to index
    %c0_534 = arith.constant 0 : index
    %1047 = vector.load %arg2[%1046, %c0_534] : memref<32x128xf32, #tpu.memory_space<vmem>>, vector<1x128xf32>
    %1048 = arith.addf %1041, %1047 : vector<1x128xf32>
    %c2_i32_535 = arith.constant 2 : i32
    %1049 = arith.addi %1024, %c2_i32_535 : i32
    %c2_i32_536 = arith.constant 2 : i32
    %1050 = arith.addi %1049, %c2_i32_536 : i32
    %1051 = arith.index_cast %1050 : i32 to index
    %1052 = memref.load %arg1[%1051] : memref<160xi32, #tpu.memory_space<smem>>
    %1053 = arith.index_cast %1052 : i32 to index
    %c0_537 = arith.constant 0 : index
    %1054 = vector.load %arg2[%1053, %c0_537] : memref<32x128xf32, #tpu.memory_space<vmem>>, vector<1x128xf32>
    %1055 = arith.addf %1048, %1054 : vector<1x128xf32>
    %c31_538 = arith.constant 31 : index
    %c256_539 = arith.constant 256 : index
    %1056 = vector.load %arg3[%c31_538, %c256_539] : memref<32x384xf32, #tpu.memory_space<vmem>>, vector<1x128xf32>
    tpu.vector_store %arg3[%c31_538, %c256_539], %1055 {strides = array<i32>} : memref<32x384xf32, #tpu.memory_space<vmem>>, vector<1x128xf32>,
    return
  }
  func.func @transform_0(%arg0: i32, %arg1: memref<160xi32, #tpu.memory_space<smem>>) -> (i32, i32) {
    %c0_i32 = arith.constant 0 : i32
    %c0_i32_0 = arith.constant 0 : i32
    %c0_i32_1 = arith.constant 0 : i32
    return %c0_i32, %c0_i32_0 : i32, i32
  }
  func.func @transform_1(%arg0: i32, %arg1: memref<160xi32, #tpu.memory_space<smem>>) -> (i32, i32) {
    %c0_i32 = arith.constant 0 : i32
    %c0_i32_0 = arith.constant 0 : i32
    return %arg0, %c0_i32 : i32, i32
  }
}

</mosaic_0001>

<llo_original>
// kernel: tpu_custom_call.1
$region0: #{tpu_custom_call.1}
  #allocation0 [shape = 'u32[]', space=smem, size = 0x4, offset = 0x4, fixed_abs, tag = 'smem constant byte address 0x4 - core index']
  #allocation1 [shape = 'u32[144,128]{1,0:T(1,128)}', space=vmem, size = 0x12000, scoped, tag = 'internal scratch']
  #allocation2 [shape = 's32[1]{0}', space=sflag, size = 0x4, scoped, tag = 'scoped memory for tpu_custom_call.1']
  #allocation3 [shape = 'u8[1024]{0}', space=smem, size = 0x400, scoped, tag = 'prefetched SMEM operand 0']
  %s0 = inlined_call_operand.hbm [shape: s32[160], index: 0, kind: input, shape index: {}]
  %s1 = inlined_call_operand.hbm [shape: f32[32,128], index: 1, kind: input, shape index: {}]
  %s2 = inlined_call_operand.hbm [shape: f32[32,384], index: 2, kind: output, shape index: {}]
  %s3 = sld [smem:[#allocation0]]
  $region18: #{tpu_custom_call.1} parent=0
    _
  %s5 = ssub.s32 1, %s3
  %s6 = scalar_select 0, %s5, %s3
  %8 = dma.hbm_to_smem %s0, 32, [#allocation3], [#allocation2]
  %9 = dma.done [#allocation2], 32
  %10 = sfence
  $region1: #{tpu_custom_call.1} parent=0
    #allocation4 [shape = 'u8[16384]{0}', space=vmem, size = 0x4000, scoped, tag = 'input window, operand 1, single buffered']
    #allocation5 [shape = 's32[1]{0}', space=sflag, size = 0x4, scoped, tag = 'scoped memory for tpu_custom_call.1']
    #allocation6 [shape = 's32[1]{0}', space=sflag, size = 0x4, scoped, tag = 'scoped memory for tpu_custom_call.1']
    #allocation7 [shape = 'u8[49152]{0}', space=vmem, size = 0xc000, scoped, tag = 'output window, operand 0, single buffered']
    %11 = vsyncpa [#allocation5], 0
    %12 = vsyncpa [#allocation6], 0
    // Predicated region
    $region2: #{tpu_custom_call.1} parent=1 // pred_check
      _
    $region3: #{tpu_custom_call.1} parent=1 // pred_check_branch
      %14 = sbr.rel (0) target = $region5
    $region4: #{tpu_custom_call.1} parent=1 // pred_region
      %s16 = ssub.s32 512, 512
      %17 = vsyncadd [#allocation5], %s16
      %s18 = sshll.u32 [#allocation4], 4
      %s19 = int_to_ptr.vmem [resolvable:$true] %s18
      %24 = dma.hbm_to_vmem [thread:$0]  %s1, 512, %s19, [#allocation5], 128, 128, 8
    $region5: #{tpu_custom_call.1} parent=1 // pred_fallthru
      _
    // Predicated region
    $region6: #{tpu_custom_call.1} parent=1 // pred_check
      _
    $region7: #{tpu_custom_call.1} parent=1 // pred_check_branch
      %26 = sbr.rel (0) target = $region9
    $region8: #{tpu_custom_call.1} parent=1 // pred_region
      %27 = dma.done [#allocation5], 512
    $region9: #{tpu_custom_call.1} parent=1 // pred_fallthru
      _
    %s28 = smul.u32 0, 160
    %s29 = sld [smem:[#allocation3 + %s28]]
    %s30 = scalar_lea.vmem [#allocation4], %s29
    %v31 = vld [vmem:[%s30] sm:$0x1]
    %32 = vst [vmem:[#allocation7] sm:$0x1] %v31
    %s33 = sadd.s32 %s28, 1
    %s34 = sld [smem:[#allocation3 + %s33]]
    %s35 = scalar_lea.vmem [#allocation4], %s34
    %v36 = vld [vmem:[%s35] sm:$0x1]
    %37 = vst [vmem:[#allocation7 + $0x8] sm:$0x1] %v36
    %s38 = sadd.s32 %s28, 2
    %s39 = sld [smem:[#allocation3 + %s38]]
    %s40 = scalar_lea.vmem [#allocation4], %s39
    %v41 = vld [vmem:[%s40] sm:$0x1]
    %s42 = sadd.s32 %s28, 3
    %s43 = sld [smem:[#allocation3 + %s42]]
    %s44 = scalar_lea.vmem [#allocation4], %s43
    %v45 = vld [vmem:[%s44] sm:$0x1]
    %v46 = vadd.f32 %v41, %v45
    %s47 = sadd.s32 %s28, 4
    %s48 = sld [smem:[#allocation3 + %s47]]
    %s49 = scalar_lea.vmem [#allocation4], %s48
    %v50 = vld [vmem:[%s49] sm:$0x1]
    %v51 = vadd.f32 %v46, %v50
    %52 = vst [vmem:[#allocation7 + $0x10] sm:$0x1] %v51
    %s53 = sadd.s32 %s28, 5
    %s54 = sld [smem:[#allocation3 + %s53]]
    %s55 = scalar_lea.vmem [#allocation4], %s54
    %v56 = vld [vmem:[%s55] sm:$0x1]
    %57 = vst [vmem:[#allocation7 + $0x1] sm:$0x1] %v56
    %s58 = sadd.s32 %s28, 6
    %s59 = sld [smem:[#allocation3 + %s58]]
    %s60 = scalar_lea.vmem [#allocation4], %s59
    %v61 = vld [vmem:[%s60] sm:$0x1]
    %62 = vst [vmem:[#allocation7 + $0x9] sm:$0x1] %v61
    %s63 = sadd.s32 %s28, 7
    %s64 = sld [smem:[#allocation3 + %s63]]
    %s65 = scalar_lea.vmem [#allocation4], %s64
    %v66 = vld [vmem:[%s65] sm:$0x1]
    %s67 = sadd.s32 %s28, 8
    %s68 = sld [smem:[#allocation3 + %s67]]
    %s69 = scalar_lea.vmem [#allocation4], %s68
    %v70 = vld [vmem:[%s69] sm:$0x1]
    %v71 = vadd.f32 %v66, %v70
    %s72 = sadd.s32 %s28, 9
    %s73 = sld [smem:[#allocation3 + %s72]]
    %s74 = scalar_lea.vmem [#allocation4], %s73
    %v75 = vld [vmem:[%s74] sm:$0x1]
    %v76 = vadd.f32 %v71, %v75
    %77 = vst [vmem:[#allocation7 + $0x11] sm:$0x1] %v76
    %s78 = sadd.s32 %s28, 10
    %s79 = sld [smem:[#allocation3 + %s78]]
    %s80 = scalar_lea.vmem [#allocation4], %s79
    %v81 = vld [vmem:[%s80] sm:$0x1]
    %82 = vst [vmem:[#allocation7 + $0x2] sm:$0x1] %v81
    %s83 = sadd.s32 %s28, 11
    %s84 = sld [smem:[#allocation3 + %s83]]
    %s85 = scalar_lea.vmem [#allocation4], %s84
    %v86 = vld [vmem:[%s85] sm:$0x1]
    %87 = vst [vmem:[#allocation7 + $0xa] sm:$0x1] %v86
    %s88 = sadd.s32 %s28, 12
    %s89 = sld [smem:[#allocation3 + %s88]]
    %s90 = scalar_lea.vmem [#allocation4], %s89
    %v91 = vld [vmem:[%s90] sm:$0x1]
    %s92 = sadd.s32 %s28, 13
    %s93 = sld [smem:[#allocation3 + %s92]]
    %s94 = scalar_lea.vmem [#allocation4], %s93
    %v95 = vld [vmem:[%s94] sm:$0x1]
    %v96 = vadd.f32 %v91, %v95
    %s97 = sadd.s32 %s28, 14
    %s98 = sld [smem:[#allocation3 + %s97]]
    %s99 = scalar_lea.vmem [#allocation4], %s98
    %v100 = vld [vmem:[%s99] sm:$0x1]
    %v101 = vadd.f32 %v96, %v100
    %102 = vst [vmem:[#allocation7 + $0x12] sm:$0x1] %v101
    %s103 = sadd.s32 %s28, 15
    %s104 = sld [smem:[#allocation3 + %s103]]
    %s105 = scalar_lea.vmem [#allocation4], %s104
    %v106 = vld [vmem:[%s105] sm:$0x1]
    %107 = vst [vmem:[#allocation7 + $0x3] sm:$0x1] %v106
    %s108 = sadd.s32 %s28, 16
    %s109 = sld [smem:[#allocation3 + %s108]]
    %s110 = scalar_lea.vmem [#allocation4], %s109
    %v111 = vld [vmem:[%s110] sm:$0x1]
    %112 = vst [vmem:[#allocation7 + $0xb] sm:$0x1] %v111
    %s113 = sadd.s32 %s28, 17
    %s114 = sld [smem:[#allocation3 + %s113]]
    %s115 = scalar_lea.vmem [#allocation4], %s114
    %v116 = vld [vmem:[%s115] sm:$0x1]
    %s117 = sadd.s32 %s28, 18
    %s118 = sld [smem:[#allocation3 + %s117]]
    %s119 = scalar_lea.vmem [#allocation4], %s118
    %v120 = vld [vmem:[%s119] sm:$0x1]
    %v121 = vadd.f32 %v116, %v120
    %s122 = sadd.s32 %s28, 19
    %s123 = sld [smem:[#allocation3 + %s122]]
    %s124 = scalar_lea.vmem [#allocation4], %s123
    %v125 = vld [vmem:[%s124] sm:$0x1]
    %v126 = vadd.f32 %v121, %v125
    %127 = vst [vmem:[#allocation7 + $0x13] sm:$0x1] %v126
    %s128 = sadd.s32 %s28, 20
    %s129 = sld [smem:[#allocation3 + %s128]]
    %s130 = scalar_lea.vmem [#allocation4], %s129
    %v131 = vld [vmem:[%s130] sm:$0x1]
    %132 = vst [vmem:[#allocation7 + $0x4] sm:$0x1] %v131
    %s133 = sadd.s32 %s28, 21
    %s134 = sld [smem:[#allocation3 + %s133]]
    %s135 = scalar_lea.vmem [#allocation4], %s134
    %v136 = vld [vmem:[%s135] sm:$0x1]
    %137 = vst [vmem:[#allocation7 + $0xc] sm:$0x1] %v136
    %s138 = sadd.s32 %s28, 22
    %s139 = sld [smem:[#allocation3 + %s138]]
    %s140 = scalar_lea.vmem [#allocation4], %s139
    %v141 = vld [vmem:[%s140] sm:$0x1]
    %s142 = sadd.s32 %s28, 23
    %s143 = sld [smem:[#allocation3 + %s142]]
    %s144 = scalar_lea.vmem [#allocation4], %s143
    %v145 = vld [vmem:[%s144] sm:$0x1]
    %v146 = vadd.f32 %v141, %v145
    %s147 = sadd.s32 %s28, 24
    %s148 = sld [smem:[#allocation3 + %s147]]
    %s149 = scalar_lea.vmem [#allocation4], %s148
    %v150 = vld [vmem:[%s149] sm:$0x1]
    %v151 = vadd.f32 %v146, %v150
    %152 = vst [vmem:[#allocation7 + $0x14] sm:$0x1] %v151
    %s153 = sadd.s32 %s28, 25
    %s154 = sld [smem:[#allocation3 + %s153]]
    %s155 = scalar_lea.vmem [#allocation4], %s154
    %v156 = vld [vmem:[%s155] sm:$0x1]
    %157 = vst [vmem:[#allocation7 + $0x5] sm:$0x1] %v156
    %s158 = sadd.s32 %s28, 26
    %s159 = sld [smem:[#allocation3 + %s158]]
    %s160 = scalar_lea.vmem [#allocation4], %s159
    %v161 = vld [vmem:[%s160] sm:$0x1]
    %162 = vst [vmem:[#allocation7 + $0xd] sm:$0x1] %v161
    %s163 = sadd.s32 %s28, 27
    %s164 = sld [smem:[#allocation3 + %s163]]
    %s165 = scalar_lea.vmem [#allocation4], %s164
    %v166 = vld [vmem:[%s165] sm:$0x1]
    %s167 = sadd.s32 %s28, 28
    %s168 = sld [smem:[#allocation3 + %s167]]
    %s169 = scalar_lea.vmem [#allocation4], %s168
    %v170 = vld [vmem:[%s169] sm:$0x1]
    %v171 = vadd.f32 %v166, %v170
    %s172 = sadd.s32 %s28, 29
    %s173 = sld [smem:[#allocation3 + %s172]]
    %s174 = scalar_lea.vmem [#allocation4], %s173
    %v175 = vld [vmem:[%s174] sm:$0x1]
    %v176 = vadd.f32 %v171, %v175
    %177 = vst [vmem:[#allocation7 + $0x15] sm:$0x1] %v176
    %s178 = sadd.s32 %s28, 30
    %s179 = sld [smem:[#allocation3 + %s178]]
    %s180 = scalar_lea.vmem [#allocation4], %s179
    %v181 = vld [vmem:[%s180] sm:$0x1]
    %182 = vst [vmem:[#allocation7 + $0x6] sm:$0x1] %v181
    %s183 = sadd.s32 %s28, 31
    %s184 = sld [smem:[#allocation3 + %s183]]
    %s185 = scalar_lea.vmem [#allocation4], %s184
    %v186 = vld [vmem:[%s185] sm:$0x1]
    %187 = vst [vmem:[#allocation7 + $0xe] sm:$0x1] %v186
    %s188 = sadd.s32 %s28, 32
    %s189 = sld [smem:[#allocation3 + %s188]]
    %s190 = scalar_lea.vmem [#allocation4], %s189
    %v191 = vld [vmem:[%s190] sm:$0x1]
    %s192 = sadd.s32 %s28, 33
    %s193 = sld [smem:[#allocation3 + %s192]]
    %s194 = scalar_lea.vmem [#allocation4], %s193
    %v195 = vld [vmem:[%s194] sm:$0x1]
    %v196 = vadd.f32 %v191, %v195
    %s197 = sadd.s32 %s28, 34
    %s198 = sld [smem:[#allocation3 + %s197]]
    %s199 = scalar_lea.vmem [#allocation4], %s198
    %v200 = vld [vmem:[%s199] sm:$0x1]
    %v201 = vadd.f32 %v196, %v200
    %202 = vst [vmem:[#allocation7 + $0x16] sm:$0x1] %v201
    %s203 = sadd.s32 %s28, 35
    %s204 = sld [smem:[#allocation3 + %s203]]
    %s205 = scalar_lea.vmem [#allocation4], %s204
    %v206 = vld [vmem:[%s205] sm:$0x1]
    %207 = vst [vmem:[#allocation7 + $0x7] sm:$0x1] %v206
    %s208 = sadd.s32 %s28, 36
    %s209 = sld [smem:[#allocation3 + %s208]]
    %s210 = scalar_lea.vmem [#allocation4], %s209
    %v211 = vld [vmem:[%s210] sm:$0x1]
    %212 = vst [vmem:[#allocation7 + $0xf] sm:$0x1] %v211
    %s213 = sadd.s32 %s28, 37
    %s214 = sld [smem:[#allocation3 + %s213]]
    %s215 = scalar_lea.vmem [#allocation4], %s214
    %v216 = vld [vmem:[%s215] sm:$0x1]
    %s217 = sadd.s32 %s28, 38
    %s218 = sld [smem:[#allocation3 + %s217]]
    %s219 = scalar_lea.vmem [#allocation4], %s218
    %v220 = vld [vmem:[%s219] sm:$0x1]
    %v221 = vadd.f32 %v216, %v220
    %s222 = sadd.s32 %s28, 39
    %s223 = sld [smem:[#allocation3 + %s222]]
    %s224 = scalar_lea.vmem [#allocation4], %s223
    %v225 = vld [vmem:[%s224] sm:$0x1]
    %v226 = vadd.f32 %v221, %v225
    %227 = vst [vmem:[#allocation7 + $0x17] sm:$0x1] %v226
    %s228 = sadd.s32 %s28, 40
    %s229 = sld [smem:[#allocation3 + %s228]]
    %s230 = scalar_lea.vmem [#allocation4], %s229
    %v231 = vld [vmem:[%s230] sm:$0x1]
    %232 = vst [vmem:[#allocation7 + $0x18] sm:$0x1] %v231
    %s233 = sadd.s32 %s28, 41
    %s234 = sld [smem:[#allocation3 + %s233]]
    %s235 = scalar_lea.vmem [#allocation4], %s234
    %v236 = vld [vmem:[%s235] sm:$0x1]
    %237 = vst [vmem:[#allocation7 + $0x20] sm:$0x1] %v236
    %s238 = sadd.s32 %s28, 42
    %s239 = sld [smem:[#allocation3 + %s238]]
    %s240 = scalar_lea.vmem [#allocation4], %s239
    %v241 = vld [vmem:[%s240] sm:$0x1]
    %s242 = sadd.s32 %s28, 43
    %s243 = sld [smem:[#allocation3 + %s242]]
    %s244 = scalar_lea.vmem [#allocation4], %s243
    %v245 = vld [vmem:[%s244] sm:$0x1]
    %v246 = vadd.f32 %v241, %v245
    %s247 = sadd.s32 %s28, 44
    %s248 = sld [smem:[#allocation3 + %s247]]
    %s249 = scalar_lea.vmem [#allocation4], %s248
    %v250 = vld [vmem:[%s249] sm:$0x1]
    %v251 = vadd.f32 %v246, %v250
    %252 = vst [vmem:[#allocation7 + $0x28] sm:$0x1] %v251
    %s253 = sadd.s32 %s28, 45
    %s254 = sld [smem:[#allocation3 + %s253]]
    %s255 = scalar_lea.vmem [#allocation4], %s254
    %v256 = vld [vmem:[%s255] sm:$0x1]
    %257 = vst [vmem:[#allocation7 + $0x19] sm:$0x1] %v256
    %s258 = sadd.s32 %s28, 46
    %s259 = sld [smem:[#allocation3 + %s258]]
    %s260 = scalar_lea.vmem [#allocation4], %s259
    %v261 = vld [vmem:[%s260] sm:$0x1]
    %262 = vst [vmem:[#allocation7 + $0x21] sm:$0x1] %v261
    %s263 = sadd.s32 %s28, 47
    %s264 = sld [smem:[#allocation3 + %s263]]
    %s265 = scalar_lea.vmem [#allocation4], %s264
    %v266 = vld [vmem:[%s265] sm:$0x1]
    %s267 = sadd.s32 %s28, 48
    %s268 = sld [smem:[#allocation3 + %s267]]
    %s269 = scalar_lea.vmem [#allocation4], %s268
    %v270 = vld [vmem:[%s269] sm:$0x1]
    %v271 = vadd.f32 %v266, %v270
    %s272 = sadd.s32 %s28, 49
    %s273 = sld [smem:[#allocation3 + %s272]]
    %s274 = scalar_lea.vmem [#allocation4], %s273
    %v275 = vld [vmem:[%s274] sm:$0x1]
    %v276 = vadd.f32 %v271, %v275
    %277 = vst [vmem:[#allocation7 + $0x29] sm:$0x1] %v276
    %s278 = sadd.s32 %s28, 50
    %s279 = sld [smem:[#allocation3 + %s278]]
    %s280 = scalar_lea.vmem [#allocation4], %s279
    %v281 = vld [vmem:[%s280] sm:$0x1]
    %282 = vst [vmem:[#allocation7 + $0x1a] sm:$0x1] %v281
    %s283 = sadd.s32 %s28, 51
    %s284 = sld [smem:[#allocation3 + %s283]]
    %s285 = scalar_lea.vmem [#allocation4], %s284
    %v286 = vld [vmem:[%s285] sm:$0x1]
    %287 = vst [vmem:[#allocation7 + $0x22] sm:$0x1] %v286
    %s288 = sadd.s32 %s28, 52
    %s289 = sld [smem:[#allocation3 + %s288]]
    %s290 = scalar_lea.vmem [#allocation4], %s289
    %v291 = vld [vmem:[%s290] sm:$0x1]
    %s292 = sadd.s32 %s28, 53
    %s293 = sld [smem:[#allocation3 + %s292]]
    %s294 = scalar_lea.vmem [#allocation4], %s293
    %v295 = vld [vmem:[%s294] sm:$0x1]
    %v296 = vadd.f32 %v291, %v295
    %s297 = sadd.s32 %s28, 54
    %s298 = sld [smem:[#allocation3 + %s297]]
    %s299 = scalar_lea.vmem [#allocation4], %s298
    %v300 = vld [vmem:[%s299] sm:$0x1]
    %v301 = vadd.f32 %v296, %v300
    %302 = vst [vmem:[#allocation7 + $0x2a] sm:$0x1] %v301
    %s303 = sadd.s32 %s28, 55
    %s304 = sld [smem:[#allocation3 + %s303]]
    %s305 = scalar_lea.vmem [#allocation4], %s304
    %v306 = vld [vmem:[%s305] sm:$0x1]
    %307 = vst [vmem:[#allocation7 + $0x1b] sm:$0x1] %v306
    %s308 = sadd.s32 %s28, 56
    %s309 = sld [smem:[#allocation3 + %s308]]
    %s310 = scalar_lea.vmem [#allocation4], %s309
    %v311 = vld [vmem:[%s310] sm:$0x1]
    %312 = vst [vmem:[#allocation7 + $0x23] sm:$0x1] %v311
    %s313 = sadd.s32 %s28, 57
    %s314 = sld [smem:[#allocation3 + %s313]]
    %s315 = scalar_lea.vmem [#allocation4], %s314
    %v316 = vld [vmem:[%s315] sm:$0x1]
    %s317 = sadd.s32 %s28, 58
    %s318 = sld [smem:[#allocation3 + %s317]]
    %s319 = scalar_lea.vmem [#allocation4], %s318
    %v320 = vld [vmem:[%s319] sm:$0x1]
    %v321 = vadd.f32 %v316, %v320
    %s322 = sadd.s32 %s28, 59
    %s323 = sld [smem:[#allocation3 + %s322]]
    %s324 = scalar_lea.vmem [#allocation4], %s323
    %v325 = vld [vmem:[%s324] sm:$0x1]
    %v326 = vadd.f32 %v321, %v325
    %327 = vst [vmem:[#allocation7 + $0x2b] sm:$0x1] %v326
    %s328 = sadd.s32 %s28, 60
    %s329 = sld [smem:[#allocation3 + %s328]]
    %s330 = scalar_lea.vmem [#allocation4], %s329
    %v331 = vld [vmem:[%s330] sm:$0x1]
    %332 = vst [vmem:[#allocation7 + $0x1c] sm:$0x1] %v331
    %s333 = sadd.s32 %s28, 61
    %s334 = sld [smem:[#allocation3 + %s333]]
    %s335 = scalar_lea.vmem [#allocation4], %s334
    %v336 = vld [vmem:[%s335] sm:$0x1]
    %337 = vst [vmem:[#allocation7 + $0x24] sm:$0x1] %v336
    %s338 = sadd.s32 %s28, 62
    %s339 = sld [smem:[#allocation3 + %s338]]
    %s340 = scalar_lea.vmem [#allocation4], %s339
    %v341 = vld [vmem:[%s340] sm:$0x1]
    %s342 = sadd.s32 %s28, 63
    %s343 = sld [smem:[#allocation3 + %s342]]
    %s344 = scalar_lea.vmem [#allocation4], %s343
    %v345 = vld [vmem:[%s344] sm:$0x1]
    %v346 = vadd.f32 %v341, %v345
    %s347 = sadd.s32 %s28, 64
    %s348 = sld [smem:[#allocation3 + %s347]]
    %s349 = scalar_lea.vmem [#allocation4], %s348
    %v350 = vld [vmem:[%s349] sm:$0x1]
    %v351 = vadd.f32 %v346, %v350
    %352 = vst [vmem:[#allocation7 + $0x2c] sm:$0x1] %v351
    %s353 = sadd.s32 %s28, 65
    %s354 = sld [smem:[#allocation3 + %s353]]
    %s355 = scalar_lea.vmem [#allocation4], %s354
    %v356 = vld [vmem:[%s355] sm:$0x1]
    %357 = vst [vmem:[#allocation7 + $0x1d] sm:$0x1] %v356
    %s358 = sadd.s32 %s28, 66
    %s359 = sld [smem:[#allocation3 + %s358]]
    %s360 = scalar_lea.vmem [#allocation4], %s359
    %v361 = vld [vmem:[%s360] sm:$0x1]
    %362 = vst [vmem:[#allocation7 + $0x25] sm:$0x1] %v361
    %s363 = sadd.s32 %s28, 67
    %s364 = sld [smem:[#allocation3 + %s363]]
    %s365 = scalar_lea.vmem [#allocation4], %s364
    %v366 = vld [vmem:[%s365] sm:$0x1]
    %s367 = sadd.s32 %s28, 68
    %s368 = sld [smem:[#allocation3 + %s367]]
    %s369 = scalar_lea.vmem [#allocation4], %s368
    %v370 = vld [vmem:[%s369] sm:$0x1]
    %v371 = vadd.f32 %v366, %v370
    %s372 = sadd.s32 %s28, 69
    %s373 = sld [smem:[#allocation3 + %s372]]
    %s374 = scalar_lea.vmem [#allocation4], %s373
    %v375 = vld [vmem:[%s374] sm:$0x1]
    %v376 = vadd.f32 %v371, %v375
    %377 = vst [vmem:[#allocation7 + $0x2d] sm:$0x1] %v376
    %s378 = sadd.s32 %s28, 70
    %s379 = sld [smem:[#allocation3 + %s378]]
    %s380 = scalar_lea.vmem [#allocation4], %s379
    %v381 = vld [vmem:[%s380] sm:$0x1]
    %382 = vst [vmem:[#allocation7 + $0x1e] sm:$0x1] %v381
    %s383 = sadd.s32 %s28, 71
    %s384 = sld [smem:[#allocation3 + %s383]]
    %s385 = scalar_lea.vmem [#allocation4], %s384
    %v386 = vld [vmem:[%s385] sm:$0x1]
    %387 = vst [vmem:[#allocation7 + $0x26] sm:$0x1] %v386
    %s388 = sadd.s32 %s28, 72
    %s389 = sld [smem:[#allocation3 + %s388]]
    %s390 = scalar_lea.vmem [#allocation4], %s389
    %v391 = vld [vmem:[%s390] sm:$0x1]
    %s392 = sadd.s32 %s28, 73
    %s393 = sld [smem:[#allocation3 + %s392]]
    %s394 = scalar_lea.vmem [#allocation4], %s393
    %v395 = vld [vmem:[%s394] sm:$0x1]
    %v396 = vadd.f32 %v391, %v395
    %s397 = sadd.s32 %s28, 74
    %s398 = sld [smem:[#allocation3 + %s397]]
    %s399 = scalar_lea.vmem [#allocation4], %s398
    %v400 = vld [vmem:[%s399] sm:$0x1]
    %v401 = vadd.f32 %v396, %v400
    %402 = vst [vmem:[#allocation7 + $0x2e] sm:$0x1] %v401
    %s403 = sadd.s32 %s28, 75
    %s404 = sld [smem:[#allocation3 + %s403]]
    %s405 = scalar_lea.vmem [#allocation4], %s404
    %v406 = vld [vmem:[%s405] sm:$0x1]
    %407 = vst [vmem:[#allocation7 + $0x1f] sm:$0x1] %v406
    %s408 = sadd.s32 %s28, 76
    %s409 = sld [smem:[#allocation3 + %s408]]
    %s410 = scalar_lea.vmem [#allocation4], %s409
    %v411 = vld [vmem:[%s410] sm:$0x1]
    %412 = vst [vmem:[#allocation7 + $0x27] sm:$0x1] %v411
    %s413 = sadd.s32 %s28, 77
    %s414 = sld [smem:[#allocation3 + %s413]]
    %s415 = scalar_lea.vmem [#allocation4], %s414
    %v416 = vld [vmem:[%s415] sm:$0x1]
    %s417 = sadd.s32 %s28, 78
    %s418 = sld [smem:[#allocation3 + %s417]]
    %s419 = scalar_lea.vmem [#allocation4], %s418
    %v420 = vld [vmem:[%s419] sm:$0x1]
    %v421 = vadd.f32 %v416, %v420
    %s422 = sadd.s32 %s28, 79
    %s423 = sld [smem:[#allocation3 + %s422]]
    %s424 = scalar_lea.vmem [#allocation4], %s423
    %v425 = vld [vmem:[%s424] sm:$0x1]
    %v426 = vadd.f32 %v421, %v425
    %427 = vst [vmem:[#allocation7 + $0x2f] sm:$0x1] %v426
    %s428 = sadd.s32 %s28, 80
    %s429 = sld [smem:[#allocation3 + %s428]]
    %s430 = scalar_lea.vmem [#allocation4], %s429
    %v431 = vld [vmem:[%s430] sm:$0x1]
    %432 = vst [vmem:[#allocation7 + $0x30] sm:$0x1] %v431
    %s433 = sadd.s32 %s28, 81
    %s434 = sld [smem:[#allocation3 + %s433]]
    %s435 = scalar_lea.vmem [#allocation4], %s434
    %v436 = vld [vmem:[%s435] sm:$0x1]
    %437 = vst [vmem:[#allocation7 + $0x38] sm:$0x1] %v436
    %s438 = sadd.s32 %s28, 82
    %s439 = sld [smem:[#allocation3 + %s438]]
    %s440 = scalar_lea.vmem [#allocation4], %s439
    %v441 = vld [vmem:[%s440] sm:$0x1]
    %s442 = sadd.s32 %s28, 83
    %s443 = sld [smem:[#allocation3 + %s442]]
    %s444 = scalar_lea.vmem [#allocation4], %s443
    %v445 = vld [vmem:[%s444] sm:$0x1]
    %v446 = vadd.f32 %v441, %v445
    %s447 = sadd.s32 %s28, 84
    %s448 = sld [smem:[#allocation3 + %s447]]
    %s449 = scalar_lea.vmem [#allocation4], %s448
    %v450 = vld [vmem:[%s449] sm:$0x1]
    %v451 = vadd.f32 %v446, %v450
    %452 = vst [vmem:[#allocation7 + $0x40] sm:$0x1] %v451
    %s453 = sadd.s32 %s28, 85
    %s454 = sld [smem:[#allocation3 + %s453]]
    %s455 = scalar_lea.vmem [#allocation4], %s454
    %v456 = vld [vmem:[%s455] sm:$0x1]
    %457 = vst [vmem:[#allocation7 + $0x31] sm:$0x1] %v456
    %s458 = sadd.s32 %s28, 86
    %s459 = sld [smem:[#allocation3 + %s458]]
    %s460 = scalar_lea.vmem [#allocation4], %s459
    %v461 = vld [vmem:[%s460] sm:$0x1]
    %462 = vst [vmem:[#allocation7 + $0x39] sm:$0x1] %v461
    %s463 = sadd.s32 %s28, 87
    %s464 = sld [smem:[#allocation3 + %s463]]
    %s465 = scalar_lea.vmem [#allocation4], %s464
    %v466 = vld [vmem:[%s465] sm:$0x1]
    %s467 = sadd.s32 %s28, 88
    %s468 = sld [smem:[#allocation3 + %s467]]
    %s469 = scalar_lea.vmem [#allocation4], %s468
    %v470 = vld [vmem:[%s469] sm:$0x1]
    %v471 = vadd.f32 %v466, %v470
    %s472 = sadd.s32 %s28, 89
    %s473 = sld [smem:[#allocation3 + %s472]]
    %s474 = scalar_lea.vmem [#allocation4], %s473
    %v475 = vld [vmem:[%s474] sm:$0x1]
    %v476 = vadd.f32 %v471, %v475
    %477 = vst [vmem:[#allocation7 + $0x41] sm:$0x1] %v476
    %s478 = sadd.s32 %s28, 90
    %s479 = sld [smem:[#allocation3 + %s478]]
    %s480 = scalar_lea.vmem [#allocation4], %s479
    %v481 = vld [vmem:[%s480] sm:$0x1]
    %482 = vst [vmem:[#allocation7 + $0x32] sm:$0x1] %v481
    %s483 = sadd.s32 %s28, 91
    %s484 = sld [smem:[#allocation3 + %s483]]
    %s485 = scalar_lea.vmem [#allocation4], %s484
    %v486 = vld [vmem:[%s485] sm:$0x1]
    %487 = vst [vmem:[#allocation7 + $0x3a] sm:$0x1] %v486
    %s488 = sadd.s32 %s28, 92
    %s489 = sld [smem:[#allocation3 + %s488]]
    %s490 = scalar_lea.vmem [#allocation4], %s489
    %v491 = vld [vmem:[%s490] sm:$0x1]
    %s492 = sadd.s32 %s28, 93
    %s493 = sld [smem:[#allocation3 + %s492]]
    %s494 = scalar_lea.vmem [#allocation4], %s493
    %v495 = vld [vmem:[%s494] sm:$0x1]
    %v496 = vadd.f32 %v491, %v495
    %s497 = sadd.s32 %s28, 94
    %s498 = sld [smem:[#allocation3 + %s497]]
    %s499 = scalar_lea.vmem [#allocation4], %s498
    %v500 = vld [vmem:[%s499] sm:$0x1]
    %v501 = vadd.f32 %v496, %v500
    %502 = vst [vmem:[#allocation7 + $0x42] sm:$0x1] %v501
    %s503 = sadd.s32 %s28, 95
    %s504 = sld [smem:[#allocation3 + %s503]]
    %s505 = scalar_lea.vmem [#allocation4], %s504
    %v506 = vld [vmem:[%s505] sm:$0x1]
    %507 = vst [vmem:[#allocation7 + $0x33] sm:$0x1] %v506
    %s508 = sadd.s32 %s28, 96
    %s509 = sld [smem:[#allocation3 + %s508]]
    %s510 = scalar_lea.vmem [#allocation4], %s509
    %v511 = vld [vmem:[%s510] sm:$0x1]
    %512 = vst [vmem:[#allocation7 + $0x3b] sm:$0x1] %v511
    %s513 = sadd.s32 %s28, 97
    %s514 = sld [smem:[#allocation3 + %s513]]
    %s515 = scalar_lea.vmem [#allocation4], %s514
    %v516 = vld [vmem:[%s515] sm:$0x1]
    %s517 = sadd.s32 %s28, 98
    %s518 = sld [smem:[#allocation3 + %s517]]
    %s519 = scalar_lea.vmem [#allocation4], %s518
    %v520 = vld [vmem:[%s519] sm:$0x1]
    %v521 = vadd.f32 %v516, %v520
    %s522 = sadd.s32 %s28, 99
    %s523 = sld [smem:[#allocation3 + %s522]]
    %s524 = scalar_lea.vmem [#allocation4], %s523
    %v525 = vld [vmem:[%s524] sm:$0x1]
    %v526 = vadd.f32 %v521, %v525
    %527 = vst [vmem:[#allocation7 + $0x43] sm:$0x1] %v526
    %s528 = sadd.s32 %s28, 100
    %s529 = sld [smem:[#allocation3 + %s528]]
    %s530 = scalar_lea.vmem [#allocation4], %s529
    %v531 = vld [vmem:[%s530] sm:$0x1]
    %532 = vst [vmem:[#allocation7 + $0x34] sm:$0x1] %v531
    %s533 = sadd.s32 %s28, 101
    %s534 = sld [smem:[#allocation3 + %s533]]
    %s535 = scalar_lea.vmem [#allocation4], %s534
    %v536 = vld [vmem:[%s535] sm:$0x1]
    %537 = vst [vmem:[#allocation7 + $0x3c] sm:$0x1] %v536
    %s538 = sadd.s32 %s28, 102
    %s539 = sld [smem:[#allocation3 + %s538]]
    %s540 = scalar_lea.vmem [#allocation4], %s539
    %v541 = vld [vmem:[%s540] sm:$0x1]
    %s542 = sadd.s32 %s28, 103
    %s543 = sld [smem:[#allocation3 + %s542]]
    %s544 = scalar_lea.vmem [#allocation4], %s543
    %v545 = vld [vmem:[%s544] sm:$0x1]
    %v546 = vadd.f32 %v541, %v545
    %s547 = sadd.s32 %s28, 104
    %s548 = sld [smem:[#allocation3 + %s547]]
    %s549 = scalar_lea.vmem [#allocation4], %s548
    %v550 = vld [vmem:[%s549] sm:$0x1]
    %v551 = vadd.f32 %v546, %v550
    %552 = vst [vmem:[#allocation7 + $0x44] sm:$0x1] %v551
    %s553 = sadd.s32 %s28, 105
    %s554 = sld [smem:[#allocation3 + %s553]]
    %s555 = scalar_lea.vmem [#allocation4], %s554
    %v556 = vld [vmem:[%s555] sm:$0x1]
    %557 = vst [vmem:[#allocation7 + $0x35] sm:$0x1] %v556
    %s558 = sadd.s32 %s28, 106
    %s559 = sld [smem:[#allocation3 + %s558]]
    %s560 = scalar_lea.vmem [#allocation4], %s559
    %v561 = vld [vmem:[%s560] sm:$0x1]
    %562 = vst [vmem:[#allocation7 + $0x3d] sm:$0x1] %v561
    %s563 = sadd.s32 %s28, 107
    %s564 = sld [smem:[#allocation3 + %s563]]
    %s565 = scalar_lea.vmem [#allocation4], %s564
    %v566 = vld [vmem:[%s565] sm:$0x1]
    %s567 = sadd.s32 %s28, 108
    %s568 = sld [smem:[#allocation3 + %s567]]
    %s569 = scalar_lea.vmem [#allocation4], %s568
    %v570 = vld [vmem:[%s569] sm:$0x1]
    %v571 = vadd.f32 %v566, %v570
    %s572 = sadd.s32 %s28, 109
    %s573 = sld [smem:[#allocation3 + %s572]]
    %s574 = scalar_lea.vmem [#allocation4], %s573
    %v575 = vld [vmem:[%s574] sm:$0x1]
    %v576 = vadd.f32 %v571, %v575
    %577 = vst [vmem:[#allocation7 + $0x45] sm:$0x1] %v576
    %s578 = sadd.s32 %s28, 110
    %s579 = sld [smem:[#allocation3 + %s578]]
    %s580 = scalar_lea.vmem [#allocation4], %s579
    %v581 = vld [vmem:[%s580] sm:$0x1]
    %582 = vst [vmem:[#allocation7 + $0x36] sm:$0x1] %v581
    %s583 = sadd.s32 %s28, 111
    %s584 = sld [smem:[#allocation3 + %s583]]
    %s585 = scalar_lea.vmem [#allocation4], %s584
    %v586 = vld [vmem:[%s585] sm:$0x1]
    %587 = vst [vmem:[#allocation7 + $0x3e] sm:$0x1] %v586
    %s588 = sadd.s32 %s28, 112
    %s589 = sld [smem:[#allocation3 + %s588]]
    %s590 = scalar_lea.vmem [#allocation4], %s589
    %v591 = vld [vmem:[%s590] sm:$0x1]
    %s592 = sadd.s32 %s28, 113
    %s593 = sld [smem:[#allocation3 + %s592]]
    %s594 = scalar_lea.vmem [#allocation4], %s593
    %v595 = vld [vmem:[%s594] sm:$0x1]
    %v596 = vadd.f32 %v591, %v595
    %s597 = sadd.s32 %s28, 114
    %s598 = sld [smem:[#allocation3 + %s597]]
    %s599 = scalar_lea.vmem [#allocation4], %s598
    %v600 = vld [vmem:[%s599] sm:$0x1]
    %v601 = vadd.f32 %v596, %v600
    %602 = vst [vmem:[#allocation7 + $0x46] sm:$0x1] %v601
    %s603 = sadd.s32 %s28, 115
    %s604 = sld [smem:[#allocation3 + %s603]]
    %s605 = scalar_lea.vmem [#allocation4], %s604
    %v606 = vld [vmem:[%s605] sm:$0x1]
    %607 = vst [vmem:[#allocation7 + $0x37] sm:$0x1] %v606
    %s608 = sadd.s32 %s28, 116
    %s609 = sld [smem:[#allocation3 + %s608]]
    %s610 = scalar_lea.vmem [#allocation4], %s609
    %v611 = vld [vmem:[%s610] sm:$0x1]
    %612 = vst [vmem:[#allocation7 + $0x3f] sm:$0x1] %v611
    %s613 = sadd.s32 %s28, 117
    %s614 = sld [smem:[#allocation3 + %s613]]
    %s615 = scalar_lea.vmem [#allocation4], %s614
    %v616 = vld [vmem:[%s615] sm:$0x1]
    %s617 = sadd.s32 %s28, 118
    %s618 = sld [smem:[#allocation3 + %s617]]
    %s619 = scalar_lea.vmem [#allocation4], %s618
    %v620 = vld [vmem:[%s619] sm:$0x1]
    %v621 = vadd.f32 %v616, %v620
    %s622 = sadd.s32 %s28, 119
    %s623 = sld [smem:[#allocation3 + %s622]]
    %s624 = scalar_lea.vmem [#allocation4], %s623
    %v625 = vld [vmem:[%s624] sm:$0x1]
    %v626 = vadd.f32 %v621, %v625
    %627 = vst [vmem:[#allocation7 + $0x47] sm:$0x1] %v626
    %s628 = sadd.s32 %s28, 120
    %s629 = sld [smem:[#allocation3 + %s628]]
    %s630 = scalar_lea.vmem [#allocation4], %s629
    %v631 = vld [vmem:[%s630] sm:$0x1]
    %632 = vst [vmem:[#allocation7 + $0x48] sm:$0x1] %v631
    %s633 = sadd.s32 %s28, 121
    %s634 = sld [smem:[#allocation3 + %s633]]
    %s635 = scalar_lea.vmem [#allocation4], %s634
    %v636 = vld [vmem:[%s635] sm:$0x1]
    %637 = vst [vmem:[#allocation7 + $0x50] sm:$0x1] %v636
    %s638 = sadd.s32 %s28, 122
    %s639 = sld [smem:[#allocation3 + %s638]]
    %s640 = scalar_lea.vmem [#allocation4], %s639
    %v641 = vld [vmem:[%s640] sm:$0x1]
    %s642 = sadd.s32 %s28, 123
    %s643 = sld [smem:[#allocation3 + %s642]]
    %s644 = scalar_lea.vmem [#allocation4], %s643
    %v645 = vld [vmem:[%s644] sm:$0x1]
    %v646 = vadd.f32 %v641, %v645
    %s647 = sadd.s32 %s28, 124
    %s648 = sld [smem:[#allocation3 + %s647]]
    %s649 = scalar_lea.vmem [#allocation4], %s648
    %v650 = vld [vmem:[%s649] sm:$0x1]
    %v651 = vadd.f32 %v646, %v650
    %652 = vst [vmem:[#allocation7 + $0x58] sm:$0x1] %v651
    %s653 = sadd.s32 %s28, 125
    %s654 = sld [smem:[#allocation3 + %s653]]
    %s655 = scalar_lea.vmem [#allocation4], %s654
    %v656 = vld [vmem:[%s655] sm:$0x1]
    %657 = vst [vmem:[#allocation7 + $0x49] sm:$0x1] %v656
    %s658 = sadd.s32 %s28, 126
    %s659 = sld [smem:[#allocation3 + %s658]]
    %s660 = scalar_lea.vmem [#allocation4], %s659
    %v661 = vld [vmem:[%s660] sm:$0x1]
    %662 = vst [vmem:[#allocation7 + $0x51] sm:$0x1] %v661
    %s663 = sadd.s32 %s28, 127
    %s664 = sld [smem:[#allocation3 + %s663]]
    %s665 = scalar_lea.vmem [#allocation4], %s664
    %v666 = vld [vmem:[%s665] sm:$0x1]
    %s667 = sadd.s32 %s28, 128
    %s668 = sld [smem:[#allocation3 + %s667]]
    %s669 = scalar_lea.vmem [#allocation4], %s668
    %v670 = vld [vmem:[%s669] sm:$0x1]
    %v671 = vadd.f32 %v666, %v670
    %s672 = sadd.s32 %s28, 129
    %s673 = sld [smem:[#allocation3 + %s672]]
    %s674 = scalar_lea.vmem [#allocation4], %s673
    %v675 = vld [vmem:[%s674] sm:$0x1]
    %v676 = vadd.f32 %v671, %v675
    %677 = vst [vmem:[#allocation7 + $0x59] sm:$0x1] %v676
    %s678 = sadd.s32 %s28, 130
    %s679 = sld [smem:[#allocation3 + %s678]]
    %s680 = scalar_lea.vmem [#allocation4], %s679
    %v681 = vld [vmem:[%s680] sm:$0x1]
    %682 = vst [vmem:[#allocation7 + $0x4a] sm:$0x1] %v681
    %s683 = sadd.s32 %s28, 131
    %s684 = sld [smem:[#allocation3 + %s683]]
    %s685 = scalar_lea.vmem [#allocation4], %s684
    %v686 = vld [vmem:[%s685] sm:$0x1]
    %687 = vst [vmem:[#allocation7 + $0x52] sm:$0x1] %v686
    %s688 = sadd.s32 %s28, 132
    %s689 = sld [smem:[#allocation3 + %s688]]
    %s690 = scalar_lea.vmem [#allocation4], %s689
    %v691 = vld [vmem:[%s690] sm:$0x1]
    %s692 = sadd.s32 %s28, 133
    %s693 = sld [smem:[#allocation3 + %s692]]
    %s694 = scalar_lea.vmem [#allocation4], %s693
    %v695 = vld [vmem:[%s694] sm:$0x1]
    %v696 = vadd.f32 %v691, %v695
    %s697 = sadd.s32 %s28, 134
    %s698 = sld [smem:[#allocation3 + %s697]]
    %s699 = scalar_lea.vmem [#allocation4], %s698
    %v700 = vld [vmem:[%s699] sm:$0x1]
    %v701 = vadd.f32 %v696, %v700
    %702 = vst [vmem:[#allocation7 + $0x5a] sm:$0x1] %v701
    %s703 = sadd.s32 %s28, 135
    %s704 = sld [smem:[#allocation3 + %s703]]
    %s705 = scalar_lea.vmem [#allocation4], %s704
    %v706 = vld [vmem:[%s705] sm:$0x1]
    %707 = vst [vmem:[#allocation7 + $0x4b] sm:$0x1] %v706
    %s708 = sadd.s32 %s28, 136
    %s709 = sld [smem:[#allocation3 + %s708]]
    %s710 = scalar_lea.vmem [#allocation4], %s709
    %v711 = vld [vmem:[%s710] sm:$0x1]
    %712 = vst [vmem:[#allocation7 + $0x53] sm:$0x1] %v711
    %s713 = sadd.s32 %s28, 137
    %s714 = sld [smem:[#allocation3 + %s713]]
    %s715 = scalar_lea.vmem [#allocation4], %s714
    %v716 = vld [vmem:[%s715] sm:$0x1]
    %s717 = sadd.s32 %s28, 138
    %s718 = sld [smem:[#allocation3 + %s717]]
    %s719 = scalar_lea.vmem [#allocation4], %s718
    %v720 = vld [vmem:[%s719] sm:$0x1]
    %v721 = vadd.f32 %v716, %v720
    %s722 = sadd.s32 %s28, 139
    %s723 = sld [smem:[#allocation3 + %s722]]
    %s724 = scalar_lea.vmem [#allocation4], %s723
    %v725 = vld [vmem:[%s724] sm:$0x1]
    %v726 = vadd.f32 %v721, %v725
    %727 = vst [vmem:[#allocation7 + $0x5b] sm:$0x1] %v726
    %s728 = sadd.s32 %s28, 140
    %s729 = sld [smem:[#allocation3 + %s728]]
    %s730 = scalar_lea.vmem [#allocation4], %s729
    %v731 = vld [vmem:[%s730] sm:$0x1]
    %732 = vst [vmem:[#allocation7 + $0x4c] sm:$0x1] %v731
    %s733 = sadd.s32 %s28, 141
    %s734 = sld [smem:[#allocation3 + %s733]]
    %s735 = scalar_lea.vmem [#allocation4], %s734
    %v736 = vld [vmem:[%s735] sm:$0x1]
    %737 = vst [vmem:[#allocation7 + $0x54] sm:$0x1] %v736
    %s738 = sadd.s32 %s28, 142
    %s739 = sld [smem:[#allocation3 + %s738]]
    %s740 = scalar_lea.vmem [#allocation4], %s739
    %v741 = vld [vmem:[%s740] sm:$0x1]
    %s742 = sadd.s32 %s28, 143
    %s743 = sld [smem:[#allocation3 + %s742]]
    %s744 = scalar_lea.vmem [#allocation4], %s743
    %v745 = vld [vmem:[%s744] sm:$0x1]
    %v746 = vadd.f32 %v741, %v745
    %s747 = sadd.s32 %s28, 144
    %s748 = sld [smem:[#allocation3 + %s747]]
    %s749 = scalar_lea.vmem [#allocation4], %s748
    %v750 = vld [vmem:[%s749] sm:$0x1]
    %v751 = vadd.f32 %v746, %v750
    %752 = vst [vmem:[#allocation7 + $0x5c] sm:$0x1] %v751
    %s753 = sadd.s32 %s28, 145
    %s754 = sld [smem:[#allocation3 + %s753]]
    %s755 = scalar_lea.vmem [#allocation4], %s754
    %v756 = vld [vmem:[%s755] sm:$0x1]
    %757 = vst [vmem:[#allocation7 + $0x4d] sm:$0x1] %v756
    %s758 = sadd.s32 %s28, 146
    %s759 = sld [smem:[#allocation3 + %s758]]
    %s760 = scalar_lea.vmem [#allocation4], %s759
    %v761 = vld [vmem:[%s760] sm:$0x1]
    %762 = vst [vmem:[#allocation7 + $0x55] sm:$0x1] %v761
    %s763 = sadd.s32 %s28, 147
    %s764 = sld [smem:[#allocation3 + %s763]]
    %s765 = scalar_lea.vmem [#allocation4], %s764
    %v766 = vld [vmem:[%s765] sm:$0x1]
    %s767 = sadd.s32 %s28, 148
    %s768 = sld [smem:[#allocation3 + %s767]]
    %s769 = scalar_lea.vmem [#allocation4], %s768
    %v770 = vld [vmem:[%s769] sm:$0x1]
    %v771 = vadd.f32 %v766, %v770
    %s772 = sadd.s32 %s28, 149
    %s773 = sld [smem:[#allocation3 + %s772]]
    %s774 = scalar_lea.vmem [#allocation4], %s773
    %v775 = vld [vmem:[%s774] sm:$0x1]
    %v776 = vadd.f32 %v771, %v775
    %777 = vst [vmem:[#allocation7 + $0x5d] sm:$0x1] %v776
    %s778 = sadd.s32 %s28, 150
    %s779 = sld [smem:[#allocation3 + %s778]]
    %s780 = scalar_lea.vmem [#allocation4], %s779
    %v781 = vld [vmem:[%s780] sm:$0x1]
    %782 = vst [vmem:[#allocation7 + $0x4e] sm:$0x1] %v781
    %s783 = sadd.s32 %s28, 151
    %s784 = sld [smem:[#allocation3 + %s783]]
    %s785 = scalar_lea.vmem [#allocation4], %s784
    %v786 = vld [vmem:[%s785] sm:$0x1]
    %787 = vst [vmem:[#allocation7 + $0x56] sm:$0x1] %v786
    %s788 = sadd.s32 %s28, 152
    %s789 = sld [smem:[#allocation3 + %s788]]
    %s790 = scalar_lea.vmem [#allocation4], %s789
    %v791 = vld [vmem:[%s790] sm:$0x1]
    %s792 = sadd.s32 %s28, 153
    %s793 = sld [smem:[#allocation3 + %s792]]
    %s794 = scalar_lea.vmem [#allocation4], %s793
    %v795 = vld [vmem:[%s794] sm:$0x1]
    %v796 = vadd.f32 %v791, %v795
    %s797 = sadd.s32 %s28, 154
    %s798 = sld [smem:[#allocation3 + %s797]]
    %s799 = scalar_lea.vmem [#allocation4], %s798
    %v800 = vld [vmem:[%s799] sm:$0x1]
    %v801 = vadd.f32 %v796, %v800
    %802 = vst [vmem:[#allocation7 + $0x5e] sm:$0x1] %v801
    %s803 = sadd.s32 %s28, 155
    %s804 = sld [smem:[#allocation3 + %s803]]
    %s805 = scalar_lea.vmem [#allocation4], %s804
    %v806 = vld [vmem:[%s805] sm:$0x1]
    %807 = vst [vmem:[#allocation7 + $0x4f] sm:$0x1] %v806
    %s808 = sadd.s32 %s28, 156
    %s809 = sld [smem:[#allocation3 + %s808]]
    %s810 = scalar_lea.vmem [#allocation4], %s809
    %v811 = vld [vmem:[%s810] sm:$0x1]
    %812 = vst [vmem:[#allocation7 + $0x57] sm:$0x1] %v811
    %s813 = sadd.s32 %s28, 157
    %s814 = sld [smem:[#allocation3 + %s813]]
    %s815 = scalar_lea.vmem [#allocation4], %s814
    %v816 = vld [vmem:[%s815] sm:$0x1]
    %s817 = sadd.s32 %s28, 158
    %s818 = sld [smem:[#allocation3 + %s817]]
    %s819 = scalar_lea.vmem [#allocation4], %s818
    %v820 = vld [vmem:[%s819] sm:$0x1]
    %v821 = vadd.f32 %v816, %v820
    %s822 = sadd.s32 %s28, 159
    %s823 = sld [smem:[#allocation3 + %s822]]
    %s824 = scalar_lea.vmem [#allocation4], %s823
    %v825 = vld [vmem:[%s824] sm:$0x1]
    %v826 = vadd.f32 %v821, %v825
    %827 = vst [vmem:[#allocation7 + $0x5f] sm:$0x1] %v826
    // Predicated region
    $region10: #{tpu_custom_call.1} parent=1 // pred_check
      _
    $region11: #{tpu_custom_call.1} parent=1 // pred_check_branch
      %829 = sbr.rel (0) target = $region13
    $region12: #{tpu_custom_call.1} parent=1 // pred_region
      %s831 = ssub.s32 1536, 1536
      %832 = vsyncadd [#allocation6], %s831
      %s833 = sshll.u32 [#allocation7], 4
      %s834 = int_to_ptr.vmem [resolvable:$true] %s833
      %839 = dma.vmem_to_hbm [thread:$0]  %s834, 1536, %s2, [#allocation6], 384, 384, 24
    $region13: #{tpu_custom_call.1} parent=1 // pred_fallthru
      _
    // Predicated region
    $region14: #{tpu_custom_call.1} parent=1 // pred_check
      _
    $region15: #{tpu_custom_call.1} parent=1 // pred_check_branch
      %841 = sbr.rel (0) target = $region17
    $region16: #{tpu_custom_call.1} parent=1 // pred_region
      %842 = dma.done [#allocation6], 1536
    $region17: #{tpu_custom_call.1} parent=1 // pred_fallthru
      _
    %843 = vsyncpa [#allocation5], 1
    %844 = vsyncpa [#allocation6], 1

</llo_original>
